<compile_context>
chip_gen: v7x
topology: tpu7x:2x2x1
jax: 0.10.0
libtpu: 0.0.40
codegen_flags: <defaults>
</compile_context>

<pallas_src>
import math
import numpy as np
import jax
import jax.numpy as jnp
from jax import lax
from jax.experimental import pallas as pl
from jax.experimental.pallas import tpu as pltpu


def _round_up(n, m):
    return ((n + m - 1) // m) * m


def make_encoder_layer(B, S, D, H, d_k, d_ff):
    d_v = d_k
    BS = B * S
    D_pad = _round_up(D, 128)        # lane-dense output width
    dff_pad = _round_up(d_ff, 128)   # lane-dense FFN width
    scale = 1.0 / math.sqrt(156.0)   # hardcoded in ScaledDotProductAttention (kept as-is)
    inv_sqrt2 = 1.0 / math.sqrt(2.0)

    def kernel(x_ref,
               wq_ref, bq_ref, wk_ref, bk_ref, wv_ref, bv_ref,
               wo_ref, bo_ref, gamma_ref, beta_ref,
               w1_ref, b1_ref, w2_ref, b2_ref,
               out_ref, attn_ref):
        x = x_ref[...]                                           # (B*S, D), batch folded into M

        attn_probs = [[None] * H for _ in range(B)]
        ctx_proj = None
        for h in range(H):                                       # static head loop
            qh = jnp.dot(x, wq_ref[h], preferred_element_type=jnp.float32) + bq_ref[h]
            kh = jnp.dot(x, wk_ref[h], preferred_element_type=jnp.float32) + bk_ref[h]
            vh = jnp.dot(x, wv_ref[h], preferred_element_type=jnp.float32) + bv_ref[h]
            ctx_rows = []
            for b in range(B):                                   # static batch loop
                qb = qh[b * S:(b + 1) * S, :]                    # (S, d_k), vreg-aligned row slice
                kb = kh[b * S:(b + 1) * S, :]
                vb = vh[b * S:(b + 1) * S, :]
                # q @ k^T via contracting dims -- no explicit transpose of k
                s = lax.dot_general(qb, kb, (((1,), (1,)), ((), ())),
                                    preferred_element_type=jnp.float32) * scale
                s = s - jnp.max(s, axis=-1, keepdims=True)
                e = jnp.exp(s)
                # exact reciprocal; approx=True (EUP vrcp) would loosen 1e-5/1e-4 tolerances
                a = e * pl.reciprocal(jnp.sum(e, axis=-1, keepdims=True), approx=False)
                attn_probs[b][h] = a
                ctx_rows.append(jnp.dot(a, vb, preferred_element_type=jnp.float32))
            ctx_h = jnp.concatenate(ctx_rows, axis=0)            # (B*S, d_v), sublane concat only
            contrib = jnp.dot(ctx_h, wo_ref[h], preferred_element_type=jnp.float32)
            ctx_proj = contrib if ctx_proj is None else ctx_proj + contrib

        y = ctx_proj + bo_ref[...] + x                           # output projection + residual
        mean = jnp.mean(y, axis=-1, keepdims=True)
        var = jnp.mean((y - mean) ** 2, axis=-1, keepdims=True)
        y = (y - mean) * lax.rsqrt(var + 1e-5) * gamma_ref[...] + beta_ref[...]

        h1 = jnp.dot(y, w1_ref[...], preferred_element_type=jnp.float32) + b1_ref[...]
        g = h1 * 0.5 * (1.0 + lax.erf(h1 * inv_sqrt2))           # exact gelu; padded lanes stay 0
        out = jnp.dot(g, w2_ref[...], preferred_element_type=jnp.float32) + b2_ref[...]
        out_ref[...] = out.astype(out_ref.dtype)                 # (B*S, 128): unmasked lane-dense vst

        attn_all = jnp.stack(
            [jnp.stack([attn_probs[b][h] for h in range(H)], axis=0) for b in range(B)],
            axis=0)                                              # (B, H, S, S)
        attn_ref[...] = attn_all.astype(attn_ref.dtype)          # single consolidated store

    def full_spec(shape):
        n = len(shape)
        return pl.BlockSpec(shape, lambda i, _n=n: (0,) * _n)

    in_specs = [
        full_spec((BS, D)),                                   # x (batch folded)
        full_spec((H, D, d_k)), full_spec((H, 1, d_k)),       # W_Q per head, b_Q
        full_spec((H, D, d_k)), full_spec((H, 1, d_k)),       # W_K, b_K
        full_spec((H, D, d_v)), full_spec((H, 1, d_v)),       # W_V, b_V
        full_spec((H, d_v, D)), full_spec((1, D)),            # W_O per head, b_O
        full_spec((1, D)), full_spec((1, D)),                 # ln gamma, beta
        full_spec((D, dff_pad)), full_spec((1, dff_pad)),     # W1 (padded), b1
        full_spec((dff_pad, D_pad)), full_spec((1, D_pad)),   # W2 (padded), b2
    ]
    out_specs = [
        full_spec((BS, D_pad)),
        full_spec((B, H, S, S)),
    ]
    out_shape = [
        jax.ShapeDtypeStruct((BS, D_pad), jnp.float32),
        jax.ShapeDtypeStruct((B, H, S, S), jnp.float32),
    ]

    call = pl.pallas_call(
        kernel,
        out_shape=out_shape,
        grid_spec=pltpu.PrefetchScalarGridSpec(
            num_scalar_prefetch=0,
            grid=(1,),
            in_specs=in_specs,
            out_specs=out_specs,
        ),
        compiler_params=pltpu.CompilerParams(
            dimension_semantics=("parallel",)),
    )
    # NOTE: at real model sizes (D=768, d_ff>=3072) the full-weight BlockSpecs above should be
    # replaced by K-tiled specs over d_ff (reduction axis marked "arbitrary") plus an explicit
    # vmem_limit_bytes -- v7x only has 64 MiB of VMEM.

    def apply(x, params):
        (wq, bq, wk, bk, wv, bv, wo, bo, gamma, beta, w1, b1, w2, b2) = params
        # Wrapper-side layout plumbing (zero kernel-time cost):
        # per-head weight splits so the kernel never lane-slices q/k/v.
        wq_h = wq.reshape(D, H, d_k).transpose(1, 0, 2)
        wk_h = wk.reshape(D, H, d_k).transpose(1, 0, 2)
        wv_h = wv.reshape(D, H, d_v).transpose(1, 0, 2)
        bq_h = bq.reshape(H, d_k)[:, None, :]
        bk_h = bk.reshape(H, d_k)[:, None, :]
        bv_h = bv.reshape(H, d_v)[:, None, :]
        wo_h = wo.reshape(H, d_v, D)
        # Zero-pad the FFN to lane-aligned widths (exact: gelu(0)=0; zero W2 rows/cols).
        w1p = jnp.pad(w1, ((0, 0), (0, dff_pad - d_ff)))
        b1p = jnp.pad(b1, ((0, 0), (0, dff_pad - d_ff)))
        w2p = jnp.pad(w2, ((0, dff_pad - d_ff), (0, D_pad - D)))
        b2p = jnp.pad(b2, ((0, 0), (0, D_pad - D)))
        x2 = x.reshape(BS, D)
        out_p, attn = call(x2, wq_h, bq_h, wk_h, bk_h, wv_h, bv_h,
                           wo_h, bo, gamma, beta, w1p, b1p, w2p, b2p)
        out = out_p[:, :D].reshape(B, S, D)
        return out, attn

    return jax.jit(apply)


def reference(x, params, H, d_k):
    """Pure-JAX reference mirroring the PyTorch forward."""
    (wq, bq, wk, bk, wv, bv, wo, bo, gamma, beta, w1, b1, w2, b2) = params
    B, S, D = x.shape
    d_v = d_k
    q = (x @ wq + bq).reshape(B, S, H, d_k).transpose(0, 2, 1, 3)
    k = (x @ wk + bk).reshape(B, S, H, d_k).transpose(0, 2, 1, 3)
    v = (x @ wv + bv).reshape(B, S, H, d_v).transpose(0, 2, 1, 3)
    scores = jnp.einsum("bhqd,bhkd->bhqk", q, k) / np.sqrt(156.0)
    attn = jax.nn.softmax(scores, axis=-1)
    ctx = jnp.einsum("bhqk,bhkd->bhqd", attn, v)
    ctx = ctx.transpose(0, 2, 1, 3).reshape(B, S, H * d_v)
    o = ctx @ wo + bo
    y = o + x
    mean = y.mean(-1, keepdims=True)
    var = ((y - mean) ** 2).mean(-1, keepdims=True)
    y = (y - mean) / jnp.sqrt(var + 1e-5) * gamma + beta
    h1 = y @ w1 + b1
    g = h1 * 0.5 * (1.0 + lax.erf(h1 / np.sqrt(2.0)))
    out = g @ w2 + b2
    return out, attn


if __name__ == "__main__":
    # Small, module-consistent shapes: d_model divisible by n_heads.
    B, S, D, H = 2, 8, 48, 3
    d_k = D // H          # int(d_model / n_heads), as in EncoderLayer.__init__
    d_ff = 300            # PoswiseFeedForwardNet default

    key = jax.random.PRNGKey(0)
    ks = jax.random.split(key, 16)
    std = 0.02

    def w(k, shape):
        return (std * jax.random.normal(k, shape)).astype(jnp.float32)

    Hk = H * d_k
    params = (
        w(ks[0], (D, Hk)), w(ks[1], (1, Hk)),          # W_Q^T, b_Q
        w(ks[2], (D, Hk)), w(ks[3], (1, Hk)),          # W_K^T, b_K
        w(ks[4], (D, Hk)), w(ks[5], (1, Hk)),          # W_V^T, b_V
        w(ks[6], (Hk, D)), w(ks[7], (1, D)),           # W_O^T, b_O
        jnp.ones((1, D), jnp.float32),                 # ln gamma (PyTorch default init)
        jnp.zeros((1, D), jnp.float32),                # ln beta
        w(ks[8], (D, d_ff)), w(ks[9], (1, d_ff)),      # W1^T, b1
        w(ks[10], (d_ff, D)), w(ks[11], (1, D)),       # W2^T, b2
    )
    x = jax.random.normal(ks[12], (B, S, D), dtype=jnp.float32)

    encoder_layer = make_encoder_layer(B, S, D, H, d_k, d_ff)
    out, attn = encoder_layer(x, params)
    out, attn = jax.block_until_ready((out, attn))

    ref_out, ref_attn = reference(x, params, H, d_k)
    assert out.shape == (B, S, D) and attn.shape == (B, H, S, S)
    np.testing.assert_allclose(np.asarray(out), np.asarray(ref_out), atol=1e-4, rtol=1e-4)
    np.testing.assert_allclose(np.asarray(attn), np.asarray(ref_attn), atol=1e-5, rtol=1e-5)
    print("KERNEL_OK")
</pallas_src>

<mosaic_0001>
module attributes {stable_mosaic.version = 11 : i64} {
  func.func @kernel(%arg0: i32, %arg1: memref<16x48xf32, #tpu.memory_space<vmem>>, %arg2: memref<3x48x16xf32, #tpu.memory_space<vmem>>, %arg3: memref<3x1x16xf32, #tpu.memory_space<vmem>>, %arg4: memref<3x48x16xf32, #tpu.memory_space<vmem>>, %arg5: memref<3x1x16xf32, #tpu.memory_space<vmem>>, %arg6: memref<3x48x16xf32, #tpu.memory_space<vmem>>, %arg7: memref<3x1x16xf32, #tpu.memory_space<vmem>>, %arg8: memref<3x16x48xf32, #tpu.memory_space<vmem>>, %arg9: memref<1x48xf32, #tpu.memory_space<vmem>>, %arg10: memref<1x48xf32, #tpu.memory_space<vmem>>, %arg11: memref<1x48xf32, #tpu.memory_space<vmem>>, %arg12: memref<48x384xf32, #tpu.memory_space<vmem>>, %arg13: memref<1x384xf32, #tpu.memory_space<vmem>>, %arg14: memref<384x128xf32, #tpu.memory_space<vmem>>, %arg15: memref<1x128xf32, #tpu.memory_space<vmem>>, %arg16: memref<16x128xf32, #tpu.memory_space<vmem>>, %arg17: memref<2x3x8x8xf32, #tpu.memory_space<vmem>>) attributes {dimension_semantics = [#tpu.dimension_semantics<parallel>], iteration_bounds = array<i64: 1>, scalar_prefetch = 0 : i64, scratch_operands = 0 : i64, tpu.core_type = #tpu.core_type<tc>, window_params = [{pipeline_mode = #tpu.pipeline_mode<synchronous>, transform_indices = @transform_0, window_bounds = array<i64: 16, 48>}, {pipeline_mode = #tpu.pipeline_mode<synchronous>, transform_indices = @transform_1, window_bounds = array<i64: 3, 48, 16>}, {pipeline_mode = #tpu.pipeline_mode<synchronous>, transform_indices = @transform_2, window_bounds = array<i64: 3, 1, 16>}, {pipeline_mode = #tpu.pipeline_mode<synchronous>, transform_indices = @transform_3, window_bounds = array<i64: 3, 48, 16>}, {pipeline_mode = #tpu.pipeline_mode<synchronous>, transform_indices = @transform_4, window_bounds = array<i64: 3, 1, 16>}, {pipeline_mode = #tpu.pipeline_mode<synchronous>, transform_indices = @transform_5, window_bounds = array<i64: 3, 48, 16>}, {pipeline_mode = #tpu.pipeline_mode<synchronous>, transform_indices = @transform_6, window_bounds = array<i64: 3, 1, 16>}, {pipeline_mode = #tpu.pipeline_mode<synchronous>, transform_indices = @transform_7, window_bounds = array<i64: 3, 16, 48>}, {pipeline_mode = #tpu.pipeline_mode<synchronous>, transform_indices = @transform_8, window_bounds = array<i64: 1, 48>}, {pipeline_mode = #tpu.pipeline_mode<synchronous>, transform_indices = @transform_9, window_bounds = array<i64: 1, 48>}, {pipeline_mode = #tpu.pipeline_mode<synchronous>, transform_indices = @transform_10, window_bounds = array<i64: 1, 48>}, {pipeline_mode = #tpu.pipeline_mode<synchronous>, transform_indices = @transform_11, window_bounds = array<i64: 48, 384>}, {pipeline_mode = #tpu.pipeline_mode<synchronous>, transform_indices = @transform_12, window_bounds = array<i64: 1, 384>}, {pipeline_mode = #tpu.pipeline_mode<synchronous>, transform_indices = @transform_13, window_bounds = array<i64: 384, 128>}, {pipeline_mode = #tpu.pipeline_mode<synchronous>, transform_indices = @transform_14, window_bounds = array<i64: 1, 128>}, {pipeline_mode = #tpu.pipeline_mode<synchronous>, transform_indices = @transform_15, window_bounds = array<i64: 16, 128>}, {pipeline_mode = #tpu.pipeline_mode<synchronous>, transform_indices = @transform_16, window_bounds = array<i64: 2, 3, 8, 8>}]} {
    %c0 = arith.constant 0 : index
    %c0_0 = arith.constant 0 : index
    %0 = vector.load %arg1[%c0, %c0_0] : memref<16x48xf32, #tpu.memory_space<vmem>>, vector<16x48xf32>
    %c0_1 = arith.constant 0 : index
    %c0_2 = arith.constant 0 : index
    %c0_3 = arith.constant 0 : index
    %1 = vector.load %arg2[%c0_1, %c0_2, %c0_3] : memref<3x48x16xf32, #tpu.memory_space<vmem>>, vector<1x48x16xf32>
    %2 = vector.shape_cast %1 : vector<1x48x16xf32> to vector<48x16xf32>
    %cst = arith.constant dense<0.000000e+00> : vector<16x16xf32>
    %3 = tpu.matmul %0, %2, %cst {dimension_numbers = #tpu.dot_dimension_numbers<[1], [0], [0], [1], [0, 0, 1, 1], [], []>} : vector<16x48xf32>, vector<48x16xf32>, vector<16x16xf32> -> vector<16x16xf32>
    %c0_4 = arith.constant 0 : index
    %c0_5 = arith.constant 0 : index
    %c0_6 = arith.constant 0 : index
    %4 = vector.load %arg3[%c0_4, %c0_5, %c0_6] : memref<3x1x16xf32, #tpu.memory_space<vmem>>, vector<1x1x16xf32>
    %5 = vector.shape_cast %4 : vector<1x1x16xf32> to vector<1x16xf32>
    %6 = vector.broadcast %5 : vector<1x16xf32> to vector<16x16xf32>
    %7 = arith.addf %3, %6 : vector<16x16xf32>
    %c0_7 = arith.constant 0 : index
    %c0_8 = arith.constant 0 : index
    %c0_9 = arith.constant 0 : index
    %8 = vector.load %arg4[%c0_7, %c0_8, %c0_9] : memref<3x48x16xf32, #tpu.memory_space<vmem>>, vector<1x48x16xf32>
    %9 = vector.shape_cast %8 : vector<1x48x16xf32> to vector<48x16xf32>
    %cst_10 = arith.constant dense<0.000000e+00> : vector<16x16xf32>
    %10 = tpu.matmul %0, %9, %cst_10 {dimension_numbers = #tpu.dot_dimension_numbers<[1], [0], [0], [1], [0, 0, 1, 1], [], []>} : vector<16x48xf32>, vector<48x16xf32>, vector<16x16xf32> -> vector<16x16xf32>
    %c0_11 = arith.constant 0 : index
    %c0_12 = arith.constant 0 : index
    %c0_13 = arith.constant 0 : index
    %11 = vector.load %arg5[%c0_11, %c0_12, %c0_13] : memref<3x1x16xf32, #tpu.memory_space<vmem>>, vector<1x1x16xf32>
    %12 = vector.shape_cast %11 : vector<1x1x16xf32> to vector<1x16xf32>
    %13 = vector.broadcast %12 : vector<1x16xf32> to vector<16x16xf32>
    %14 = arith.addf %10, %13 : vector<16x16xf32>
    %c0_14 = arith.constant 0 : index
    %c0_15 = arith.constant 0 : index
    %c0_16 = arith.constant 0 : index
    %15 = vector.load %arg6[%c0_14, %c0_15, %c0_16] : memref<3x48x16xf32, #tpu.memory_space<vmem>>, vector<1x48x16xf32>
    %16 = vector.shape_cast %15 : vector<1x48x16xf32> to vector<48x16xf32>
    %cst_17 = arith.constant dense<0.000000e+00> : vector<16x16xf32>
    %17 = tpu.matmul %0, %16, %cst_17 {dimension_numbers = #tpu.dot_dimension_numbers<[1], [0], [0], [1], [0, 0, 1, 1], [], []>} : vector<16x48xf32>, vector<48x16xf32>, vector<16x16xf32> -> vector<16x16xf32>
    %c0_18 = arith.constant 0 : index
    %c0_19 = arith.constant 0 : index
    %c0_20 = arith.constant 0 : index
    %18 = vector.load %arg7[%c0_18, %c0_19, %c0_20] : memref<3x1x16xf32, #tpu.memory_space<vmem>>, vector<1x1x16xf32>
    %19 = vector.shape_cast %18 : vector<1x1x16xf32> to vector<1x16xf32>
    %20 = vector.broadcast %19 : vector<1x16xf32> to vector<16x16xf32>
    %21 = arith.addf %17, %20 : vector<16x16xf32>
    %22 = vector.extract_strided_slice %7 {offsets = [0, 0], sizes = [8, 16], strides = [1, 1]} : vector<16x16xf32> to vector<8x16xf32>
    %23 = vector.extract_strided_slice %14 {offsets = [0, 0], sizes = [8, 16], strides = [1, 1]} : vector<16x16xf32> to vector<8x16xf32>
    %24 = vector.extract_strided_slice %21 {offsets = [0, 0], sizes = [8, 16], strides = [1, 1]} : vector<16x16xf32> to vector<8x16xf32>
    %cst_21 = arith.constant dense<0.000000e+00> : vector<8x8xf32>
    %25 = tpu.matmul %22, %23, %cst_21 {dimension_numbers = #tpu.dot_dimension_numbers<[1], [1], [0], [0], [0, 0, 1, 0], [], []>} : vector<8x16xf32>, vector<8x16xf32>, vector<8x8xf32> -> vector<8x8xf32>
    %cst_22 = arith.constant 0.0800640732 : f32
    %26 = vector.broadcast %cst_22 : f32 to vector<8x8xf32>
    %27 = arith.mulf %25, %26 : vector<8x8xf32>
    %cst_23 = arith.constant dense<0xFF800000> : vector<8xf32>
    %28 = vector.multi_reduction <maximumf>, %27, %cst_23 [1] : vector<8x8xf32> to vector<8xf32>
    %29 = vector.shape_cast %28 : vector<8xf32> to vector<8x1xf32>
    %30 = vector.broadcast %29 : vector<8x1xf32> to vector<8x8xf32>
    %31 = arith.subf %27, %30 : vector<8x8xf32>
    %32 = math.exp %31 : vector<8x8xf32>
    %cst_24 = arith.constant dense<0.000000e+00> : vector<8xf32>
    %33 = vector.multi_reduction <add>, %32, %cst_24 [1] : vector<8x8xf32> to vector<8xf32>
    %34 = vector.shape_cast %33 : vector<8xf32> to vector<8x1xf32>
    %35 = tpu.reciprocal %34 : vector<8x1xf32> -> vector<8x1xf32>
    %36 = vector.broadcast %35 : vector<8x1xf32> to vector<8x8xf32>
    %37 = arith.mulf %32, %36 : vector<8x8xf32>
    %cst_25 = arith.constant dense<0.000000e+00> : vector<8x16xf32>
    %38 = tpu.matmul %37, %24, %cst_25 {dimension_numbers = #tpu.dot_dimension_numbers<[1], [0], [0], [1], [0, 0, 1, 1], [], []>} : vector<8x8xf32>, vector<8x16xf32>, vector<8x16xf32> -> vector<8x16xf32>
    %39 = vector.extract_strided_slice %7 {offsets = [8, 0], sizes = [8, 16], strides = [1, 1]} : vector<16x16xf32> to vector<8x16xf32>
    %40 = vector.extract_strided_slice %14 {offsets = [8, 0], sizes = [8, 16], strides = [1, 1]} : vector<16x16xf32> to vector<8x16xf32>
    %41 = vector.extract_strided_slice %21 {offsets = [8, 0], sizes = [8, 16], strides = [1, 1]} : vector<16x16xf32> to vector<8x16xf32>
    %cst_26 = arith.constant dense<0.000000e+00> : vector<8x8xf32>
    %42 = tpu.matmul %39, %40, %cst_26 {dimension_numbers = #tpu.dot_dimension_numbers<[1], [1], [0], [0], [0, 0, 1, 0], [], []>} : vector<8x16xf32>, vector<8x16xf32>, vector<8x8xf32> -> vector<8x8xf32>
    %cst_27 = arith.constant 0.0800640732 : f32
    %43 = vector.broadcast %cst_27 : f32 to vector<8x8xf32>
    %44 = arith.mulf %42, %43 : vector<8x8xf32>
    %cst_28 = arith.constant dense<0xFF800000> : vector<8xf32>
    %45 = vector.multi_reduction <maximumf>, %44, %cst_28 [1] : vector<8x8xf32> to vector<8xf32>
    %46 = vector.shape_cast %45 : vector<8xf32> to vector<8x1xf32>
    %47 = vector.broadcast %46 : vector<8x1xf32> to vector<8x8xf32>
    %48 = arith.subf %44, %47 : vector<8x8xf32>
    %49 = math.exp %48 : vector<8x8xf32>
    %cst_29 = arith.constant dense<0.000000e+00> : vector<8xf32>
    %50 = vector.multi_reduction <add>, %49, %cst_29 [1] : vector<8x8xf32> to vector<8xf32>
    %51 = vector.shape_cast %50 : vector<8xf32> to vector<8x1xf32>
    %52 = tpu.reciprocal %51 : vector<8x1xf32> -> vector<8x1xf32>
    %53 = vector.broadcast %52 : vector<8x1xf32> to vector<8x8xf32>
    %54 = arith.mulf %49, %53 : vector<8x8xf32>
    %cst_30 = arith.constant dense<0.000000e+00> : vector<8x16xf32>
    %55 = tpu.matmul %54, %41, %cst_30 {dimension_numbers = #tpu.dot_dimension_numbers<[1], [0], [0], [1], [0, 0, 1, 1], [], []>} : vector<8x8xf32>, vector<8x16xf32>, vector<8x16xf32> -> vector<8x16xf32>
    %56 = tpu.concatenate %38, %55 in 0 : vector<8x16xf32>, vector<8x16xf32> -> vector<16x16xf32>
    %c0_31 = arith.constant 0 : index
    %c0_32 = arith.constant 0 : index
    %c0_33 = arith.constant 0 : index
    %57 = vector.load %arg8[%c0_31, %c0_32, %c0_33] : memref<3x16x48xf32, #tpu.memory_space<vmem>>, vector<1x16x48xf32>
    %58 = vector.shape_cast %57 : vector<1x16x48xf32> to vector<16x48xf32>
    %cst_34 = arith.constant dense<0.000000e+00> : vector<16x48xf32>
    %59 = tpu.matmul %56, %58, %cst_34 {dimension_numbers = #tpu.dot_dimension_numbers<[1], [0], [0], [1], [0, 0, 1, 1], [], []>} : vector<16x16xf32>, vector<16x48xf32>, vector<16x48xf32> -> vector<16x48xf32>
    %c1 = arith.constant 1 : index
    %c0_35 = arith.constant 0 : index
    %c0_36 = arith.constant 0 : index
    %60 = vector.load %arg2[%c1, %c0_35, %c0_36] : memref<3x48x16xf32, #tpu.memory_space<vmem>>, vector<1x48x16xf32>
    %61 = vector.shape_cast %60 : vector<1x48x16xf32> to vector<48x16xf32>
    %cst_37 = arith.constant dense<0.000000e+00> : vector<16x16xf32>
    %62 = tpu.matmul %0, %61, %cst_37 {dimension_numbers = #tpu.dot_dimension_numbers<[1], [0], [0], [1], [0, 0, 1, 1], [], []>} : vector<16x48xf32>, vector<48x16xf32>, vector<16x16xf32> -> vector<16x16xf32>
    %c1_38 = arith.constant 1 : index
    %c0_39 = arith.constant 0 : index
    %c0_40 = arith.constant 0 : index
    %63 = vector.load %arg3[%c1_38, %c0_39, %c0_40] : memref<3x1x16xf32, #tpu.memory_space<vmem>>, vector<1x1x16xf32>
    %64 = vector.shape_cast %63 : vector<1x1x16xf32> to vector<1x16xf32>
    %65 = vector.broadcast %64 : vector<1x16xf32> to vector<16x16xf32>
    %66 = arith.addf %62, %65 : vector<16x16xf32>
    %c1_41 = arith.constant 1 : index
    %c0_42 = arith.constant 0 : index
    %c0_43 = arith.constant 0 : index
    %67 = vector.load %arg4[%c1_41, %c0_42, %c0_43] : memref<3x48x16xf32, #tpu.memory_space<vmem>>, vector<1x48x16xf32>
    %68 = vector.shape_cast %67 : vector<1x48x16xf32> to vector<48x16xf32>
    %cst_44 = arith.constant dense<0.000000e+00> : vector<16x16xf32>
    %69 = tpu.matmul %0, %68, %cst_44 {dimension_numbers = #tpu.dot_dimension_numbers<[1], [0], [0], [1], [0, 0, 1, 1], [], []>} : vector<16x48xf32>, vector<48x16xf32>, vector<16x16xf32> -> vector<16x16xf32>
    %c1_45 = arith.constant 1 : index
    %c0_46 = arith.constant 0 : index
    %c0_47 = arith.constant 0 : index
    %70 = vector.load %arg5[%c1_45, %c0_46, %c0_47] : memref<3x1x16xf32, #tpu.memory_space<vmem>>, vector<1x1x16xf32>
    %71 = vector.shape_cast %70 : vector<1x1x16xf32> to vector<1x16xf32>
    %72 = vector.broadcast %71 : vector<1x16xf32> to vector<16x16xf32>
    %73 = arith.addf %69, %72 : vector<16x16xf32>
    %c1_48 = arith.constant 1 : index
    %c0_49 = arith.constant 0 : index
    %c0_50 = arith.constant 0 : index
    %74 = vector.load %arg6[%c1_48, %c0_49, %c0_50] : memref<3x48x16xf32, #tpu.memory_space<vmem>>, vector<1x48x16xf32>
    %75 = vector.shape_cast %74 : vector<1x48x16xf32> to vector<48x16xf32>
    %cst_51 = arith.constant dense<0.000000e+00> : vector<16x16xf32>
    %76 = tpu.matmul %0, %75, %cst_51 {dimension_numbers = #tpu.dot_dimension_numbers<[1], [0], [0], [1], [0, 0, 1, 1], [], []>} : vector<16x48xf32>, vector<48x16xf32>, vector<16x16xf32> -> vector<16x16xf32>
    %c1_52 = arith.constant 1 : index
    %c0_53 = arith.constant 0 : index
    %c0_54 = arith.constant 0 : index
    %77 = vector.load %arg7[%c1_52, %c0_53, %c0_54] : memref<3x1x16xf32, #tpu.memory_space<vmem>>, vector<1x1x16xf32>
    %78 = vector.shape_cast %77 : vector<1x1x16xf32> to vector<1x16xf32>
    %79 = vector.broadcast %78 : vector<1x16xf32> to vector<16x16xf32>
    %80 = arith.addf %76, %79 : vector<16x16xf32>
    %81 = vector.extract_strided_slice %66 {offsets = [0, 0], sizes = [8, 16], strides = [1, 1]} : vector<16x16xf32> to vector<8x16xf32>
    %82 = vector.extract_strided_slice %73 {offsets = [0, 0], sizes = [8, 16], strides = [1, 1]} : vector<16x16xf32> to vector<8x16xf32>
    %83 = vector.extract_strided_slice %80 {offsets = [0, 0], sizes = [8, 16], strides = [1, 1]} : vector<16x16xf32> to vector<8x16xf32>
    %cst_55 = arith.constant dense<0.000000e+00> : vector<8x8xf32>
    %84 = tpu.matmul %81, %82, %cst_55 {dimension_numbers = #tpu.dot_dimension_numbers<[1], [1], [0], [0], [0, 0, 1, 0], [], []>} : vector<8x16xf32>, vector<8x16xf32>, vector<8x8xf32> -> vector<8x8xf32>
    %cst_56 = arith.constant 0.0800640732 : f32
    %85 = vector.broadcast %cst_56 : f32 to vector<8x8xf32>
    %86 = arith.mulf %84, %85 : vector<8x8xf32>
    %cst_57 = arith.constant dense<0xFF800000> : vector<8xf32>
    %87 = vector.multi_reduction <maximumf>, %86, %cst_57 [1] : vector<8x8xf32> to vector<8xf32>
    %88 = vector.shape_cast %87 : vector<8xf32> to vector<8x1xf32>
    %89 = vector.broadcast %88 : vector<8x1xf32> to vector<8x8xf32>
    %90 = arith.subf %86, %89 : vector<8x8xf32>
    %91 = math.exp %90 : vector<8x8xf32>
    %cst_58 = arith.constant dense<0.000000e+00> : vector<8xf32>
    %92 = vector.multi_reduction <add>, %91, %cst_58 [1] : vector<8x8xf32> to vector<8xf32>
    %93 = vector.shape_cast %92 : vector<8xf32> to vector<8x1xf32>
    %94 = tpu.reciprocal %93 : vector<8x1xf32> -> vector<8x1xf32>
    %95 = vector.broadcast %94 : vector<8x1xf32> to vector<8x8xf32>
    %96 = arith.mulf %91, %95 : vector<8x8xf32>
    %cst_59 = arith.constant dense<0.000000e+00> : vector<8x16xf32>
    %97 = tpu.matmul %96, %83, %cst_59 {dimension_numbers = #tpu.dot_dimension_numbers<[1], [0], [0], [1], [0, 0, 1, 1], [], []>} : vector<8x8xf32>, vector<8x16xf32>, vector<8x16xf32> -> vector<8x16xf32>
    %98 = vector.extract_strided_slice %66 {offsets = [8, 0], sizes = [8, 16], strides = [1, 1]} : vector<16x16xf32> to vector<8x16xf32>
    %99 = vector.extract_strided_slice %73 {offsets = [8, 0], sizes = [8, 16], strides = [1, 1]} : vector<16x16xf32> to vector<8x16xf32>
    %100 = vector.extract_strided_slice %80 {offsets = [8, 0], sizes = [8, 16], strides = [1, 1]} : vector<16x16xf32> to vector<8x16xf32>
    %cst_60 = arith.constant dense<0.000000e+00> : vector<8x8xf32>
    %101 = tpu.matmul %98, %99, %cst_60 {dimension_numbers = #tpu.dot_dimension_numbers<[1], [1], [0], [0], [0, 0, 1, 0], [], []>} : vector<8x16xf32>, vector<8x16xf32>, vector<8x8xf32> -> vector<8x8xf32>
    %cst_61 = arith.constant 0.0800640732 : f32
    %102 = vector.broadcast %cst_61 : f32 to vector<8x8xf32>
    %103 = arith.mulf %101, %102 : vector<8x8xf32>
    %cst_62 = arith.constant dense<0xFF800000> : vector<8xf32>
    %104 = vector.multi_reduction <maximumf>, %103, %cst_62 [1] : vector<8x8xf32> to vector<8xf32>
    %105 = vector.shape_cast %104 : vector<8xf32> to vector<8x1xf32>
    %106 = vector.broadcast %105 : vector<8x1xf32> to vector<8x8xf32>
    %107 = arith.subf %103, %106 : vector<8x8xf32>
    %108 = math.exp %107 : vector<8x8xf32>
    %cst_63 = arith.constant dense<0.000000e+00> : vector<8xf32>
    %109 = vector.multi_reduction <add>, %108, %cst_63 [1] : vector<8x8xf32> to vector<8xf32>
    %110 = vector.shape_cast %109 : vector<8xf32> to vector<8x1xf32>
    %111 = tpu.reciprocal %110 : vector<8x1xf32> -> vector<8x1xf32>
    %112 = vector.broadcast %111 : vector<8x1xf32> to vector<8x8xf32>
    %113 = arith.mulf %108, %112 : vector<8x8xf32>
    %cst_64 = arith.constant dense<0.000000e+00> : vector<8x16xf32>
    %114 = tpu.matmul %113, %100, %cst_64 {dimension_numbers = #tpu.dot_dimension_numbers<[1], [0], [0], [1], [0, 0, 1, 1], [], []>} : vector<8x8xf32>, vector<8x16xf32>, vector<8x16xf32> -> vector<8x16xf32>
    %115 = tpu.concatenate %97, %114 in 0 : vector<8x16xf32>, vector<8x16xf32> -> vector<16x16xf32>
    %c1_65 = arith.constant 1 : index
    %c0_66 = arith.constant 0 : index
    %c0_67 = arith.constant 0 : index
    %116 = vector.load %arg8[%c1_65, %c0_66, %c0_67] : memref<3x16x48xf32, #tpu.memory_space<vmem>>, vector<1x16x48xf32>
    %117 = vector.shape_cast %116 : vector<1x16x48xf32> to vector<16x48xf32>
    %cst_68 = arith.constant dense<0.000000e+00> : vector<16x48xf32>
    %118 = tpu.matmul %115, %117, %cst_68 {dimension_numbers = #tpu.dot_dimension_numbers<[1], [0], [0], [1], [0, 0, 1, 1], [], []>} : vector<16x16xf32>, vector<16x48xf32>, vector<16x48xf32> -> vector<16x48xf32>
    %119 = arith.addf %59, %118 : vector<16x48xf32>
    %c2 = arith.constant 2 : index
    %c0_69 = arith.constant 0 : index
    %c0_70 = arith.constant 0 : index
    %120 = vector.load %arg2[%c2, %c0_69, %c0_70] : memref<3x48x16xf32, #tpu.memory_space<vmem>>, vector<1x48x16xf32>
    %121 = vector.shape_cast %120 : vector<1x48x16xf32> to vector<48x16xf32>
    %cst_71 = arith.constant dense<0.000000e+00> : vector<16x16xf32>
    %122 = tpu.matmul %0, %121, %cst_71 {dimension_numbers = #tpu.dot_dimension_numbers<[1], [0], [0], [1], [0, 0, 1, 1], [], []>} : vector<16x48xf32>, vector<48x16xf32>, vector<16x16xf32> -> vector<16x16xf32>
    %c2_72 = arith.constant 2 : index
    %c0_73 = arith.constant 0 : index
    %c0_74 = arith.constant 0 : index
    %123 = vector.load %arg3[%c2_72, %c0_73, %c0_74] : memref<3x1x16xf32, #tpu.memory_space<vmem>>, vector<1x1x16xf32>
    %124 = vector.shape_cast %123 : vector<1x1x16xf32> to vector<1x16xf32>
    %125 = vector.broadcast %124 : vector<1x16xf32> to vector<16x16xf32>
    %126 = arith.addf %122, %125 : vector<16x16xf32>
    %c2_75 = arith.constant 2 : index
    %c0_76 = arith.constant 0 : index
    %c0_77 = arith.constant 0 : index
    %127 = vector.load %arg4[%c2_75, %c0_76, %c0_77] : memref<3x48x16xf32, #tpu.memory_space<vmem>>, vector<1x48x16xf32>
    %128 = vector.shape_cast %127 : vector<1x48x16xf32> to vector<48x16xf32>
    %cst_78 = arith.constant dense<0.000000e+00> : vector<16x16xf32>
    %129 = tpu.matmul %0, %128, %cst_78 {dimension_numbers = #tpu.dot_dimension_numbers<[1], [0], [0], [1], [0, 0, 1, 1], [], []>} : vector<16x48xf32>, vector<48x16xf32>, vector<16x16xf32> -> vector<16x16xf32>
    %c2_79 = arith.constant 2 : index
    %c0_80 = arith.constant 0 : index
    %c0_81 = arith.constant 0 : index
    %130 = vector.load %arg5[%c2_79, %c0_80, %c0_81] : memref<3x1x16xf32, #tpu.memory_space<vmem>>, vector<1x1x16xf32>
    %131 = vector.shape_cast %130 : vector<1x1x16xf32> to vector<1x16xf32>
    %132 = vector.broadcast %131 : vector<1x16xf32> to vector<16x16xf32>
    %133 = arith.addf %129, %132 : vector<16x16xf32>
    %c2_82 = arith.constant 2 : index
    %c0_83 = arith.constant 0 : index
    %c0_84 = arith.constant 0 : index
    %134 = vector.load %arg6[%c2_82, %c0_83, %c0_84] : memref<3x48x16xf32, #tpu.memory_space<vmem>>, vector<1x48x16xf32>
    %135 = vector.shape_cast %134 : vector<1x48x16xf32> to vector<48x16xf32>
    %cst_85 = arith.constant dense<0.000000e+00> : vector<16x16xf32>
    %136 = tpu.matmul %0, %135, %cst_85 {dimension_numbers = #tpu.dot_dimension_numbers<[1], [0], [0], [1], [0, 0, 1, 1], [], []>} : vector<16x48xf32>, vector<48x16xf32>, vector<16x16xf32> -> vector<16x16xf32>
    %c2_86 = arith.constant 2 : index
    %c0_87 = arith.constant 0 : index
    %c0_88 = arith.constant 0 : index
    %137 = vector.load %arg7[%c2_86, %c0_87, %c0_88] : memref<3x1x16xf32, #tpu.memory_space<vmem>>, vector<1x1x16xf32>
    %138 = vector.shape_cast %137 : vector<1x1x16xf32> to vector<1x16xf32>
    %139 = vector.broadcast %138 : vector<1x16xf32> to vector<16x16xf32>
    %140 = arith.addf %136, %139 : vector<16x16xf32>
    %141 = vector.extract_strided_slice %126 {offsets = [0, 0], sizes = [8, 16], strides = [1, 1]} : vector<16x16xf32> to vector<8x16xf32>
    %142 = vector.extract_strided_slice %133 {offsets = [0, 0], sizes = [8, 16], strides = [1, 1]} : vector<16x16xf32> to vector<8x16xf32>
    %143 = vector.extract_strided_slice %140 {offsets = [0, 0], sizes = [8, 16], strides = [1, 1]} : vector<16x16xf32> to vector<8x16xf32>
    %cst_89 = arith.constant dense<0.000000e+00> : vector<8x8xf32>
    %144 = tpu.matmul %141, %142, %cst_89 {dimension_numbers = #tpu.dot_dimension_numbers<[1], [1], [0], [0], [0, 0, 1, 0], [], []>} : vector<8x16xf32>, vector<8x16xf32>, vector<8x8xf32> -> vector<8x8xf32>
    %cst_90 = arith.constant 0.0800640732 : f32
    %145 = vector.broadcast %cst_90 : f32 to vector<8x8xf32>
    %146 = arith.mulf %144, %145 : vector<8x8xf32>
    %cst_91 = arith.constant dense<0xFF800000> : vector<8xf32>
    %147 = vector.multi_reduction <maximumf>, %146, %cst_91 [1] : vector<8x8xf32> to vector<8xf32>
    %148 = vector.shape_cast %147 : vector<8xf32> to vector<8x1xf32>
    %149 = vector.broadcast %148 : vector<8x1xf32> to vector<8x8xf32>
    %150 = arith.subf %146, %149 : vector<8x8xf32>
    %151 = math.exp %150 : vector<8x8xf32>
    %cst_92 = arith.constant dense<0.000000e+00> : vector<8xf32>
    %152 = vector.multi_reduction <add>, %151, %cst_92 [1] : vector<8x8xf32> to vector<8xf32>
    %153 = vector.shape_cast %152 : vector<8xf32> to vector<8x1xf32>
    %154 = tpu.reciprocal %153 : vector<8x1xf32> -> vector<8x1xf32>
    %155 = vector.broadcast %154 : vector<8x1xf32> to vector<8x8xf32>
    %156 = arith.mulf %151, %155 : vector<8x8xf32>
    %cst_93 = arith.constant dense<0.000000e+00> : vector<8x16xf32>
    %157 = tpu.matmul %156, %143, %cst_93 {dimension_numbers = #tpu.dot_dimension_numbers<[1], [0], [0], [1], [0, 0, 1, 1], [], []>} : vector<8x8xf32>, vector<8x16xf32>, vector<8x16xf32> -> vector<8x16xf32>
    %158 = vector.extract_strided_slice %126 {offsets = [8, 0], sizes = [8, 16], strides = [1, 1]} : vector<16x16xf32> to vector<8x16xf32>
    %159 = vector.extract_strided_slice %133 {offsets = [8, 0], sizes = [8, 16], strides = [1, 1]} : vector<16x16xf32> to vector<8x16xf32>
    %160 = vector.extract_strided_slice %140 {offsets = [8, 0], sizes = [8, 16], strides = [1, 1]} : vector<16x16xf32> to vector<8x16xf32>
    %cst_94 = arith.constant dense<0.000000e+00> : vector<8x8xf32>
    %161 = tpu.matmul %158, %159, %cst_94 {dimension_numbers = #tpu.dot_dimension_numbers<[1], [1], [0], [0], [0, 0, 1, 0], [], []>} : vector<8x16xf32>, vector<8x16xf32>, vector<8x8xf32> -> vector<8x8xf32>
    %cst_95 = arith.constant 0.0800640732 : f32
    %162 = vector.broadcast %cst_95 : f32 to vector<8x8xf32>
    %163 = arith.mulf %161, %162 : vector<8x8xf32>
    %cst_96 = arith.constant dense<0xFF800000> : vector<8xf32>
    %164 = vector.multi_reduction <maximumf>, %163, %cst_96 [1] : vector<8x8xf32> to vector<8xf32>
    %165 = vector.shape_cast %164 : vector<8xf32> to vector<8x1xf32>
    %166 = vector.broadcast %165 : vector<8x1xf32> to vector<8x8xf32>
    %167 = arith.subf %163, %166 : vector<8x8xf32>
    %168 = math.exp %167 : vector<8x8xf32>
    %cst_97 = arith.constant dense<0.000000e+00> : vector<8xf32>
    %169 = vector.multi_reduction <add>, %168, %cst_97 [1] : vector<8x8xf32> to vector<8xf32>
    %170 = vector.shape_cast %169 : vector<8xf32> to vector<8x1xf32>
    %171 = tpu.reciprocal %170 : vector<8x1xf32> -> vector<8x1xf32>
    %172 = vector.broadcast %171 : vector<8x1xf32> to vector<8x8xf32>
    %173 = arith.mulf %168, %172 : vector<8x8xf32>
    %cst_98 = arith.constant dense<0.000000e+00> : vector<8x16xf32>
    %174 = tpu.matmul %173, %160, %cst_98 {dimension_numbers = #tpu.dot_dimension_numbers<[1], [0], [0], [1], [0, 0, 1, 1], [], []>} : vector<8x8xf32>, vector<8x16xf32>, vector<8x16xf32> -> vector<8x16xf32>
    %175 = tpu.concatenate %157, %174 in 0 : vector<8x16xf32>, vector<8x16xf32> -> vector<16x16xf32>
    %c2_99 = arith.constant 2 : index
    %c0_100 = arith.constant 0 : index
    %c0_101 = arith.constant 0 : index
    %176 = vector.load %arg8[%c2_99, %c0_100, %c0_101] : memref<3x16x48xf32, #tpu.memory_space<vmem>>, vector<1x16x48xf32>
    %177 = vector.shape_cast %176 : vector<1x16x48xf32> to vector<16x48xf32>
    %cst_102 = arith.constant dense<0.000000e+00> : vector<16x48xf32>
    %178 = tpu.matmul %175, %177, %cst_102 {dimension_numbers = #tpu.dot_dimension_numbers<[1], [0], [0], [1], [0, 0, 1, 1], [], []>} : vector<16x16xf32>, vector<16x48xf32>, vector<16x48xf32> -> vector<16x48xf32>
    %179 = arith.addf %119, %178 : vector<16x48xf32>
    %c0_103 = arith.constant 0 : index
    %c0_104 = arith.constant 0 : index
    %180 = vector.load %arg9[%c0_103, %c0_104] : memref<1x48xf32, #tpu.memory_space<vmem>>, vector<1x48xf32>
    %181 = vector.broadcast %180 : vector<1x48xf32> to vector<16x48xf32>
    %182 = arith.addf %179, %181 : vector<16x48xf32>
    %183 = arith.addf %182, %0 : vector<16x48xf32>
    %cst_105 = arith.constant dense<0.000000e+00> : vector<16xf32>
    %184 = vector.multi_reduction <add>, %183, %cst_105 [1] : vector<16x48xf32> to vector<16xf32>
    %185 = vector.shape_cast %184 : vector<16xf32> to vector<16x1xf32>
    %cst_106 = arith.constant 4.800000e+01 : f32
    %186 = vector.broadcast %cst_106 : f32 to vector<16x1xf32>
    %187 = arith.divf %185, %186 : vector<16x1xf32>
    %188 = vector.broadcast %187 : vector<16x1xf32> to vector<16x48xf32>
    %189 = arith.subf %183, %188 : vector<16x48xf32>
    %190 = arith.mulf %189, %189 : vector<16x48xf32>
    %cst_107 = arith.constant dense<0.000000e+00> : vector<16xf32>
    %191 = vector.multi_reduction <add>, %190, %cst_107 [1] : vector<16x48xf32> to vector<16xf32>
    %192 = vector.shape_cast %191 : vector<16xf32> to vector<16x1xf32>
    %cst_108 = arith.constant 4.800000e+01 : f32
    %193 = vector.broadcast %cst_108 : f32 to vector<16x1xf32>
    %194 = arith.divf %192, %193 : vector<16x1xf32>
    %195 = vector.broadcast %187 : vector<16x1xf32> to vector<16x48xf32>
    %196 = arith.subf %183, %195 : vector<16x48xf32>
    %cst_109 = arith.constant 9.99999974E-6 : f32
    %197 = vector.broadcast %cst_109 : f32 to vector<16x1xf32>
    %198 = arith.addf %194, %197 : vector<16x1xf32>
    %199 = math.rsqrt %198 : vector<16x1xf32>
    %200 = vector.broadcast %199 : vector<16x1xf32> to vector<16x48xf32>
    %201 = arith.mulf %196, %200 : vector<16x48xf32>
    %c0_110 = arith.constant 0 : index
    %c0_111 = arith.constant 0 : index
    %202 = vector.load %arg10[%c0_110, %c0_111] : memref<1x48xf32, #tpu.memory_space<vmem>>, vector<1x48xf32>
    %203 = vector.broadcast %202 : vector<1x48xf32> to vector<16x48xf32>
    %204 = arith.mulf %201, %203 : vector<16x48xf32>
    %c0_112 = arith.constant 0 : index
    %c0_113 = arith.constant 0 : index
    %205 = vector.load %arg11[%c0_112, %c0_113] : memref<1x48xf32, #tpu.memory_space<vmem>>, vector<1x48xf32>
    %206 = vector.broadcast %205 : vector<1x48xf32> to vector<16x48xf32>
    %207 = arith.addf %204, %206 : vector<16x48xf32>
    %c0_114 = arith.constant 0 : index
    %c0_115 = arith.constant 0 : index
    %208 = vector.load %arg12[%c0_114, %c0_115] : memref<48x384xf32, #tpu.memory_space<vmem>>, vector<48x384xf32>
    %cst_116 = arith.constant dense<0.000000e+00> : vector<16x384xf32>
    %209 = tpu.matmul %207, %208, %cst_116 {dimension_numbers = #tpu.dot_dimension_numbers<[1], [0], [0], [1], [0, 0, 1, 1], [], []>} : vector<16x48xf32>, vector<48x384xf32>, vector<16x384xf32> -> vector<16x384xf32>
    %c0_117 = arith.constant 0 : index
    %c0_118 = arith.constant 0 : index
    %210 = vector.load %arg13[%c0_117, %c0_118] : memref<1x384xf32, #tpu.memory_space<vmem>>, vector<1x384xf32>
    %211 = vector.broadcast %210 : vector<1x384xf32> to vector<16x384xf32>
    %212 = arith.addf %209, %211 : vector<16x384xf32>
    %cst_119 = arith.constant 5.000000e-01 : f32
    %213 = vector.broadcast %cst_119 : f32 to vector<16x384xf32>
    %214 = arith.mulf %212, %213 : vector<16x384xf32>
    %cst_120 = arith.constant 0.707106769 : f32
    %215 = vector.broadcast %cst_120 : f32 to vector<16x384xf32>
    %216 = arith.mulf %212, %215 : vector<16x384xf32>
    %217 = math.erf %216 : vector<16x384xf32>
    %cst_121 = arith.constant 1.000000e+00 : f32
    %218 = vector.broadcast %cst_121 : f32 to vector<16x384xf32>
    %219 = arith.addf %218, %217 : vector<16x384xf32>
    %220 = arith.mulf %214, %219 : vector<16x384xf32>
    %c0_122 = arith.constant 0 : index
    %c0_123 = arith.constant 0 : index
    %221 = vector.load %arg14[%c0_122, %c0_123] : memref<384x128xf32, #tpu.memory_space<vmem>>, vector<384x128xf32>
    %cst_124 = arith.constant dense<0.000000e+00> : vector<16x128xf32>
    %222 = tpu.matmul %220, %221, %cst_124 {dimension_numbers = #tpu.dot_dimension_numbers<[1], [0], [0], [1], [0, 0, 1, 1], [], []>} : vector<16x384xf32>, vector<384x128xf32>, vector<16x128xf32> -> vector<16x128xf32>
    %c0_125 = arith.constant 0 : index
    %c0_126 = arith.constant 0 : index
    %223 = vector.load %arg15[%c0_125, %c0_126] : memref<1x128xf32, #tpu.memory_space<vmem>>, vector<1x128xf32>
    %224 = vector.broadcast %223 : vector<1x128xf32> to vector<16x128xf32>
    %225 = arith.addf %222, %224 : vector<16x128xf32>
    %c0_127 = arith.constant 0 : index
    %c0_128 = arith.constant 0 : index
    %226 = vector.load %arg16[%c0_127, %c0_128] : memref<16x128xf32, #tpu.memory_space<vmem>>, vector<16x128xf32>
    tpu.vector_store %arg16[%c0_127, %c0_128], %225 {strides = array<i32>} : memref<16x128xf32, #tpu.memory_space<vmem>>, vector<16x128xf32>,
    %227 = vector.shape_cast %37 : vector<8x8xf32> to vector<1x8x8xf32>
    %228 = vector.shape_cast %96 : vector<8x8xf32> to vector<1x8x8xf32>
    %229 = vector.shape_cast %156 : vector<8x8xf32> to vector<1x8x8xf32>
    %230 = tpu.concatenate %227, %228, %229 in 0 : vector<1x8x8xf32>, vector<1x8x8xf32>, vector<1x8x8xf32> -> vector<3x8x8xf32>
    %231 = vector.shape_cast %54 : vector<8x8xf32> to vector<1x8x8xf32>
    %232 = vector.shape_cast %113 : vector<8x8xf32> to vector<1x8x8xf32>
    %233 = vector.shape_cast %173 : vector<8x8xf32> to vector<1x8x8xf32>
    %234 = tpu.concatenate %231, %232, %233 in 0 : vector<1x8x8xf32>, vector<1x8x8xf32>, vector<1x8x8xf32> -> vector<3x8x8xf32>
    %235 = vector.shape_cast %230 : vector<3x8x8xf32> to vector<1x3x8x8xf32>
    %236 = vector.shape_cast %234 : vector<3x8x8xf32> to vector<1x3x8x8xf32>
    %237 = tpu.concatenate %235, %236 in 0 : vector<1x3x8x8xf32>, vector<1x3x8x8xf32> -> vector<2x3x8x8xf32>
    %c0_129 = arith.constant 0 : index
    %c0_130 = arith.constant 0 : index
    %c0_131 = arith.constant 0 : index
    %c0_132 = arith.constant 0 : index
    %238 = vector.load %arg17[%c0_129, %c0_130, %c0_131, %c0_132] : memref<2x3x8x8xf32, #tpu.memory_space<vmem>>, vector<2x3x8x8xf32>
    tpu.vector_store %arg17[%c0_129, %c0_130, %c0_131, %c0_132], %237 {strides = array<i32>} : memref<2x3x8x8xf32, #tpu.memory_space<vmem>>, vector<2x3x8x8xf32>,
    return
  }
  func.func @transform_0(%arg0: i32) -> (i32, i32) {
    %c0_i32 = arith.constant 0 : i32
    %c0_i32_0 = arith.constant 0 : i32
    %c0_i32_1 = arith.constant 0 : i32
    return %c0_i32, %c0_i32_0 : i32, i32
  }
  func.func @transform_1(%arg0: i32) -> (i32, i32, i32) {
    %c0_i32 = arith.constant 0 : i32
    %c0_i32_0 = arith.constant 0 : i32
    %c0_i32_1 = arith.constant 0 : i32
    %c0_i32_2 = arith.constant 0 : i32
    return %c0_i32, %c0_i32_0, %c0_i32_1 : i32, i32, i32
  }
  func.func @transform_2(%arg0: i32) -> (i32, i32, i32) {
    %c0_i32 = arith.constant 0 : i32
    %c0_i32_0 = arith.constant 0 : i32
    %c0_i32_1 = arith.constant 0 : i32
    %c0_i32_2 = arith.constant 0 : i32
    return %c0_i32, %c0_i32_0, %c0_i32_1 : i32, i32, i32
  }
  func.func @transform_3(%arg0: i32) -> (i32, i32, i32) {
    %c0_i32 = arith.constant 0 : i32
    %c0_i32_0 = arith.constant 0 : i32
    %c0_i32_1 = arith.constant 0 : i32
    %c0_i32_2 = arith.constant 0 : i32
    return %c0_i32, %c0_i32_0, %c0_i32_1 : i32, i32, i32
  }
  func.func @transform_4(%arg0: i32) -> (i32, i32, i32) {
    %c0_i32 = arith.constant 0 : i32
    %c0_i32_0 = arith.constant 0 : i32
    %c0_i32_1 = arith.constant 0 : i32
    %c0_i32_2 = arith.constant 0 : i32
    return %c0_i32, %c0_i32_0, %c0_i32_1 : i32, i32, i32
  }
  func.func @transform_5(%arg0: i32) -> (i32, i32, i32) {
    %c0_i32 = arith.constant 0 : i32
    %c0_i32_0 = arith.constant 0 : i32
    %c0_i32_1 = arith.constant 0 : i32
    %c0_i32_2 = arith.constant 0 : i32
    return %c0_i32, %c0_i32_0, %c0_i32_1 : i32, i32, i32
  }
  func.func @transform_6(%arg0: i32) -> (i32, i32, i32) {
    %c0_i32 = arith.constant 0 : i32
    %c0_i32_0 = arith.constant 0 : i32
    %c0_i32_1 = arith.constant 0 : i32
    %c0_i32_2 = arith.constant 0 : i32
    return %c0_i32, %c0_i32_0, %c0_i32_1 : i32, i32, i32
  }
  func.func @transform_7(%arg0: i32) -> (i32, i32, i32) {
    %c0_i32 = arith.constant 0 : i32
    %c0_i32_0 = arith.constant 0 : i32
    %c0_i32_1 = arith.constant 0 : i32
    %c0_i32_2 = arith.constant 0 : i32
    return %c0_i32, %c0_i32_0, %c0_i32_1 : i32, i32, i32
  }
  func.func @transform_8(%arg0: i32) -> (i32, i32) {
    %c0_i32 = arith.constant 0 : i32
    %c0_i32_0 = arith.constant 0 : i32
    %c0_i32_1 = arith.constant 0 : i32
    return %c0_i32, %c0_i32_0 : i32, i32
  }
  func.func @transform_9(%arg0: i32) -> (i32, i32) {
    %c0_i32 = arith.constant 0 : i32
    %c0_i32_0 = arith.constant 0 : i32
    %c0_i32_1 = arith.constant 0 : i32
    return %c0_i32, %c0_i32_0 : i32, i32
  }
  func.func @transform_10(%arg0: i32) -> (i32, i32) {
    %c0_i32 = arith.constant 0 : i32
    %c0_i32_0 = arith.constant 0 : i32
    %c0_i32_1 = arith.constant 0 : i32
    return %c0_i32, %c0_i32_0 : i32, i32
  }
  func.func @transform_11(%arg0: i32) -> (i32, i32) {
    %c0_i32 = arith.constant 0 : i32
    %c0_i32_0 = arith.constant 0 : i32
    %c0_i32_1 = arith.constant 0 : i32
    return %c0_i32, %c0_i32_0 : i32, i32
  }
  func.func @transform_12(%arg0: i32) -> (i32, i32) {
    %c0_i32 = arith.constant 0 : i32
    %c0_i32_0 = arith.constant 0 : i32
    %c0_i32_1 = arith.constant 0 : i32
    return %c0_i32, %c0_i32_0 : i32, i32
  }
  func.func @transform_13(%arg0: i32) -> (i32, i32) {
    %c0_i32 = arith.constant 0 : i32
    %c0_i32_0 = arith.constant 0 : i32
    %c0_i32_1 = arith.constant 0 : i32
    return %c0_i32, %c0_i32_0 : i32, i32
  }
  func.func @transform_14(%arg0: i32) -> (i32, i32) {
    %c0_i32 = arith.constant 0 : i32
    %c0_i32_0 = arith.constant 0 : i32
    %c0_i32_1 = arith.constant 0 : i32
    return %c0_i32, %c0_i32_0 : i32, i32
  }
  func.func @transform_15(%arg0: i32) -> (i32, i32) {
    %c0_i32 = arith.constant 0 : i32
    %c0_i32_0 = arith.constant 0 : i32
    %c0_i32_1 = arith.constant 0 : i32
    return %c0_i32, %c0_i32_0 : i32, i32
  }
  func.func @transform_16(%arg0: i32) -> (i32, i32, i32, i32) {
    %c0_i32 = arith.constant 0 : i32
    %c0_i32_0 = arith.constant 0 : i32
    %c0_i32_1 = arith.constant 0 : i32
    %c0_i32_2 = arith.constant 0 : i32
    %c0_i32_3 = arith.constant 0 : i32
    return %c0_i32, %c0_i32_0, %c0_i32_1, %c0_i32_2 : i32, i32, i32, i32
  }
}

</mosaic_0001>

<llo_original>
// kernel: apply.1
$region0: #{apply.1}
  #allocation0 [shape = 'u32[]', space=smem, size = 0x4, offset = 0x4, fixed_abs, tag = 'smem constant byte address 0x4 - core index']
  #allocation1 [shape = 'u32[144,128]{1,0:T(1,128)}', space=vmem, size = 0x12000, scoped, tag = 'internal scratch']
  %s0 = inlined_call_operand.vmem [shape: f32[16,48], index: 0, kind: input, shape index: {}]
  %s1 = inlined_call_operand.vmem [shape: f32[3,48,16], index: 1, kind: input, shape index: {}]
  %s2 = inlined_call_operand.vmem [shape: f32[3,1,16], index: 2, kind: input, shape index: {}]
  %s3 = inlined_call_operand.vmem [shape: f32[3,48,16], index: 3, kind: input, shape index: {}]
  %s4 = inlined_call_operand.vmem [shape: f32[3,1,16], index: 4, kind: input, shape index: {}]
  %s5 = inlined_call_operand.vmem [shape: f32[3,48,16], index: 5, kind: input, shape index: {}]
  %s6 = inlined_call_operand.vmem [shape: f32[3,1,16], index: 6, kind: input, shape index: {}]
  %s7 = inlined_call_operand.vmem [shape: f32[3,16,48], index: 7, kind: input, shape index: {}]
  %s8 = inlined_call_operand.vmem [shape: f32[1,48], index: 8, kind: input, shape index: {}]
  %s9 = inlined_call_operand.vmem [shape: f32[1,48], index: 9, kind: input, shape index: {}]
  %s10 = inlined_call_operand.vmem [shape: f32[1,48], index: 10, kind: input, shape index: {}]
  %s11 = inlined_call_operand.vmem [shape: f32[48,384], index: 11, kind: input, shape index: {}]
  %s12 = inlined_call_operand.vmem [shape: f32[1,384], index: 12, kind: input, shape index: {}]
  %s13 = inlined_call_operand.vmem [shape: f32[384,128], index: 13, kind: input, shape index: {}]
  %s14 = inlined_call_operand.vmem [shape: f32[1,128], index: 14, kind: input, shape index: {}]
  %s15 = inlined_call_operand.vmem [shape: f32[16,128], index: 15, kind: output, shape index: {0}]
  %s16 = inlined_call_operand.hbm [shape: f32[2,3,8,8], index: 16, kind: output, shape index: {1}]
  %17 = xla_tuple %s15, %s16
  %s18 = sld [smem:[#allocation0]]
  $region78: #{apply.1} parent=0
    _
  %s20 = ssub.s32 1, %s18
  %s21 = scalar_select 0, %s20, %s18
  $region1: #{apply.1} parent=0
    #allocation2 [shape = 'u8[24576]{0}', space=vmem, size = 0x6000, scoped, tag = 'output window, operand 1, single buffered']
    #allocation3 [shape = 's32[1]{0}', space=sflag, size = 0x4, scoped, tag = 'scoped memory for apply.1']
    %22 = vsyncpa [#allocation3], 0
    // Predicated region
    $region2: #{apply.1} parent=1 // pred_check
      _
    $region3: #{apply.1} parent=1 // pred_check_branch
      %24 = sbr.rel (0) target = $region5
    $region4: #{apply.1} parent=1 // pred_region
      _
    $region5: #{apply.1} parent=1 // pred_fallthru
      _
    // Predicated region
    $region6: #{apply.1} parent=1 // pred_check
      _
    $region7: #{apply.1} parent=1 // pred_check_branch
      %26 = sbr.rel (0) target = $region9
    $region8: #{apply.1} parent=1 // pred_region
      _
    $region9: #{apply.1} parent=1 // pred_fallthru
      _
    // Predicated region
    $region10: #{apply.1} parent=1 // pred_check
      _
    $region11: #{apply.1} parent=1 // pred_check_branch
      %28 = sbr.rel (0) target = $region13
    $region12: #{apply.1} parent=1 // pred_region
      _
    $region13: #{apply.1} parent=1 // pred_fallthru
      _
    // Predicated region
    $region14: #{apply.1} parent=1 // pred_check
      _
    $region15: #{apply.1} parent=1 // pred_check_branch
      %30 = sbr.rel (0) target = $region17
    $region16: #{apply.1} parent=1 // pred_region
      _
    $region17: #{apply.1} parent=1 // pred_fallthru
      _
    // Predicated region
    $region18: #{apply.1} parent=1 // pred_check
      _
    $region19: #{apply.1} parent=1 // pred_check_branch
      %32 = sbr.rel (0) target = $region21
    $region20: #{apply.1} parent=1 // pred_region
      _
    $region21: #{apply.1} parent=1 // pred_fallthru
      _
    // Predicated region
    $region22: #{apply.1} parent=1 // pred_check
      _
    $region23: #{apply.1} parent=1 // pred_check_branch
      %34 = sbr.rel (0) target = $region25
    $region24: #{apply.1} parent=1 // pred_region
      _
    $region25: #{apply.1} parent=1 // pred_fallthru
      _
    // Predicated region
    $region26: #{apply.1} parent=1 // pred_check
      _
    $region27: #{apply.1} parent=1 // pred_check_branch
      %36 = sbr.rel (0) target = $region29
    $region28: #{apply.1} parent=1 // pred_region
      _
    $region29: #{apply.1} parent=1 // pred_fallthru
      _
    // Predicated region
    $region30: #{apply.1} parent=1 // pred_check
      _
    $region31: #{apply.1} parent=1 // pred_check_branch
      %38 = sbr.rel (0) target = $region33
    $region32: #{apply.1} parent=1 // pred_region
      _
    $region33: #{apply.1} parent=1 // pred_fallthru
      _
    // Predicated region
    $region34: #{apply.1} parent=1 // pred_check
      _
    $region35: #{apply.1} parent=1 // pred_check_branch
      %40 = sbr.rel (0) target = $region37
    $region36: #{apply.1} parent=1 // pred_region
      _
    $region37: #{apply.1} parent=1 // pred_fallthru
      _
    // Predicated region
    $region38: #{apply.1} parent=1 // pred_check
      _
    $region39: #{apply.1} parent=1 // pred_check_branch
      %42 = sbr.rel (0) target = $region41
    $region40: #{apply.1} parent=1 // pred_region
      _
    $region41: #{apply.1} parent=1 // pred_fallthru
      _
    // Predicated region
    $region42: #{apply.1} parent=1 // pred_check
      _
    $region43: #{apply.1} parent=1 // pred_check_branch
      %44 = sbr.rel (0) target = $region45
    $region44: #{apply.1} parent=1 // pred_region
      _
    $region45: #{apply.1} parent=1 // pred_fallthru
      _
    // Predicated region
    $region46: #{apply.1} parent=1 // pred_check
      _
    $region47: #{apply.1} parent=1 // pred_check_branch
      %46 = sbr.rel (0) target = $region49
    $region48: #{apply.1} parent=1 // pred_region
      _
    $region49: #{apply.1} parent=1 // pred_fallthru
      _
    // Predicated region
    $region50: #{apply.1} parent=1 // pred_check
      _
    $region51: #{apply.1} parent=1 // pred_check_branch
      %48 = sbr.rel (0) target = $region53
    $region52: #{apply.1} parent=1 // pred_region
      _
    $region53: #{apply.1} parent=1 // pred_fallthru
      _
    // Predicated region
    $region54: #{apply.1} parent=1 // pred_check
      _
    $region55: #{apply.1} parent=1 // pred_check_branch
      %50 = sbr.rel (0) target = $region57
    $region56: #{apply.1} parent=1 // pred_region
      _
    $region57: #{apply.1} parent=1 // pred_fallthru
      _
    // Predicated region
    $region58: #{apply.1} parent=1 // pred_check
      _
    $region59: #{apply.1} parent=1 // pred_check_branch
      %52 = sbr.rel (0) target = $region61
    $region60: #{apply.1} parent=1 // pred_region
      _
    $region61: #{apply.1} parent=1 // pred_fallthru
      _
    %v53 = vld [vmem:[%s0] sm:$0xff]
    %v54 = vld [vmem:[%s0 + $0x8] sm:$0xff]
    %v55 = vld [vmem:[%s1] sm:$0xff]
    %v56 = vld [vmem:[%s1 + $0x8] sm:$0xff]
    %v57 = vld [vmem:[%s1 + $0x10] sm:$0xff]
    %v58 = vld [vmem:[%s1 + $0x18] sm:$0xff]
    %v59 = vld [vmem:[%s1 + $0x20] sm:$0xff]
    %v60 = vld [vmem:[%s1 + $0x28] sm:$0xff]
    %v61 = vld [vmem:[%s2] sm:$0x1]
    %v63 = vlaneseq
    %v64 = vshrl.u32 %v63, 7
    %v65 = vsub.s32 0, %v64
    %v66 = vrot.slane %v61, %v65
    %vm68 = vcmask 392192
    %v70 = vsel %vm68, %v53, 0
    %v73 = vsel %vm68, %v54, 0
    %75 = vmatprep.subr.mxu0 0.0
    %76 = vmatpush1.msra.mxu0 %v55
    %77 = vmatprep.subr.mxu0 0.0
    %78 = vmatpush1.msra.mxu0 %v56
    %79 = vmatprep.subr.mxu0 0.0
    %80 = vmatpush1.msra.mxu0 %v57
    %81 = vmatprep.subr.mxu0 0.0
    %82 = vmatpush1.msra.mxu0 %v58
    %83 = vmatprep.subr.mxu0 0.0
    %84 = vmatpush1.msra.mxu0 %v59
    %85 = vmatprep.subr.mxu0 0.0
    %86 = vmatpush1.msra.mxu0 %v60
    %87 = vmatprep.subr.mxu0 0.0
    %88 = vmatpush1.msra.mxu0 0.0
    %89 = vmatprep.subr.mxu0 0.0
    %90 = vmatpush1.msra.mxu0 0.0
    %91 = vmatprep.subr.mxu0 0.0
    %92 = vmatpush1.msra.mxu0 0.0
    %93 = vmatprep.subr.mxu0 0.0
    %94 = vmatpush1.msra.mxu0 0.0
    %95 = vmatprep.subr.mxu0 0.0
    %96 = vmatpush1.msra.mxu0 0.0
    %97 = vmatprep.subr.mxu0 0.0
    %98 = vmatpush1.msra.mxu0 0.0
    %99 = vmatprep.subr.mxu0 0.0
    %100 = vmatpush1.msra.mxu0 0.0
    %101 = vmatprep.subr.mxu0 0.0
    %102 = vmatpush1.msra.mxu0 0.0
    %103 = vmatprep.subr.mxu0 0.0
    %104 = vmatpush1.msra.mxu0 0.0
    %105 = vmatprep.subr.mxu0 0.0
    %106 = vmatpush1.msra.mxu0 0.0
    %107 = vmatprep.subr.mxu0 0.0
    %108 = vmatpush1.msra.mxu0 0.0
    %109 = vmatprep.subr.mxu0 0.0
    %110 = vmatpush1.msra.mxu0 0.0
    %111 = vmatprep.subr.mxu0 0.0
    %112 = vmatpush1.msra.mxu0 0.0
    %113 = vmatprep.subr.mxu0 0.0
    %114 = vmatpush1.msra.mxu0 0.0
    %115 = vmatprep.subr.mxu0 0.0
    %116 = vmatpush1.msra.mxu0 0.0
    %117 = vmatprep.subr.mxu0 0.0
    %118 = vmatpush1.msra.mxu0 0.0
    %119 = vmatprep.subr.mxu0 0.0
    %120 = vmatpush1.msra.mxu0 0.0
    %121 = vmatprep.subr.mxu0 0.0
    %122 = vmatpush1.msra.mxu0 0.0
    %123 = vmatprep.subr.mxu0 0.0
    %124 = vmatpush1.msra.mxu0 0.0
    %125 = vmatprep.subr.mxu0 0.0
    %126 = vmatpush1.msra.mxu0 0.0
    %127 = vmatprep.subr.mxu0 0.0
    %128 = vmatpush1.msra.mxu0 0.0
    %129 = vmatprep.subr.mxu0 0.0
    %130 = vmatpush1.msra.mxu0 0.0
    %131 = vmatprep.subr.mxu0 0.0
    %132 = vmatpush1.msra.mxu0 0.0
    %133 = vmatprep.subr.mxu0 0.0
    %134 = vmatpush1.msra.mxu0 0.0
    %135 = vmatprep.subr.mxu0 0.0
    %136 = vmatpush1.msra.mxu0 0.0
    %137 = vmatprep.subr.mxu0 0.0
    %138 = vmatpush1.msra.mxu0 0.0
    %139 = vmatprep.mubr.f32.mxu0 0.0
    %140 = vmatmul.mubr.f32.gmra.mrb[0].mxu0 %v70
    %v141 = vpop.f32.mrb[0].mxu0
    %v142 = vadd.f32 %v66, %v141
    %v143 = vpop.f32.mrb[0].mxu0
    %144 = vmatprep.mubr.f32.mxu0 0.0
    %145 = vmatmul.mubr.f32.gmra.mrb[0].mxu0 %v73
    %v146 = vpop.f32.mrb[0].mxu0
    %v147 = vadd.f32 %v66, %v146
    %v148 = vpop.f32.mrb[0].mxu0
    %149 = vdwg.mxu0
    %v150 = vld [vmem:[%s3] sm:$0xff]
    %v151 = vld [vmem:[%s3 + $0x8] sm:$0xff]
    %v152 = vld [vmem:[%s3 + $0x10] sm:$0xff]
    %v153 = vld [vmem:[%s3 + $0x18] sm:$0xff]
    %v154 = vld [vmem:[%s3 + $0x20] sm:$0xff]
    %v155 = vld [vmem:[%s3 + $0x28] sm:$0xff]
    %v156 = vld [vmem:[%s4] sm:$0x1]
    %v158 = vlaneseq
    %v159 = vshrl.u32 %v158, 7
    %v160 = vsub.s32 0, %v159
    %v161 = vrot.slane %v156, %v160
    %163 = vmatprep.subr.mxu0 0.0
    %164 = vmatpush1.msra.mxu0 %v150
    %165 = vmatprep.subr.mxu0 0.0
    %166 = vmatpush1.msra.mxu0 %v151
    %167 = vmatprep.subr.mxu0 0.0
    %168 = vmatpush1.msra.mxu0 %v152
    %169 = vmatprep.subr.mxu0 0.0
    %170 = vmatpush1.msra.mxu0 %v153
    %171 = vmatprep.subr.mxu0 0.0
    %172 = vmatpush1.msra.mxu0 %v154
    %173 = vmatprep.subr.mxu0 0.0
    %174 = vmatpush1.msra.mxu0 %v155
    %175 = vmatprep.subr.mxu0 0.0
    %176 = vmatpush1.msra.mxu0 0.0
    %177 = vmatprep.subr.mxu0 0.0
    %178 = vmatpush1.msra.mxu0 0.0
    %179 = vmatprep.subr.mxu0 0.0
    %180 = vmatpush1.msra.mxu0 0.0
    %181 = vmatprep.subr.mxu0 0.0
    %182 = vmatpush1.msra.mxu0 0.0
    %183 = vmatprep.subr.mxu0 0.0
    %184 = vmatpush1.msra.mxu0 0.0
    %185 = vmatprep.subr.mxu0 0.0
    %186 = vmatpush1.msra.mxu0 0.0
    %187 = vmatprep.subr.mxu0 0.0
    %188 = vmatpush1.msra.mxu0 0.0
    %189 = vmatprep.subr.mxu0 0.0
    %190 = vmatpush1.msra.mxu0 0.0
    %191 = vmatprep.subr.mxu0 0.0
    %192 = vmatpush1.msra.mxu0 0.0
    %193 = vmatprep.subr.mxu0 0.0
    %194 = vmatpush1.msra.mxu0 0.0
    %195 = vmatprep.subr.mxu0 0.0
    %196 = vmatpush1.msra.mxu0 0.0
    %197 = vmatprep.subr.mxu0 0.0
    %198 = vmatpush1.msra.mxu0 0.0
    %199 = vmatprep.subr.mxu0 0.0
    %200 = vmatpush1.msra.mxu0 0.0
    %201 = vmatprep.subr.mxu0 0.0
    %202 = vmatpush1.msra.mxu0 0.0
    %203 = vmatprep.subr.mxu0 0.0
    %204 = vmatpush1.msra.mxu0 0.0
    %205 = vmatprep.subr.mxu0 0.0
    %206 = vmatpush1.msra.mxu0 0.0
    %207 = vmatprep.subr.mxu0 0.0
    %208 = vmatpush1.msra.mxu0 0.0
    %209 = vmatprep.subr.mxu0 0.0
    %210 = vmatpush1.msra.mxu0 0.0
    %211 = vmatprep.subr.mxu0 0.0
    %212 = vmatpush1.msra.mxu0 0.0
    %213 = vmatprep.subr.mxu0 0.0
    %214 = vmatpush1.msra.mxu0 0.0
    %215 = vmatprep.subr.mxu0 0.0
    %216 = vmatpush1.msra.mxu0 0.0
    %217 = vmatprep.subr.mxu0 0.0
    %218 = vmatpush1.msra.mxu0 0.0
    %219 = vmatprep.subr.mxu0 0.0
    %220 = vmatpush1.msra.mxu0 0.0
    %221 = vmatprep.subr.mxu0 0.0
    %222 = vmatpush1.msra.mxu0 0.0
    %223 = vmatprep.subr.mxu0 0.0
    %224 = vmatpush1.msra.mxu0 0.0
    %225 = vmatprep.subr.mxu0 0.0
    %226 = vmatpush1.msra.mxu0 0.0
    %227 = vmatprep.mubr.f32.mxu0 0.0
    %228 = vmatmul.mubr.f32.gmra.mrb[0].mxu0 %v70
    %v229 = vpop.f32.mrb[0].mxu0
    %v230 = vadd.f32 %v161, %v229
    %v231 = vpop.f32.mrb[0].mxu0
    %232 = vmatprep.mubr.f32.mxu0 0.0
    %233 = vmatmul.mubr.f32.gmra.mrb[0].mxu0 %v73
    %v234 = vpop.f32.mrb[0].mxu0
    %v235 = vadd.f32 %v161, %v234
    %v236 = vpop.f32.mrb[0].mxu0
    %237 = vdwg.mxu0
    %v238 = vld [vmem:[%s5] sm:$0xff]
    %v239 = vld [vmem:[%s5 + $0x8] sm:$0xff]
    %v240 = vld [vmem:[%s5 + $0x10] sm:$0xff]
    %v241 = vld [vmem:[%s5 + $0x18] sm:$0xff]
    %v242 = vld [vmem:[%s5 + $0x20] sm:$0xff]
    %v243 = vld [vmem:[%s5 + $0x28] sm:$0xff]
    %v244 = vld [vmem:[%s6] sm:$0x1]
    %v246 = vlaneseq
    %v247 = vshrl.u32 %v246, 7
    %v248 = vsub.s32 0, %v247
    %v249 = vrot.slane %v244, %v248
    %251 = vmatprep.subr.mxu0 0.0
    %252 = vmatpush1.msra.mxu0 %v238
    %253 = vmatprep.subr.mxu0 0.0
    %254 = vmatpush1.msra.mxu0 %v239
    %255 = vmatprep.subr.mxu0 0.0
    %256 = vmatpush1.msra.mxu0 %v240
    %257 = vmatprep.subr.mxu0 0.0
    %258 = vmatpush1.msra.mxu0 %v241
    %259 = vmatprep.subr.mxu0 0.0
    %260 = vmatpush1.msra.mxu0 %v242
    %261 = vmatprep.subr.mxu0 0.0
    %262 = vmatpush1.msra.mxu0 %v243
    %263 = vmatprep.subr.mxu0 0.0
    %264 = vmatpush1.msra.mxu0 0.0
    %265 = vmatprep.subr.mxu0 0.0
    %266 = vmatpush1.msra.mxu0 0.0
    %267 = vmatprep.subr.mxu0 0.0
    %268 = vmatpush1.msra.mxu0 0.0
    %269 = vmatprep.subr.mxu0 0.0
    %270 = vmatpush1.msra.mxu0 0.0
    %271 = vmatprep.subr.mxu0 0.0
    %272 = vmatpush1.msra.mxu0 0.0
    %273 = vmatprep.subr.mxu0 0.0
    %274 = vmatpush1.msra.mxu0 0.0
    %275 = vmatprep.subr.mxu0 0.0
    %276 = vmatpush1.msra.mxu0 0.0
    %277 = vmatprep.subr.mxu0 0.0
    %278 = vmatpush1.msra.mxu0 0.0
    %279 = vmatprep.subr.mxu0 0.0
    %280 = vmatpush1.msra.mxu0 0.0
    %281 = vmatprep.subr.mxu0 0.0
    %282 = vmatpush1.msra.mxu0 0.0
    %283 = vmatprep.subr.mxu0 0.0
    %284 = vmatpush1.msra.mxu0 0.0
    %285 = vmatprep.subr.mxu0 0.0
    %286 = vmatpush1.msra.mxu0 0.0
    %287 = vmatprep.subr.mxu0 0.0
    %288 = vmatpush1.msra.mxu0 0.0
    %289 = vmatprep.subr.mxu0 0.0
    %290 = vmatpush1.msra.mxu0 0.0
    %291 = vmatprep.subr.mxu0 0.0
    %292 = vmatpush1.msra.mxu0 0.0
    %293 = vmatprep.subr.mxu0 0.0
    %294 = vmatpush1.msra.mxu0 0.0
    %295 = vmatprep.subr.mxu0 0.0
    %296 = vmatpush1.msra.mxu0 0.0
    %297 = vmatprep.subr.mxu0 0.0
    %298 = vmatpush1.msra.mxu0 0.0
    %299 = vmatprep.subr.mxu0 0.0
    %300 = vmatpush1.msra.mxu0 0.0
    %301 = vmatprep.subr.mxu0 0.0
    %302 = vmatpush1.msra.mxu0 0.0
    %303 = vmatprep.subr.mxu0 0.0
    %304 = vmatpush1.msra.mxu0 0.0
    %305 = vmatprep.subr.mxu0 0.0
    %306 = vmatpush1.msra.mxu0 0.0
    %307 = vmatprep.subr.mxu0 0.0
    %308 = vmatpush1.msra.mxu0 0.0
    %309 = vmatprep.subr.mxu0 0.0
    %310 = vmatpush1.msra.mxu0 0.0
    %311 = vmatprep.subr.mxu0 0.0
    %312 = vmatpush1.msra.mxu0 0.0
    %313 = vmatprep.subr.mxu0 0.0
    %314 = vmatpush1.msra.mxu0 0.0
    %315 = vmatprep.mubr.f32.mxu0 0.0
    %316 = vmatmul.mubr.f32.gmra.mrb[0].mxu0 %v70
    %v317 = vpop.f32.mrb[0].mxu0
    %v318 = vadd.f32 %v249, %v317
    %v319 = vpop.f32.mrb[0].mxu0
    %320 = vmatprep.mubr.f32.mxu0 0.0
    %321 = vmatmul.mubr.f32.gmra.mrb[0].mxu0 %v73
    %v322 = vpop.f32.mrb[0].mxu0
    %v323 = vadd.f32 %v249, %v322
    %v324 = vpop.f32.mrb[0].mxu0
    %325 = vdwg.mxu0
    %vm326 = vcmask 130048
    %v328 = vsel %vm326, %v142, 0
    %v331 = vsel %vm326, %v230, 0
    %333 = vmatprep.subr.mxu0 0.0
    %334 = vmatpush1.xpose.msra.mxu0 %v331
    %335 = vmatprep.subr.mxu0 0.0
    %336 = vmatpush1.xpose.msra.mxu0 0.0
    %337 = vmatprep.subr.mxu0 0.0
    %338 = vmatpush1.xpose.msra.mxu0 0.0
    %339 = vmatprep.subr.mxu0 0.0
    %340 = vmatpush1.xpose.msra.mxu0 0.0
    %341 = vmatprep.subr.mxu0 0.0
    %342 = vmatpush1.xpose.msra.mxu0 0.0
    %343 = vmatprep.subr.mxu0 0.0
    %344 = vmatpush1.xpose.msra.mxu0 0.0
    %345 = vmatprep.subr.mxu0 0.0
    %346 = vmatpush1.xpose.msra.mxu0 0.0
    %347 = vmatprep.subr.mxu0 0.0
    %348 = vmatpush1.xpose.msra.mxu0 0.0
    %349 = vmatprep.subr.mxu0 0.0
    %350 = vmatpush1.xpose.msra.mxu0 0.0
    %351 = vmatprep.subr.mxu0 0.0
    %352 = vmatpush1.xpose.msra.mxu0 0.0
    %353 = vmatprep.subr.mxu0 0.0
    %354 = vmatpush1.xpose.msra.mxu0 0.0
    %355 = vmatprep.subr.mxu0 0.0
    %356 = vmatpush1.xpose.msra.mxu0 0.0
    %357 = vmatprep.subr.mxu0 0.0
    %358 = vmatpush1.xpose.msra.mxu0 0.0
    %359 = vmatprep.subr.mxu0 0.0
    %360 = vmatpush1.xpose.msra.mxu0 0.0
    %361 = vmatprep.subr.mxu0 0.0
    %362 = vmatpush1.xpose.msra.mxu0 0.0
    %363 = vmatprep.subr.mxu0 0.0
    %364 = vmatpush1.xpose.msra.mxu0 0.0
    %365 = vmatprep.subr.mxu0 0.0
    %366 = vmatpush1.xpose.msra.mxu0 0.0
    %367 = vmatprep.subr.mxu0 0.0
    %368 = vmatpush1.xpose.msra.mxu0 0.0
    %369 = vmatprep.subr.mxu0 0.0
    %370 = vmatpush1.xpose.msra.mxu0 0.0
    %371 = vmatprep.subr.mxu0 0.0
    %372 = vmatpush1.xpose.msra.mxu0 0.0
    %373 = vmatprep.subr.mxu0 0.0
    %374 = vmatpush1.xpose.msra.mxu0 0.0
    %375 = vmatprep.subr.mxu0 0.0
    %376 = vmatpush1.xpose.msra.mxu0 0.0
    %377 = vmatprep.subr.mxu0 0.0
    %378 = vmatpush1.xpose.msra.mxu0 0.0
    %379 = vmatprep.subr.mxu0 0.0
    %380 = vmatpush1.xpose.msra.mxu0 0.0
    %381 = vmatprep.subr.mxu0 0.0
    %382 = vmatpush1.xpose.msra.mxu0 0.0
    %383 = vmatprep.subr.mxu0 0.0
    %384 = vmatpush1.xpose.msra.mxu0 0.0
    %385 = vmatprep.subr.mxu0 0.0
    %386 = vmatpush1.xpose.msra.mxu0 0.0
    %387 = vmatprep.subr.mxu0 0.0
    %388 = vmatpush1.xpose.msra.mxu0 0.0
    %389 = vmatprep.subr.mxu0 0.0
    %390 = vmatpush1.xpose.msra.mxu0 0.0
    %391 = vmatprep.subr.mxu0 0.0
    %392 = vmatpush1.xpose.msra.mxu0 0.0
    %393 = vmatprep.subr.mxu0 0.0
    %394 = vmatpush1.xpose.msra.mxu0 0.0
    %395 = vmatprep.subr.mxu0 0.0
    %396 = vmatpush1.xpose.msra.mxu0 0.0
    %397 = vmatprep.mubr.f32.mxu0 0.0
    %398 = vmatmul.mubr.f32.gmra.mrb[0].mxu0 %v328
    %v399 = vpop.f32.mrb[0].mxu0
    %v400 = vadd.f32 0.0, %v399
    %v401 = vpop.f32.mrb[0].mxu0
    %402 = vdwg.mxu0
    %v403 = vmul.f32 %v400, 0.08006407
    %vm404 = vcmask 64512
    %v405 = vsel %vm404, %v403, -inf
    %406 = vmax.xlane.f32.xlu0 %v405
    %v407 = vpop.xlane.xlu0 %406
    %v408 = vsub.f32 %v403, %v407
    %v409 = vmul.f32 %v408, 1.442695
    %v410 = vpow.pop %v409
    %v411 = vsel %vm404, %v410, 0.0
    %412 = vadd.xlane.f32.xlu0 %v411
    %v413 = vpop.xlane.xlu0 %412
    %v414 = vrcp.pop %v413
    %v415 = vmul.f32 %v410, %v414
    %v417 = vsel %vm404, %v415, 0
    %419 = vmatprep.subr.mxu0 0.0
    %420 = vmatpush1.msra.mxu0 %v318
    %421 = vmatprep.subr.mxu0 0.0
    %422 = vmatpush1.msra.mxu0 0.0
    %423 = vmatprep.subr.mxu0 0.0
    %424 = vmatpush1.msra.mxu0 0.0
    %425 = vmatprep.subr.mxu0 0.0
    %426 = vmatpush1.msra.mxu0 0.0
    %427 = vmatprep.subr.mxu0 0.0
    %428 = vmatpush1.msra.mxu0 0.0
    %429 = vmatprep.subr.mxu0 0.0
    %430 = vmatpush1.msra.mxu0 0.0
    %431 = vmatprep.subr.mxu0 0.0
    %432 = vmatpush1.msra.mxu0 0.0
    %433 = vmatprep.subr.mxu0 0.0
    %434 = vmatpush1.msra.mxu0 0.0
    %435 = vmatprep.subr.mxu0 0.0
    %436 = vmatpush1.msra.mxu0 0.0
    %437 = vmatprep.subr.mxu0 0.0
    %438 = vmatpush1.msra.mxu0 0.0
    %439 = vmatprep.subr.mxu0 0.0
    %440 = vmatpush1.msra.mxu0 0.0
    %441 = vmatprep.subr.mxu0 0.0
    %442 = vmatpush1.msra.mxu0 0.0
    %443 = vmatprep.subr.mxu0 0.0
    %444 = vmatpush1.msra.mxu0 0.0
    %445 = vmatprep.subr.mxu0 0.0
    %446 = vmatpush1.msra.mxu0 0.0
    %447 = vmatprep.subr.mxu0 0.0
    %448 = vmatpush1.msra.mxu0 0.0
    %449 = vmatprep.subr.mxu0 0.0
    %450 = vmatpush1.msra.mxu0 0.0
    %451 = vmatprep.subr.mxu0 0.0
    %452 = vmatpush1.msra.mxu0 0.0
    %453 = vmatprep.subr.mxu0 0.0
    %454 = vmatpush1.msra.mxu0 0.0
    %455 = vmatprep.subr.mxu0 0.0
    %456 = vmatpush1.msra.mxu0 0.0
    %457 = vmatprep.subr.mxu0 0.0
    %458 = vmatpush1.msra.mxu0 0.0
    %459 = vmatprep.subr.mxu0 0.0
    %460 = vmatpush1.msra.mxu0 0.0
    %461 = vmatprep.subr.mxu0 0.0
    %462 = vmatpush1.msra.mxu0 0.0
    %463 = vmatprep.subr.mxu0 0.0
    %464 = vmatpush1.msra.mxu0 0.0
    %465 = vmatprep.subr.mxu0 0.0
    %466 = vmatpush1.msra.mxu0 0.0
    %467 = vmatprep.subr.mxu0 0.0
    %468 = vmatpush1.msra.mxu0 0.0
    %469 = vmatprep.subr.mxu0 0.0
    %470 = vmatpush1.msra.mxu0 0.0
    %471 = vmatprep.subr.mxu0 0.0
    %472 = vmatpush1.msra.mxu0 0.0
    %473 = vmatprep.subr.mxu0 0.0
    %474 = vmatpush1.msra.mxu0 0.0
    %475 = vmatprep.subr.mxu0 0.0
    %476 = vmatpush1.msra.mxu0 0.0
    %477 = vmatprep.subr.mxu0 0.0
    %478 = vmatpush1.msra.mxu0 0.0
    %479 = vmatprep.subr.mxu0 0.0
    %480 = vmatpush1.msra.mxu0 0.0
    %481 = vmatprep.subr.mxu0 0.0
    %482 = vmatpush1.msra.mxu0 0.0
    %483 = vmatprep.mubr.f32.mxu0 0.0
    %484 = vmatmul.mubr.f32.gmra.mrb[0].mxu0 %v417
    %v485 = vpop.f32.mrb[0].mxu0
    %v486 = vadd.f32 0.0, %v485
    %v487 = vpop.f32.mrb[0].mxu0
    %488 = vdwg.mxu0
    %v490 = vsel %vm326, %v147, 0
    %v493 = vsel %vm326, %v235, 0
    %495 = vmatprep.subr.mxu0 0.0
    %496 = vmatpush1.xpose.msra.mxu0 %v493
    %497 = vmatprep.subr.mxu0 0.0
    %498 = vmatpush1.xpose.msra.mxu0 0.0
    %499 = vmatprep.subr.mxu0 0.0
    %500 = vmatpush1.xpose.msra.mxu0 0.0
    %501 = vmatprep.subr.mxu0 0.0
    %502 = vmatpush1.xpose.msra.mxu0 0.0
    %503 = vmatprep.subr.mxu0 0.0
    %504 = vmatpush1.xpose.msra.mxu0 0.0
    %505 = vmatprep.subr.mxu0 0.0
    %506 = vmatpush1.xpose.msra.mxu0 0.0
    %507 = vmatprep.subr.mxu0 0.0
    %508 = vmatpush1.xpose.msra.mxu0 0.0
    %509 = vmatprep.subr.mxu0 0.0
    %510 = vmatpush1.xpose.msra.mxu0 0.0
    %511 = vmatprep.subr.mxu0 0.0
    %512 = vmatpush1.xpose.msra.mxu0 0.0
    %513 = vmatprep.subr.mxu0 0.0
    %514 = vmatpush1.xpose.msra.mxu0 0.0
    %515 = vmatprep.subr.mxu0 0.0
    %516 = vmatpush1.xpose.msra.mxu0 0.0
    %517 = vmatprep.subr.mxu0 0.0
    %518 = vmatpush1.xpose.msra.mxu0 0.0
    %519 = vmatprep.subr.mxu0 0.0
    %520 = vmatpush1.xpose.msra.mxu0 0.0
    %521 = vmatprep.subr.mxu0 0.0
    %522 = vmatpush1.xpose.msra.mxu0 0.0
    %523 = vmatprep.subr.mxu0 0.0
    %524 = vmatpush1.xpose.msra.mxu0 0.0
    %525 = vmatprep.subr.mxu0 0.0
    %526 = vmatpush1.xpose.msra.mxu0 0.0
    %527 = vmatprep.subr.mxu0 0.0
    %528 = vmatpush1.xpose.msra.mxu0 0.0
    %529 = vmatprep.subr.mxu0 0.0
    %530 = vmatpush1.xpose.msra.mxu0 0.0
    %531 = vmatprep.subr.mxu0 0.0
    %532 = vmatpush1.xpose.msra.mxu0 0.0
    %533 = vmatprep.subr.mxu0 0.0
    %534 = vmatpush1.xpose.msra.mxu0 0.0
    %535 = vmatprep.subr.mxu0 0.0
    %536 = vmatpush1.xpose.msra.mxu0 0.0
    %537 = vmatprep.subr.mxu0 0.0
    %538 = vmatpush1.xpose.msra.mxu0 0.0
    %539 = vmatprep.subr.mxu0 0.0
    %540 = vmatpush1.xpose.msra.mxu0 0.0
    %541 = vmatprep.subr.mxu0 0.0
    %542 = vmatpush1.xpose.msra.mxu0 0.0
    %543 = vmatprep.subr.mxu0 0.0
    %544 = vmatpush1.xpose.msra.mxu0 0.0
    %545 = vmatprep.subr.mxu0 0.0
    %546 = vmatpush1.xpose.msra.mxu0 0.0
    %547 = vmatprep.subr.mxu0 0.0
    %548 = vmatpush1.xpose.msra.mxu0 0.0
    %549 = vmatprep.subr.mxu0 0.0
    %550 = vmatpush1.xpose.msra.mxu0 0.0
    %551 = vmatprep.subr.mxu0 0.0
    %552 = vmatpush1.xpose.msra.mxu0 0.0
    %553 = vmatprep.subr.mxu0 0.0
    %554 = vmatpush1.xpose.msra.mxu0 0.0
    %555 = vmatprep.subr.mxu0 0.0
    %556 = vmatpush1.xpose.msra.mxu0 0.0
    %557 = vmatprep.subr.mxu0 0.0
    %558 = vmatpush1.xpose.msra.mxu0 0.0
    %559 = vmatprep.mubr.f32.mxu0 0.0
    %560 = vmatmul.mubr.f32.gmra.mrb[0].mxu0 %v490
    %v561 = vpop.f32.mrb[0].mxu0
    %v562 = vadd.f32 0.0, %v561
    %v563 = vpop.f32.mrb[0].mxu0
    %564 = vdwg.mxu0
    %v565 = vmul.f32 %v562, 0.08006407
    %v566 = vsel %vm404, %v565, -inf
    %567 = vmax.xlane.f32.xlu0 %v566
    %v568 = vpop.xlane.xlu0 %567
    %v569 = vsub.f32 %v565, %v568
    %v570 = vmul.f32 %v569, 1.442695
    %v571 = vpow.pop %v570
    %v572 = vsel %vm404, %v571, 0.0
    %573 = vadd.xlane.f32.xlu0 %v572
    %v574 = vpop.xlane.xlu0 %573
    %v575 = vrcp.pop %v574
    %v576 = vmul.f32 %v571, %v575
    %v578 = vsel %vm404, %v576, 0
    %580 = vmatprep.subr.mxu0 0.0
    %581 = vmatpush1.msra.mxu0 %v323
    %582 = vmatprep.subr.mxu0 0.0
    %583 = vmatpush1.msra.mxu0 0.0
    %584 = vmatprep.subr.mxu0 0.0
    %585 = vmatpush1.msra.mxu0 0.0
    %586 = vmatprep.subr.mxu0 0.0
    %587 = vmatpush1.msra.mxu0 0.0
    %588 = vmatprep.subr.mxu0 0.0
    %589 = vmatpush1.msra.mxu0 0.0
    %590 = vmatprep.subr.mxu0 0.0
    %591 = vmatpush1.msra.mxu0 0.0
    %592 = vmatprep.subr.mxu0 0.0
    %593 = vmatpush1.msra.mxu0 0.0
    %594 = vmatprep.subr.mxu0 0.0
    %595 = vmatpush1.msra.mxu0 0.0
    %596 = vmatprep.subr.mxu0 0.0
    %597 = vmatpush1.msra.mxu0 0.0
    %598 = vmatprep.subr.mxu0 0.0
    %599 = vmatpush1.msra.mxu0 0.0
    %600 = vmatprep.subr.mxu0 0.0
    %601 = vmatpush1.msra.mxu0 0.0
    %602 = vmatprep.subr.mxu0 0.0
    %603 = vmatpush1.msra.mxu0 0.0
    %604 = vmatprep.subr.mxu0 0.0
    %605 = vmatpush1.msra.mxu0 0.0
    %606 = vmatprep.subr.mxu0 0.0
    %607 = vmatpush1.msra.mxu0 0.0
    %608 = vmatprep.subr.mxu0 0.0
    %609 = vmatpush1.msra.mxu0 0.0
    %610 = vmatprep.subr.mxu0 0.0
    %611 = vmatpush1.msra.mxu0 0.0
    %612 = vmatprep.subr.mxu0 0.0
    %613 = vmatpush1.msra.mxu0 0.0
    %614 = vmatprep.subr.mxu0 0.0
    %615 = vmatpush1.msra.mxu0 0.0
    %616 = vmatprep.subr.mxu0 0.0
    %617 = vmatpush1.msra.mxu0 0.0
    %618 = vmatprep.subr.mxu0 0.0
    %619 = vmatpush1.msra.mxu0 0.0
    %620 = vmatprep.subr.mxu0 0.0
    %621 = vmatpush1.msra.mxu0 0.0
    %622 = vmatprep.subr.mxu0 0.0
    %623 = vmatpush1.msra.mxu0 0.0
    %624 = vmatprep.subr.mxu0 0.0
    %625 = vmatpush1.msra.mxu0 0.0
    %626 = vmatprep.subr.mxu0 0.0
    %627 = vmatpush1.msra.mxu0 0.0
    %628 = vmatprep.subr.mxu0 0.0
    %629 = vmatpush1.msra.mxu0 0.0
    %630 = vmatprep.subr.mxu0 0.0
    %631 = vmatpush1.msra.mxu0 0.0
    %632 = vmatprep.subr.mxu0 0.0
    %633 = vmatpush1.msra.mxu0 0.0
    %634 = vmatprep.subr.mxu0 0.0
    %635 = vmatpush1.msra.mxu0 0.0
    %636 = vmatprep.subr.mxu0 0.0
    %637 = vmatpush1.msra.mxu0 0.0
    %638 = vmatprep.subr.mxu0 0.0
    %639 = vmatpush1.msra.mxu0 0.0
    %640 = vmatprep.subr.mxu0 0.0
    %641 = vmatpush1.msra.mxu0 0.0
    %642 = vmatprep.subr.mxu0 0.0
    %643 = vmatpush1.msra.mxu0 0.0
    %644 = vmatprep.mubr.f32.mxu0 0.0
    %645 = vmatmul.mubr.f32.gmra.mrb[0].mxu0 %v578
    %v646 = vpop.f32.mrb[0].mxu0
    %v647 = vadd.f32 0.0, %v646
    %v648 = vpop.f32.mrb[0].mxu0
    %649 = vdwg.mxu0
    %v650 = vld [vmem:[%s7] sm:$0xff]
    %v651 = vld [vmem:[%s7 + $0x8] sm:$0xff]
    %s652 = scalar_lea.vmem %s1, 48
    %v653 = vld [vmem:[%s652] sm:$0xff]
    %v654 = vld [vmem:[%s652 + $0x8] sm:$0xff]
    %v655 = vld [vmem:[%s652 + $0x10] sm:$0xff]
    %v656 = vld [vmem:[%s652 + $0x18] sm:$0xff]
    %v657 = vld [vmem:[%s652 + $0x20] sm:$0xff]
    %v658 = vld [vmem:[%s652 + $0x28] sm:$0xff]
    %s659 = scalar_lea.vmem %s2, 1
    %v660 = vld [vmem:[%s659] sm:$0x1]
    %v662 = vlaneseq
    %v663 = vshrl.u32 %v662, 7
    %v664 = vsub.s32 0, %v663
    %v665 = vrot.slane %v660, %v664
    %667 = vmatprep.subr.mxu0 0.0
    %668 = vmatpush1.msra.mxu0 %v653
    %669 = vmatprep.subr.mxu0 0.0
    %670 = vmatpush1.msra.mxu0 %v654
    %671 = vmatprep.subr.mxu0 0.0
    %672 = vmatpush1.msra.mxu0 %v655
    %673 = vmatprep.subr.mxu0 0.0
    %674 = vmatpush1.msra.mxu0 %v656
    %675 = vmatprep.subr.mxu0 0.0
    %676 = vmatpush1.msra.mxu0 %v657
    %677 = vmatprep.subr.mxu0 0.0
    %678 = vmatpush1.msra.mxu0 %v658
    %679 = vmatprep.subr.mxu0 0.0
    %680 = vmatpush1.msra.mxu0 0.0
    %681 = vmatprep.subr.mxu0 0.0
    %682 = vmatpush1.msra.mxu0 0.0
    %683 = vmatprep.subr.mxu0 0.0
    %684 = vmatpush1.msra.mxu0 0.0
    %685 = vmatprep.subr.mxu0 0.0
    %686 = vmatpush1.msra.mxu0 0.0
    %687 = vmatprep.subr.mxu0 0.0
    %688 = vmatpush1.msra.mxu0 0.0
    %689 = vmatprep.subr.mxu0 0.0
    %690 = vmatpush1.msra.mxu0 0.0
    %691 = vmatprep.subr.mxu0 0.0
    %692 = vmatpush1.msra.mxu0 0.0
    %693 = vmatprep.subr.mxu0 0.0
    %694 = vmatpush1.msra.mxu0 0.0
    %695 = vmatprep.subr.mxu0 0.0
    %696 = vmatpush1.msra.mxu0 0.0
    %697 = vmatprep.subr.mxu0 0.0
    %698 = vmatpush1.msra.mxu0 0.0
    %699 = vmatprep.subr.mxu0 0.0
    %700 = vmatpush1.msra.mxu0 0.0
    %701 = vmatprep.subr.mxu0 0.0
    %702 = vmatpush1.msra.mxu0 0.0
    %703 = vmatprep.subr.mxu0 0.0
    %704 = vmatpush1.msra.mxu0 0.0
    %705 = vmatprep.subr.mxu0 0.0
    %706 = vmatpush1.msra.mxu0 0.0
    %707 = vmatprep.subr.mxu0 0.0
    %708 = vmatpush1.msra.mxu0 0.0
    %709 = vmatprep.subr.mxu0 0.0
    %710 = vmatpush1.msra.mxu0 0.0
    %711 = vmatprep.subr.mxu0 0.0
    %712 = vmatpush1.msra.mxu0 0.0
    %713 = vmatprep.subr.mxu0 0.0
    %714 = vmatpush1.msra.mxu0 0.0
    %715 = vmatprep.subr.mxu0 0.0
    %716 = vmatpush1.msra.mxu0 0.0
    %717 = vmatprep.subr.mxu0 0.0
    %718 = vmatpush1.msra.mxu0 0.0
    %719 = vmatprep.subr.mxu0 0.0
    %720 = vmatpush1.msra.mxu0 0.0
    %721 = vmatprep.subr.mxu0 0.0
    %722 = vmatpush1.msra.mxu0 0.0
    %723 = vmatprep.subr.mxu0 0.0
    %724 = vmatpush1.msra.mxu0 0.0
    %725 = vmatprep.subr.mxu0 0.0
    %726 = vmatpush1.msra.mxu0 0.0
    %727 = vmatprep.subr.mxu0 0.0
    %728 = vmatpush1.msra.mxu0 0.0
    %729 = vmatprep.subr.mxu0 0.0
    %730 = vmatpush1.msra.mxu0 0.0
    %731 = vmatprep.mubr.f32.mxu0 0.0
    %732 = vmatmul.mubr.f32.gmra.mrb[0].mxu0 %v70
    %v733 = vpop.f32.mrb[0].mxu0
    %v734 = vadd.f32 %v665, %v733
    %v735 = vpop.f32.mrb[0].mxu0
    %736 = vmatprep.mubr.f32.mxu0 0.0
    %737 = vmatmul.mubr.f32.gmra.mrb[0].mxu0 %v73
    %v738 = vpop.f32.mrb[0].mxu0
    %v739 = vadd.f32 %v665, %v738
    %v740 = vpop.f32.mrb[0].mxu0
    %741 = vdwg.mxu0
    %s742 = scalar_lea.vmem %s3, 48
    %v743 = vld [vmem:[%s742] sm:$0xff]
    %v744 = vld [vmem:[%s742 + $0x8] sm:$0xff]
    %v745 = vld [vmem:[%s742 + $0x10] sm:$0xff]
    %v746 = vld [vmem:[%s742 + $0x18] sm:$0xff]
    %v747 = vld [vmem:[%s742 + $0x20] sm:$0xff]
    %v748 = vld [vmem:[%s742 + $0x28] sm:$0xff]
    %s749 = scalar_lea.vmem %s4, 1
    %v750 = vld [vmem:[%s749] sm:$0x1]
    %v752 = vlaneseq
    %v753 = vshrl.u32 %v752, 7
    %v754 = vsub.s32 0, %v753
    %v755 = vrot.slane %v750, %v754
    %757 = vmatprep.subr.mxu0 0.0
    %758 = vmatpush1.msra.mxu0 %v743
    %759 = vmatprep.subr.mxu0 0.0
    %760 = vmatpush1.msra.mxu0 %v744
    %761 = vmatprep.subr.mxu0 0.0
    %762 = vmatpush1.msra.mxu0 %v745
    %763 = vmatprep.subr.mxu0 0.0
    %764 = vmatpush1.msra.mxu0 %v746
    %765 = vmatprep.subr.mxu0 0.0
    %766 = vmatpush1.msra.mxu0 %v747
    %767 = vmatprep.subr.mxu0 0.0
    %768 = vmatpush1.msra.mxu0 %v748
    %769 = vmatprep.subr.mxu0 0.0
    %770 = vmatpush1.msra.mxu0 0.0
    %771 = vmatprep.subr.mxu0 0.0
    %772 = vmatpush1.msra.mxu0 0.0
    %773 = vmatprep.subr.mxu0 0.0
    %774 = vmatpush1.msra.mxu0 0.0
    %775 = vmatprep.subr.mxu0 0.0
    %776 = vmatpush1.msra.mxu0 0.0
    %777 = vmatprep.subr.mxu0 0.0
    %778 = vmatpush1.msra.mxu0 0.0
    %779 = vmatprep.subr.mxu0 0.0
    %780 = vmatpush1.msra.mxu0 0.0
    %781 = vmatprep.subr.mxu0 0.0
    %782 = vmatpush1.msra.mxu0 0.0
    %783 = vmatprep.subr.mxu0 0.0
    %784 = vmatpush1.msra.mxu0 0.0
    %785 = vmatprep.subr.mxu0 0.0
    %786 = vmatpush1.msra.mxu0 0.0
    %787 = vmatprep.subr.mxu0 0.0
    %788 = vmatpush1.msra.mxu0 0.0
    %789 = vmatprep.subr.mxu0 0.0
    %790 = vmatpush1.msra.mxu0 0.0
    %791 = vmatprep.subr.mxu0 0.0
    %792 = vmatpush1.msra.mxu0 0.0
    %793 = vmatprep.subr.mxu0 0.0
    %794 = vmatpush1.msra.mxu0 0.0
    %795 = vmatprep.subr.mxu0 0.0
    %796 = vmatpush1.msra.mxu0 0.0
    %797 = vmatprep.subr.mxu0 0.0
    %798 = vmatpush1.msra.mxu0 0.0
    %799 = vmatprep.subr.mxu0 0.0
    %800 = vmatpush1.msra.mxu0 0.0
    %801 = vmatprep.subr.mxu0 0.0
    %802 = vmatpush1.msra.mxu0 0.0
    %803 = vmatprep.subr.mxu0 0.0
    %804 = vmatpush1.msra.mxu0 0.0
    %805 = vmatprep.subr.mxu0 0.0
    %806 = vmatpush1.msra.mxu0 0.0
    %807 = vmatprep.subr.mxu0 0.0
    %808 = vmatpush1.msra.mxu0 0.0
    %809 = vmatprep.subr.mxu0 0.0
    %810 = vmatpush1.msra.mxu0 0.0
    %811 = vmatprep.subr.mxu0 0.0
    %812 = vmatpush1.msra.mxu0 0.0
    %813 = vmatprep.subr.mxu0 0.0
    %814 = vmatpush1.msra.mxu0 0.0
    %815 = vmatprep.subr.mxu0 0.0
    %816 = vmatpush1.msra.mxu0 0.0
    %817 = vmatprep.subr.mxu0 0.0
    %818 = vmatpush1.msra.mxu0 0.0
    %819 = vmatprep.subr.mxu0 0.0
    %820 = vmatpush1.msra.mxu0 0.0
    %821 = vmatprep.mubr.f32.mxu0 0.0
    %822 = vmatmul.mubr.f32.gmra.mrb[0].mxu0 %v70
    %v823 = vpop.f32.mrb[0].mxu0
    %v824 = vadd.f32 %v755, %v823
    %v825 = vpop.f32.mrb[0].mxu0
    %826 = vmatprep.mubr.f32.mxu0 0.0
    %827 = vmatmul.mubr.f32.gmra.mrb[0].mxu0 %v73
    %v828 = vpop.f32.mrb[0].mxu0
    %v829 = vadd.f32 %v755, %v828
    %v830 = vpop.f32.mrb[0].mxu0
    %831 = vdwg.mxu0
    %s832 = scalar_lea.vmem %s5, 48
    %v833 = vld [vmem:[%s832] sm:$0xff]
    %v834 = vld [vmem:[%s832 + $0x8] sm:$0xff]
    %v835 = vld [vmem:[%s832 + $0x10] sm:$0xff]
    %v836 = vld [vmem:[%s832 + $0x18] sm:$0xff]
    %v837 = vld [vmem:[%s832 + $0x20] sm:$0xff]
    %v838 = vld [vmem:[%s832 + $0x28] sm:$0xff]
    %s839 = scalar_lea.vmem %s6, 1
    %v840 = vld [vmem:[%s839] sm:$0x1]
    %v842 = vlaneseq
    %v843 = vshrl.u32 %v842, 7
    %v844 = vsub.s32 0, %v843
    %v845 = vrot.slane %v840, %v844
    %847 = vmatprep.subr.mxu0 0.0
    %848 = vmatpush1.msra.mxu0 %v833
    %849 = vmatprep.subr.mxu0 0.0
    %850 = vmatpush1.msra.mxu0 %v834
    %851 = vmatprep.subr.mxu0 0.0
    %852 = vmatpush1.msra.mxu0 %v835
    %853 = vmatprep.subr.mxu0 0.0
    %854 = vmatpush1.msra.mxu0 %v836
    %855 = vmatprep.subr.mxu0 0.0
    %856 = vmatpush1.msra.mxu0 %v837
    %857 = vmatprep.subr.mxu0 0.0
    %858 = vmatpush1.msra.mxu0 %v838
    %859 = vmatprep.subr.mxu0 0.0
    %860 = vmatpush1.msra.mxu0 0.0
    %861 = vmatprep.subr.mxu0 0.0
    %862 = vmatpush1.msra.mxu0 0.0
    %863 = vmatprep.subr.mxu0 0.0
    %864 = vmatpush1.msra.mxu0 0.0
    %865 = vmatprep.subr.mxu0 0.0
    %866 = vmatpush1.msra.mxu0 0.0
    %867 = vmatprep.subr.mxu0 0.0
    %868 = vmatpush1.msra.mxu0 0.0
    %869 = vmatprep.subr.mxu0 0.0
    %870 = vmatpush1.msra.mxu0 0.0
    %871 = vmatprep.subr.mxu0 0.0
    %872 = vmatpush1.msra.mxu0 0.0
    %873 = vmatprep.subr.mxu0 0.0
    %874 = vmatpush1.msra.mxu0 0.0
    %875 = vmatprep.subr.mxu0 0.0
    %876 = vmatpush1.msra.mxu0 0.0
    %877 = vmatprep.subr.mxu0 0.0
    %878 = vmatpush1.msra.mxu0 0.0
    %879 = vmatprep.subr.mxu0 0.0
    %880 = vmatpush1.msra.mxu0 0.0
    %881 = vmatprep.subr.mxu0 0.0
    %882 = vmatpush1.msra.mxu0 0.0
    %883 = vmatprep.subr.mxu0 0.0
    %884 = vmatpush1.msra.mxu0 0.0
    %885 = vmatprep.subr.mxu0 0.0
    %886 = vmatpush1.msra.mxu0 0.0
    %887 = vmatprep.subr.mxu0 0.0
    %888 = vmatpush1.msra.mxu0 0.0
    %889 = vmatprep.subr.mxu0 0.0
    %890 = vmatpush1.msra.mxu0 0.0
    %891 = vmatprep.subr.mxu0 0.0
    %892 = vmatpush1.msra.mxu0 0.0
    %893 = vmatprep.subr.mxu0 0.0
    %894 = vmatpush1.msra.mxu0 0.0
    %895 = vmatprep.subr.mxu0 0.0
    %896 = vmatpush1.msra.mxu0 0.0
    %897 = vmatprep.subr.mxu0 0.0
    %898 = vmatpush1.msra.mxu0 0.0
    %899 = vmatprep.subr.mxu0 0.0
    %900 = vmatpush1.msra.mxu0 0.0
    %901 = vmatprep.subr.mxu0 0.0
    %902 = vmatpush1.msra.mxu0 0.0
    %903 = vmatprep.subr.mxu0 0.0
    %904 = vmatpush1.msra.mxu0 0.0
    %905 = vmatprep.subr.mxu0 0.0
    %906 = vmatpush1.msra.mxu0 0.0
    %907 = vmatprep.subr.mxu0 0.0
    %908 = vmatpush1.msra.mxu0 0.0
    %909 = vmatprep.subr.mxu0 0.0
    %910 = vmatpush1.msra.mxu0 0.0
    %911 = vmatprep.mubr.f32.mxu0 0.0
    %912 = vmatmul.mubr.f32.gmra.mrb[0].mxu0 %v70
    %v913 = vpop.f32.mrb[0].mxu0
    %v914 = vadd.f32 %v845, %v913
    %v915 = vpop.f32.mrb[0].mxu0
    %916 = vmatprep.mubr.f32.mxu0 0.0
    %917 = vmatmul.mubr.f32.gmra.mrb[0].mxu0 %v73
    %v918 = vpop.f32.mrb[0].mxu0
    %v919 = vadd.f32 %v845, %v918
    %v920 = vpop.f32.mrb[0].mxu0
    %921 = vdwg.mxu0
    %v923 = vsel %vm326, %v734, 0
    %v926 = vsel %vm326, %v824, 0
    %928 = vmatprep.subr.mxu0 0.0
    %929 = vmatpush1.xpose.msra.mxu0 %v926
    %930 = vmatprep.subr.mxu0 0.0
    %931 = vmatpush1.xpose.msra.mxu0 0.0
    %932 = vmatprep.subr.mxu0 0.0
    %933 = vmatpush1.xpose.msra.mxu0 0.0
    %934 = vmatprep.subr.mxu0 0.0
    %935 = vmatpush1.xpose.msra.mxu0 0.0
    %936 = vmatprep.subr.mxu0 0.0
    %937 = vmatpush1.xpose.msra.mxu0 0.0
    %938 = vmatprep.subr.mxu0 0.0
    %939 = vmatpush1.xpose.msra.mxu0 0.0
    %940 = vmatprep.subr.mxu0 0.0
    %941 = vmatpush1.xpose.msra.mxu0 0.0
    %942 = vmatprep.subr.mxu0 0.0
    %943 = vmatpush1.xpose.msra.mxu0 0.0
    %944 = vmatprep.subr.mxu0 0.0
    %945 = vmatpush1.xpose.msra.mxu0 0.0
    %946 = vmatprep.subr.mxu0 0.0
    %947 = vmatpush1.xpose.msra.mxu0 0.0
    %948 = vmatprep.subr.mxu0 0.0
    %949 = vmatpush1.xpose.msra.mxu0 0.0
    %950 = vmatprep.subr.mxu0 0.0
    %951 = vmatpush1.xpose.msra.mxu0 0.0
    %952 = vmatprep.subr.mxu0 0.0
    %953 = vmatpush1.xpose.msra.mxu0 0.0
    %954 = vmatprep.subr.mxu0 0.0
    %955 = vmatpush1.xpose.msra.mxu0 0.0
    %956 = vmatprep.subr.mxu0 0.0
    %957 = vmatpush1.xpose.msra.mxu0 0.0
    %958 = vmatprep.subr.mxu0 0.0
    %959 = vmatpush1.xpose.msra.mxu0 0.0
    %960 = vmatprep.subr.mxu0 0.0
    %961 = vmatpush1.xpose.msra.mxu0 0.0
    %962 = vmatprep.subr.mxu0 0.0
    %963 = vmatpush1.xpose.msra.mxu0 0.0
    %964 = vmatprep.subr.mxu0 0.0
    %965 = vmatpush1.xpose.msra.mxu0 0.0
    %966 = vmatprep.subr.mxu0 0.0
    %967 = vmatpush1.xpose.msra.mxu0 0.0
    %968 = vmatprep.subr.mxu0 0.0
    %969 = vmatpush1.xpose.msra.mxu0 0.0
    %970 = vmatprep.subr.mxu0 0.0
    %971 = vmatpush1.xpose.msra.mxu0 0.0
    %972 = vmatprep.subr.mxu0 0.0
    %973 = vmatpush1.xpose.msra.mxu0 0.0
    %974 = vmatprep.subr.mxu0 0.0
    %975 = vmatpush1.xpose.msra.mxu0 0.0
    %976 = vmatprep.subr.mxu0 0.0
    %977 = vmatpush1.xpose.msra.mxu0 0.0
    %978 = vmatprep.subr.mxu0 0.0
    %979 = vmatpush1.xpose.msra.mxu0 0.0
    %980 = vmatprep.subr.mxu0 0.0
    %981 = vmatpush1.xpose.msra.mxu0 0.0
    %982 = vmatprep.subr.mxu0 0.0
    %983 = vmatpush1.xpose.msra.mxu0 0.0
    %984 = vmatprep.subr.mxu0 0.0
    %985 = vmatpush1.xpose.msra.mxu0 0.0
    %986 = vmatprep.subr.mxu0 0.0
    %987 = vmatpush1.xpose.msra.mxu0 0.0
    %988 = vmatprep.subr.mxu0 0.0
    %989 = vmatpush1.xpose.msra.mxu0 0.0
    %990 = vmatprep.subr.mxu0 0.0
    %991 = vmatpush1.xpose.msra.mxu0 0.0
    %992 = vmatprep.mubr.f32.mxu0 0.0
    %993 = vmatmul.mubr.f32.gmra.mrb[0].mxu0 %v923
    %v994 = vpop.f32.mrb[0].mxu0
    %v995 = vadd.f32 0.0, %v994
    %v996 = vpop.f32.mrb[0].mxu0
    %997 = vdwg.mxu0
    %v998 = vmul.f32 %v995, 0.08006407
    %v999 = vsel %vm404, %v998, -inf
    %1000 = vmax.xlane.f32.xlu0 %v999
    %v1001 = vpop.xlane.xlu0 %1000
    %v1002 = vsub.f32 %v998, %v1001
    %v1003 = vmul.f32 %v1002, 1.442695
    %v1004 = vpow.pop %v1003
    %v1005 = vsel %vm404, %v1004, 0.0
    %1006 = vadd.xlane.f32.xlu0 %v1005
    %v1007 = vpop.xlane.xlu0 %1006
    %v1008 = vrcp.pop %v1007
    %v1009 = vmul.f32 %v1004, %v1008
    %v1011 = vsel %vm404, %v1009, 0
    %1013 = vmatprep.subr.mxu0 0.0
    %1014 = vmatpush1.msra.mxu0 %v914
    %1015 = vmatprep.subr.mxu0 0.0
    %1016 = vmatpush1.msra.mxu0 0.0
    %1017 = vmatprep.subr.mxu0 0.0
    %1018 = vmatpush1.msra.mxu0 0.0
    %1019 = vmatprep.subr.mxu0 0.0
    %1020 = vmatpush1.msra.mxu0 0.0
    %1021 = vmatprep.subr.mxu0 0.0
    %1022 = vmatpush1.msra.mxu0 0.0
    %1023 = vmatprep.subr.mxu0 0.0
    %1024 = vmatpush1.msra.mxu0 0.0
    %1025 = vmatprep.subr.mxu0 0.0
    %1026 = vmatpush1.msra.mxu0 0.0
    %1027 = vmatprep.subr.mxu0 0.0
    %1028 = vmatpush1.msra.mxu0 0.0
    %1029 = vmatprep.subr.mxu0 0.0
    %1030 = vmatpush1.msra.mxu0 0.0
    %1031 = vmatprep.subr.mxu0 0.0
    %1032 = vmatpush1.msra.mxu0 0.0
    %1033 = vmatprep.subr.mxu0 0.0
    %1034 = vmatpush1.msra.mxu0 0.0
    %1035 = vmatprep.subr.mxu0 0.0
    %1036 = vmatpush1.msra.mxu0 0.0
    %1037 = vmatprep.subr.mxu0 0.0
    %1038 = vmatpush1.msra.mxu0 0.0
    %1039 = vmatprep.subr.mxu0 0.0
    %1040 = vmatpush1.msra.mxu0 0.0
    %1041 = vmatprep.subr.mxu0 0.0
    %1042 = vmatpush1.msra.mxu0 0.0
    %1043 = vmatprep.subr.mxu0 0.0
    %1044 = vmatpush1.msra.mxu0 0.0
    %1045 = vmatprep.subr.mxu0 0.0
    %1046 = vmatpush1.msra.mxu0 0.0
    %1047 = vmatprep.subr.mxu0 0.0
    %1048 = vmatpush1.msra.mxu0 0.0
    %1049 = vmatprep.subr.mxu0 0.0
    %1050 = vmatpush1.msra.mxu0 0.0
    %1051 = vmatprep.subr.mxu0 0.0
    %1052 = vmatpush1.msra.mxu0 0.0
    %1053 = vmatprep.subr.mxu0 0.0
    %1054 = vmatpush1.msra.mxu0 0.0
    %1055 = vmatprep.subr.mxu0 0.0
    %1056 = vmatpush1.msra.mxu0 0.0
    %1057 = vmatprep.subr.mxu0 0.0
    %1058 = vmatpush1.msra.mxu0 0.0
    %1059 = vmatprep.subr.mxu0 0.0
    %1060 = vmatpush1.msra.mxu0 0.0
    %1061 = vmatprep.subr.mxu0 0.0
    %1062 = vmatpush1.msra.mxu0 0.0
    %1063 = vmatprep.subr.mxu0 0.0
    %1064 = vmatpush1.msra.mxu0 0.0
    %1065 = vmatprep.subr.mxu0 0.0
    %1066 = vmatpush1.msra.mxu0 0.0
    %1067 = vmatprep.subr.mxu0 0.0
    %1068 = vmatpush1.msra.mxu0 0.0
    %1069 = vmatprep.subr.mxu0 0.0
    %1070 = vmatpush1.msra.mxu0 0.0
    %1071 = vmatprep.subr.mxu0 0.0
    %1072 = vmatpush1.msra.mxu0 0.0
    %1073 = vmatprep.subr.mxu0 0.0
    %1074 = vmatpush1.msra.mxu0 0.0
    %1075 = vmatprep.subr.mxu0 0.0
    %1076 = vmatpush1.msra.mxu0 0.0
    %1077 = vmatprep.mubr.f32.mxu0 0.0
    %1078 = vmatmul.mubr.f32.gmra.mrb[0].mxu0 %v1011
    %v1079 = vpop.f32.mrb[0].mxu0
    %v1080 = vadd.f32 0.0, %v1079
    %v1081 = vpop.f32.mrb[0].mxu0
    %1082 = vdwg.mxu0
    %v1084 = vsel %vm326, %v739, 0
    %v1087 = vsel %vm326, %v829, 0
    %1089 = vmatprep.subr.mxu0 0.0
    %1090 = vmatpush1.xpose.msra.mxu0 %v1087
    %1091 = vmatprep.subr.mxu0 0.0
    %1092 = vmatpush1.xpose.msra.mxu0 0.0
    %1093 = vmatprep.subr.mxu0 0.0
    %1094 = vmatpush1.xpose.msra.mxu0 0.0
    %1095 = vmatprep.subr.mxu0 0.0
    %1096 = vmatpush1.xpose.msra.mxu0 0.0
    %1097 = vmatprep.subr.mxu0 0.0
    %1098 = vmatpush1.xpose.msra.mxu0 0.0
    %1099 = vmatprep.subr.mxu0 0.0
    %1100 = vmatpush1.xpose.msra.mxu0 0.0
    %1101 = vmatprep.subr.mxu0 0.0
    %1102 = vmatpush1.xpose.msra.mxu0 0.0
    %1103 = vmatprep.subr.mxu0 0.0
    %1104 = vmatpush1.xpose.msra.mxu0 0.0
    %1105 = vmatprep.subr.mxu0 0.0
    %1106 = vmatpush1.xpose.msra.mxu0 0.0
    %1107 = vmatprep.subr.mxu0 0.0
    %1108 = vmatpush1.xpose.msra.mxu0 0.0
    %1109 = vmatprep.subr.mxu0 0.0
    %1110 = vmatpush1.xpose.msra.mxu0 0.0
    %1111 = vmatprep.subr.mxu0 0.0
    %1112 = vmatpush1.xpose.msra.mxu0 0.0
    %1113 = vmatprep.subr.mxu0 0.0
    %1114 = vmatpush1.xpose.msra.mxu0 0.0
    %1115 = vmatprep.subr.mxu0 0.0
    %1116 = vmatpush1.xpose.msra.mxu0 0.0
    %1117 = vmatprep.subr.mxu0 0.0
    %1118 = vmatpush1.xpose.msra.mxu0 0.0
    %1119 = vmatprep.subr.mxu0 0.0
    %1120 = vmatpush1.xpose.msra.mxu0 0.0
    %1121 = vmatprep.subr.mxu0 0.0
    %1122 = vmatpush1.xpose.msra.mxu0 0.0
    %1123 = vmatprep.subr.mxu0 0.0
    %1124 = vmatpush1.xpose.msra.mxu0 0.0
    %1125 = vmatprep.subr.mxu0 0.0
    %1126 = vmatpush1.xpose.msra.mxu0 0.0
    %1127 = vmatprep.subr.mxu0 0.0
    %1128 = vmatpush1.xpose.msra.mxu0 0.0
    %1129 = vmatprep.subr.mxu0 0.0
    %1130 = vmatpush1.xpose.msra.mxu0 0.0
    %1131 = vmatprep.subr.mxu0 0.0
    %1132 = vmatpush1.xpose.msra.mxu0 0.0
    %1133 = vmatprep.subr.mxu0 0.0
    %1134 = vmatpush1.xpose.msra.mxu0 0.0
    %1135 = vmatprep.subr.mxu0 0.0
    %1136 = vmatpush1.xpose.msra.mxu0 0.0
    %1137 = vmatprep.subr.mxu0 0.0
    %1138 = vmatpush1.xpose.msra.mxu0 0.0
    %1139 = vmatprep.subr.mxu0 0.0
    %1140 = vmatpush1.xpose.msra.mxu0 0.0
    %1141 = vmatprep.subr.mxu0 0.0
    %1142 = vmatpush1.xpose.msra.mxu0 0.0
    %1143 = vmatprep.subr.mxu0 0.0
    %1144 = vmatpush1.xpose.msra.mxu0 0.0
    %1145 = vmatprep.subr.mxu0 0.0
    %1146 = vmatpush1.xpose.msra.mxu0 0.0
    %1147 = vmatprep.subr.mxu0 0.0
    %1148 = vmatpush1.xpose.msra.mxu0 0.0
    %1149 = vmatprep.subr.mxu0 0.0
    %1150 = vmatpush1.xpose.msra.mxu0 0.0
    %1151 = vmatprep.subr.mxu0 0.0
    %1152 = vmatpush1.xpose.msra.mxu0 0.0
    %1153 = vmatprep.mubr.f32.mxu0 0.0
    %1154 = vmatmul.mubr.f32.gmra.mrb[0].mxu0 %v1084
    %v1155 = vpop.f32.mrb[0].mxu0
    %v1156 = vadd.f32 0.0, %v1155
    %v1157 = vpop.f32.mrb[0].mxu0
    %1158 = vdwg.mxu0
    %v1159 = vmul.f32 %v1156, 0.08006407
    %v1160 = vsel %vm404, %v1159, -inf
    %1161 = vmax.xlane.f32.xlu0 %v1160
    %v1162 = vpop.xlane.xlu0 %1161
    %v1163 = vsub.f32 %v1159, %v1162
    %v1164 = vmul.f32 %v1163, 1.442695
    %v1165 = vpow.pop %v1164
    %v1166 = vsel %vm404, %v1165, 0.0
    %1167 = vadd.xlane.f32.xlu0 %v1166
    %v1168 = vpop.xlane.xlu0 %1167
    %v1169 = vrcp.pop %v1168
    %v1170 = vmul.f32 %v1165, %v1169
    %v1172 = vsel %vm404, %v1170, 0
    %1174 = vmatprep.subr.mxu0 0.0
    %1175 = vmatpush1.msra.mxu0 %v919
    %1176 = vmatprep.subr.mxu0 0.0
    %1177 = vmatpush1.msra.mxu0 0.0
    %1178 = vmatprep.subr.mxu0 0.0
    %1179 = vmatpush1.msra.mxu0 0.0
    %1180 = vmatprep.subr.mxu0 0.0
    %1181 = vmatpush1.msra.mxu0 0.0
    %1182 = vmatprep.subr.mxu0 0.0
    %1183 = vmatpush1.msra.mxu0 0.0
    %1184 = vmatprep.subr.mxu0 0.0
    %1185 = vmatpush1.msra.mxu0 0.0
    %1186 = vmatprep.subr.mxu0 0.0
    %1187 = vmatpush1.msra.mxu0 0.0
    %1188 = vmatprep.subr.mxu0 0.0
    %1189 = vmatpush1.msra.mxu0 0.0
    %1190 = vmatprep.subr.mxu0 0.0
    %1191 = vmatpush1.msra.mxu0 0.0
    %1192 = vmatprep.subr.mxu0 0.0
    %1193 = vmatpush1.msra.mxu0 0.0
    %1194 = vmatprep.subr.mxu0 0.0
    %1195 = vmatpush1.msra.mxu0 0.0
    %1196 = vmatprep.subr.mxu0 0.0
    %1197 = vmatpush1.msra.mxu0 0.0
    %1198 = vmatprep.subr.mxu0 0.0
    %1199 = vmatpush1.msra.mxu0 0.0
    %1200 = vmatprep.subr.mxu0 0.0
    %1201 = vmatpush1.msra.mxu0 0.0
    %1202 = vmatprep.subr.mxu0 0.0
    %1203 = vmatpush1.msra.mxu0 0.0
    %1204 = vmatprep.subr.mxu0 0.0
    %1205 = vmatpush1.msra.mxu0 0.0
    %1206 = vmatprep.subr.mxu0 0.0
    %1207 = vmatpush1.msra.mxu0 0.0
    %1208 = vmatprep.subr.mxu0 0.0
    %1209 = vmatpush1.msra.mxu0 0.0
    %1210 = vmatprep.subr.mxu0 0.0
    %1211 = vmatpush1.msra.mxu0 0.0
    %1212 = vmatprep.subr.mxu0 0.0
    %1213 = vmatpush1.msra.mxu0 0.0
    %1214 = vmatprep.subr.mxu0 0.0
    %1215 = vmatpush1.msra.mxu0 0.0
    %1216 = vmatprep.subr.mxu0 0.0
    %1217 = vmatpush1.msra.mxu0 0.0
    %1218 = vmatprep.subr.mxu0 0.0
    %1219 = vmatpush1.msra.mxu0 0.0
    %1220 = vmatprep.subr.mxu0 0.0
    %1221 = vmatpush1.msra.mxu0 0.0
    %1222 = vmatprep.subr.mxu0 0.0
    %1223 = vmatpush1.msra.mxu0 0.0
    %1224 = vmatprep.subr.mxu0 0.0
    %1225 = vmatpush1.msra.mxu0 0.0
    %1226 = vmatprep.subr.mxu0 0.0
    %1227 = vmatpush1.msra.mxu0 0.0
    %1228 = vmatprep.subr.mxu0 0.0
    %1229 = vmatpush1.msra.mxu0 0.0
    %1230 = vmatprep.subr.mxu0 0.0
    %1231 = vmatpush1.msra.mxu0 0.0
    %1232 = vmatprep.subr.mxu0 0.0
    %1233 = vmatpush1.msra.mxu0 0.0
    %1234 = vmatprep.subr.mxu0 0.0
    %1235 = vmatpush1.msra.mxu0 0.0
    %1236 = vmatprep.subr.mxu0 0.0
    %1237 = vmatpush1.msra.mxu0 0.0
    %1238 = vmatprep.mubr.f32.mxu0 0.0
    %1239 = vmatmul.mubr.f32.gmra.mrb[0].mxu0 %v1172
    %v1240 = vpop.f32.mrb[0].mxu0
    %v1241 = vadd.f32 0.0, %v1240
    %v1242 = vpop.f32.mrb[0].mxu0
    %1243 = vdwg.mxu0
    %s1244 = scalar_lea.vmem %s7, 16
    %v1245 = vld [vmem:[%s1244] sm:$0xff]
    %v1246 = vld [vmem:[%s1244 + $0x8] sm:$0xff]
    %v1248 = vsel %vm326, %v1080, 0
    %v1251 = vsel %vm326, %v1241, 0
    %1253 = vmatprep.subr.mxu0 0.0
    %1254 = vmatpush1.msra.mxu0 %v1245
    %1255 = vmatprep.subr.mxu0 0.0
    %1256 = vmatpush1.msra.mxu0 %v1246
    %1257 = vmatprep.subr.mxu0 0.0
    %1258 = vmatpush1.msra.mxu0 0.0
    %1259 = vmatprep.subr.mxu0 0.0
    %1260 = vmatpush1.msra.mxu0 0.0
    %1261 = vmatprep.subr.mxu0 0.0
    %1262 = vmatpush1.msra.mxu0 0.0
    %1263 = vmatprep.subr.mxu0 0.0
    %1264 = vmatpush1.msra.mxu0 0.0
    %1265 = vmatprep.subr.mxu0 0.0
    %1266 = vmatpush1.msra.mxu0 0.0
    %1267 = vmatprep.subr.mxu0 0.0
    %1268 = vmatpush1.msra.mxu0 0.0
    %1269 = vmatprep.subr.mxu0 0.0
    %1270 = vmatpush1.msra.mxu0 0.0
    %1271 = vmatprep.subr.mxu0 0.0
    %1272 = vmatpush1.msra.mxu0 0.0
    %1273 = vmatprep.subr.mxu0 0.0
    %1274 = vmatpush1.msra.mxu0 0.0
    %1275 = vmatprep.subr.mxu0 0.0
    %1276 = vmatpush1.msra.mxu0 0.0
    %1277 = vmatprep.subr.mxu0 0.0
    %1278 = vmatpush1.msra.mxu0 0.0
    %1279 = vmatprep.subr.mxu0 0.0
    %1280 = vmatpush1.msra.mxu0 0.0
    %1281 = vmatprep.subr.mxu0 0.0
    %1282 = vmatpush1.msra.mxu0 0.0
    %1283 = vmatprep.subr.mxu0 0.0
    %1284 = vmatpush1.msra.mxu0 0.0
    %1285 = vmatprep.subr.mxu0 0.0
    %1286 = vmatpush1.msra.mxu0 0.0
    %1287 = vmatprep.subr.mxu0 0.0
    %1288 = vmatpush1.msra.mxu0 0.0
    %1289 = vmatprep.subr.mxu0 0.0
    %1290 = vmatpush1.msra.mxu0 0.0
    %1291 = vmatprep.subr.mxu0 0.0
    %1292 = vmatpush1.msra.mxu0 0.0
    %1293 = vmatprep.subr.mxu0 0.0
    %1294 = vmatpush1.msra.mxu0 0.0
    %1295 = vmatprep.subr.mxu0 0.0
    %1296 = vmatpush1.msra.mxu0 0.0
    %1297 = vmatprep.subr.mxu0 0.0
    %1298 = vmatpush1.msra.mxu0 0.0
    %1299 = vmatprep.subr.mxu0 0.0
    %1300 = vmatpush1.msra.mxu0 0.0
    %1301 = vmatprep.subr.mxu0 0.0
    %1302 = vmatpush1.msra.mxu0 0.0
    %1303 = vmatprep.subr.mxu0 0.0
    %1304 = vmatpush1.msra.mxu0 0.0
    %1305 = vmatprep.subr.mxu0 0.0
    %1306 = vmatpush1.msra.mxu0 0.0
    %1307 = vmatprep.subr.mxu0 0.0
    %1308 = vmatpush1.msra.mxu0 0.0
    %1309 = vmatprep.subr.mxu0 0.0
    %1310 = vmatpush1.msra.mxu0 0.0
    %1311 = vmatprep.subr.mxu0 0.0
    %1312 = vmatpush1.msra.mxu0 0.0
    %1313 = vmatprep.subr.mxu0 0.0
    %1314 = vmatpush1.msra.mxu0 0.0
    %1315 = vmatprep.subr.mxu0 0.0
    %1316 = vmatpush1.msra.mxu0 0.0
    %1317 = vmatprep.mubr.f32.mxu0 0.0
    %1318 = vmatmul.mubr.f32.gmra.mrb[0].mxu0 %v1248
    %v1319 = vpop.f32.mrb[0].mxu0
    %v1320 = vadd.f32 0.0, %v1319
    %v1321 = vpop.f32.mrb[0].mxu0
    %1322 = vmatprep.mubr.f32.mxu0 0.0
    %1323 = vmatmul.mubr.f32.gmra.mrb[0].mxu0 %v1251
    %v1324 = vpop.f32.mrb[0].mxu0
    %v1325 = vadd.f32 0.0, %v1324
    %v1326 = vpop.f32.mrb[0].mxu0
    %1327 = vdwg.mxu0
    %v1329 = vsel %vm326, %v486, 0
    %v1332 = vsel %vm326, %v647, 0
    %1334 = vmatprep.subr.mxu0 0.0
    %1335 = vmatpush1.msra.mxu0 %v650
    %1336 = vmatprep.subr.mxu0 0.0
    %1337 = vmatpush1.msra.mxu0 %v651
    %1338 = vmatprep.subr.mxu0 0.0
    %1339 = vmatpush1.msra.mxu0 0.0
    %1340 = vmatprep.subr.mxu0 0.0
    %1341 = vmatpush1.msra.mxu0 0.0
    %1342 = vmatprep.subr.mxu0 0.0
    %1343 = vmatpush1.msra.mxu0 0.0
    %1344 = vmatprep.subr.mxu0 0.0
    %1345 = vmatpush1.msra.mxu0 0.0
    %1346 = vmatprep.subr.mxu0 0.0
    %1347 = vmatpush1.msra.mxu0 0.0
    %1348 = vmatprep.subr.mxu0 0.0
    %1349 = vmatpush1.msra.mxu0 0.0
    %1350 = vmatprep.subr.mxu0 0.0
    %1351 = vmatpush1.msra.mxu0 0.0
    %1352 = vmatprep.subr.mxu0 0.0
    %1353 = vmatpush1.msra.mxu0 0.0
    %1354 = vmatprep.subr.mxu0 0.0
    %1355 = vmatpush1.msra.mxu0 0.0
    %1356 = vmatprep.subr.mxu0 0.0
    %1357 = vmatpush1.msra.mxu0 0.0
    %1358 = vmatprep.subr.mxu0 0.0
    %1359 = vmatpush1.msra.mxu0 0.0
    %1360 = vmatprep.subr.mxu0 0.0
    %1361 = vmatpush1.msra.mxu0 0.0
    %1362 = vmatprep.subr.mxu0 0.0
    %1363 = vmatpush1.msra.mxu0 0.0
    %1364 = vmatprep.subr.mxu0 0.0
    %1365 = vmatpush1.msra.mxu0 0.0
    %1366 = vmatprep.subr.mxu0 0.0
    %1367 = vmatpush1.msra.mxu0 0.0
    %1368 = vmatprep.subr.mxu0 0.0
    %1369 = vmatpush1.msra.mxu0 0.0
    %1370 = vmatprep.subr.mxu0 0.0
    %1371 = vmatpush1.msra.mxu0 0.0
    %1372 = vmatprep.subr.mxu0 0.0
    %1373 = vmatpush1.msra.mxu0 0.0
    %1374 = vmatprep.subr.mxu0 0.0
    %1375 = vmatpush1.msra.mxu0 0.0
    %1376 = vmatprep.subr.mxu0 0.0
    %1377 = vmatpush1.msra.mxu0 0.0
    %1378 = vmatprep.subr.mxu0 0.0
    %1379 = vmatpush1.msra.mxu0 0.0
    %1380 = vmatprep.subr.mxu0 0.0
    %1381 = vmatpush1.msra.mxu0 0.0
    %1382 = vmatprep.subr.mxu0 0.0
    %1383 = vmatpush1.msra.mxu0 0.0
    %1384 = vmatprep.subr.mxu0 0.0
    %1385 = vmatpush1.msra.mxu0 0.0
    %1386 = vmatprep.subr.mxu0 0.0
    %1387 = vmatpush1.msra.mxu0 0.0
    %1388 = vmatprep.subr.mxu0 0.0
    %1389 = vmatpush1.msra.mxu0 0.0
    %1390 = vmatprep.subr.mxu0 0.0
    %1391 = vmatpush1.msra.mxu0 0.0
    %1392 = vmatprep.subr.mxu0 0.0
    %1393 = vmatpush1.msra.mxu0 0.0
    %1394 = vmatprep.subr.mxu0 0.0
    %1395 = vmatpush1.msra.mxu0 0.0
    %1396 = vmatprep.subr.mxu0 0.0
    %1397 = vmatpush1.msra.mxu0 0.0
    %1398 = vmatprep.mubr.f32.mxu0 0.0
    %1399 = vmatmul.mubr.f32.gmra.mrb[0].mxu0 %v1329
    %v1400 = vpop.f32.mrb[0].mxu0
    %v1401 = vadd.f32 %v1320, %v1400
    %v1402 = vpop.f32.mrb[0].mxu0
    %1403 = vmatprep.mubr.f32.mxu0 0.0
    %1404 = vmatmul.mubr.f32.gmra.mrb[0].mxu0 %v1332
    %v1405 = vpop.f32.mrb[0].mxu0
    %v1406 = vadd.f32 %v1325, %v1405
    %v1407 = vpop.f32.mrb[0].mxu0
    %1408 = vdwg.mxu0
    %s1409 = scalar_lea.vmem %s1, 96
    %v1410 = vld [vmem:[%s1409] sm:$0xff]
    %v1411 = vld [vmem:[%s1409 + $0x8] sm:$0xff]
    %v1412 = vld [vmem:[%s1409 + $0x10] sm:$0xff]
    %v1413 = vld [vmem:[%s1409 + $0x18] sm:$0xff]
    %v1414 = vld [vmem:[%s1409 + $0x20] sm:$0xff]
    %v1415 = vld [vmem:[%s1409 + $0x28] sm:$0xff]
    %s1416 = scalar_lea.vmem %s2, 2
    %v1417 = vld [vmem:[%s1416] sm:$0x1]
    %v1419 = vlaneseq
    %v1420 = vshrl.u32 %v1419, 7
    %v1421 = vsub.s32 0, %v1420
    %v1422 = vrot.slane %v1417, %v1421
    %1424 = vmatprep.subr.mxu0 0.0
    %1425 = vmatpush1.msra.mxu0 %v1410
    %1426 = vmatprep.subr.mxu0 0.0
    %1427 = vmatpush1.msra.mxu0 %v1411
    %1428 = vmatprep.subr.mxu0 0.0
    %1429 = vmatpush1.msra.mxu0 %v1412
    %1430 = vmatprep.subr.mxu0 0.0
    %1431 = vmatpush1.msra.mxu0 %v1413
    %1432 = vmatprep.subr.mxu0 0.0
    %1433 = vmatpush1.msra.mxu0 %v1414
    %1434 = vmatprep.subr.mxu0 0.0
    %1435 = vmatpush1.msra.mxu0 %v1415
    %1436 = vmatprep.subr.mxu0 0.0
    %1437 = vmatpush1.msra.mxu0 0.0
    %1438 = vmatprep.subr.mxu0 0.0
    %1439 = vmatpush1.msra.mxu0 0.0
    %1440 = vmatprep.subr.mxu0 0.0
    %1441 = vmatpush1.msra.mxu0 0.0
    %1442 = vmatprep.subr.mxu0 0.0
    %1443 = vmatpush1.msra.mxu0 0.0
    %1444 = vmatprep.subr.mxu0 0.0
    %1445 = vmatpush1.msra.mxu0 0.0
    %1446 = vmatprep.subr.mxu0 0.0
    %1447 = vmatpush1.msra.mxu0 0.0
    %1448 = vmatprep.subr.mxu0 0.0
    %1449 = vmatpush1.msra.mxu0 0.0
    %1450 = vmatprep.subr.mxu0 0.0
    %1451 = vmatpush1.msra.mxu0 0.0
    %1452 = vmatprep.subr.mxu0 0.0
    %1453 = vmatpush1.msra.mxu0 0.0
    %1454 = vmatprep.subr.mxu0 0.0
    %1455 = vmatpush1.msra.mxu0 0.0
    %1456 = vmatprep.subr.mxu0 0.0
    %1457 = vmatpush1.msra.mxu0 0.0
    %1458 = vmatprep.subr.mxu0 0.0
    %1459 = vmatpush1.msra.mxu0 0.0
    %1460 = vmatprep.subr.mxu0 0.0
    %1461 = vmatpush1.msra.mxu0 0.0
    %1462 = vmatprep.subr.mxu0 0.0
    %1463 = vmatpush1.msra.mxu0 0.0
    %1464 = vmatprep.subr.mxu0 0.0
    %1465 = vmatpush1.msra.mxu0 0.0
    %1466 = vmatprep.subr.mxu0 0.0
    %1467 = vmatpush1.msra.mxu0 0.0
    %1468 = vmatprep.subr.mxu0 0.0
    %1469 = vmatpush1.msra.mxu0 0.0
    %1470 = vmatprep.subr.mxu0 0.0
    %1471 = vmatpush1.msra.mxu0 0.0
    %1472 = vmatprep.subr.mxu0 0.0
    %1473 = vmatpush1.msra.mxu0 0.0
    %1474 = vmatprep.subr.mxu0 0.0
    %1475 = vmatpush1.msra.mxu0 0.0
    %1476 = vmatprep.subr.mxu0 0.0
    %1477 = vmatpush1.msra.mxu0 0.0
    %1478 = vmatprep.subr.mxu0 0.0
    %1479 = vmatpush1.msra.mxu0 0.0
    %1480 = vmatprep.subr.mxu0 0.0
    %1481 = vmatpush1.msra.mxu0 0.0
    %1482 = vmatprep.subr.mxu0 0.0
    %1483 = vmatpush1.msra.mxu0 0.0
    %1484 = vmatprep.subr.mxu0 0.0
    %1485 = vmatpush1.msra.mxu0 0.0
    %1486 = vmatprep.subr.mxu0 0.0
    %1487 = vmatpush1.msra.mxu0 0.0
    %1488 = vmatprep.mubr.f32.mxu0 0.0
    %1489 = vmatmul.mubr.f32.gmra.mrb[0].mxu0 %v70
    %v1490 = vpop.f32.mrb[0].mxu0
    %v1491 = vadd.f32 %v1422, %v1490
    %v1492 = vpop.f32.mrb[0].mxu0
    %1493 = vmatprep.mubr.f32.mxu0 0.0
    %1494 = vmatmul.mubr.f32.gmra.mrb[0].mxu0 %v73
    %v1495 = vpop.f32.mrb[0].mxu0
    %v1496 = vadd.f32 %v1422, %v1495
    %v1497 = vpop.f32.mrb[0].mxu0
    %1498 = vdwg.mxu0
    %s1499 = scalar_lea.vmem %s3, 96
    %v1500 = vld [vmem:[%s1499] sm:$0xff]
    %v1501 = vld [vmem:[%s1499 + $0x8] sm:$0xff]
    %v1502 = vld [vmem:[%s1499 + $0x10] sm:$0xff]
    %v1503 = vld [vmem:[%s1499 + $0x18] sm:$0xff]
    %v1504 = vld [vmem:[%s1499 + $0x20] sm:$0xff]
    %v1505 = vld [vmem:[%s1499 + $0x28] sm:$0xff]
    %s1506 = scalar_lea.vmem %s4, 2
    %v1507 = vld [vmem:[%s1506] sm:$0x1]
    %v1509 = vlaneseq
    %v1510 = vshrl.u32 %v1509, 7
    %v1511 = vsub.s32 0, %v1510
    %v1512 = vrot.slane %v1507, %v1511
    %1514 = vmatprep.subr.mxu0 0.0
    %1515 = vmatpush1.msra.mxu0 %v1500
    %1516 = vmatprep.subr.mxu0 0.0
    %1517 = vmatpush1.msra.mxu0 %v1501
    %1518 = vmatprep.subr.mxu0 0.0
    %1519 = vmatpush1.msra.mxu0 %v1502
    %1520 = vmatprep.subr.mxu0 0.0
    %1521 = vmatpush1.msra.mxu0 %v1503
    %1522 = vmatprep.subr.mxu0 0.0
    %1523 = vmatpush1.msra.mxu0 %v1504
    %1524 = vmatprep.subr.mxu0 0.0
    %1525 = vmatpush1.msra.mxu0 %v1505
    %1526 = vmatprep.subr.mxu0 0.0
    %1527 = vmatpush1.msra.mxu0 0.0
    %1528 = vmatprep.subr.mxu0 0.0
    %1529 = vmatpush1.msra.mxu0 0.0
    %1530 = vmatprep.subr.mxu0 0.0
    %1531 = vmatpush1.msra.mxu0 0.0
    %1532 = vmatprep.subr.mxu0 0.0
    %1533 = vmatpush1.msra.mxu0 0.0
    %1534 = vmatprep.subr.mxu0 0.0
    %1535 = vmatpush1.msra.mxu0 0.0
    %1536 = vmatprep.subr.mxu0 0.0
    %1537 = vmatpush1.msra.mxu0 0.0
    %1538 = vmatprep.subr.mxu0 0.0
    %1539 = vmatpush1.msra.mxu0 0.0
    %1540 = vmatprep.subr.mxu0 0.0
    %1541 = vmatpush1.msra.mxu0 0.0
    %1542 = vmatprep.subr.mxu0 0.0
    %1543 = vmatpush1.msra.mxu0 0.0
    %1544 = vmatprep.subr.mxu0 0.0
    %1545 = vmatpush1.msra.mxu0 0.0
    %1546 = vmatprep.subr.mxu0 0.0
    %1547 = vmatpush1.msra.mxu0 0.0
    %1548 = vmatprep.subr.mxu0 0.0
    %1549 = vmatpush1.msra.mxu0 0.0
    %1550 = vmatprep.subr.mxu0 0.0
    %1551 = vmatpush1.msra.mxu0 0.0
    %1552 = vmatprep.subr.mxu0 0.0
    %1553 = vmatpush1.msra.mxu0 0.0
    %1554 = vmatprep.subr.mxu0 0.0
    %1555 = vmatpush1.msra.mxu0 0.0
    %1556 = vmatprep.subr.mxu0 0.0
    %1557 = vmatpush1.msra.mxu0 0.0
    %1558 = vmatprep.subr.mxu0 0.0
    %1559 = vmatpush1.msra.mxu0 0.0
    %1560 = vmatprep.subr.mxu0 0.0
    %1561 = vmatpush1.msra.mxu0 0.0
    %1562 = vmatprep.subr.mxu0 0.0
    %1563 = vmatpush1.msra.mxu0 0.0
    %1564 = vmatprep.subr.mxu0 0.0
    %1565 = vmatpush1.msra.mxu0 0.0
    %1566 = vmatprep.subr.mxu0 0.0
    %1567 = vmatpush1.msra.mxu0 0.0
    %1568 = vmatprep.subr.mxu0 0.0
    %1569 = vmatpush1.msra.mxu0 0.0
    %1570 = vmatprep.subr.mxu0 0.0
    %1571 = vmatpush1.msra.mxu0 0.0
    %1572 = vmatprep.subr.mxu0 0.0
    %1573 = vmatpush1.msra.mxu0 0.0
    %1574 = vmatprep.subr.mxu0 0.0
    %1575 = vmatpush1.msra.mxu0 0.0
    %1576 = vmatprep.subr.mxu0 0.0
    %1577 = vmatpush1.msra.mxu0 0.0
    %1578 = vmatprep.mubr.f32.mxu0 0.0
    %1579 = vmatmul.mubr.f32.gmra.mrb[0].mxu0 %v70
    %v1580 = vpop.f32.mrb[0].mxu0
    %v1581 = vadd.f32 %v1512, %v1580
    %v1582 = vpop.f32.mrb[0].mxu0
    %1583 = vmatprep.mubr.f32.mxu0 0.0
    %1584 = vmatmul.mubr.f32.gmra.mrb[0].mxu0 %v73
    %v1585 = vpop.f32.mrb[0].mxu0
    %v1586 = vadd.f32 %v1512, %v1585
    %v1587 = vpop.f32.mrb[0].mxu0
    %1588 = vdwg.mxu0
    %s1589 = scalar_lea.vmem %s5, 96
    %v1590 = vld [vmem:[%s1589] sm:$0xff]
    %v1591 = vld [vmem:[%s1589 + $0x8] sm:$0xff]
    %v1592 = vld [vmem:[%s1589 + $0x10] sm:$0xff]
    %v1593 = vld [vmem:[%s1589 + $0x18] sm:$0xff]
    %v1594 = vld [vmem:[%s1589 + $0x20] sm:$0xff]
    %v1595 = vld [vmem:[%s1589 + $0x28] sm:$0xff]
    %s1596 = scalar_lea.vmem %s6, 2
    %v1597 = vld [vmem:[%s1596] sm:$0x1]
    %v1599 = vlaneseq
    %v1600 = vshrl.u32 %v1599, 7
    %v1601 = vsub.s32 0, %v1600
    %v1602 = vrot.slane %v1597, %v1601
    %1604 = vmatprep.subr.mxu0 0.0
    %1605 = vmatpush1.msra.mxu0 %v1590
    %1606 = vmatprep.subr.mxu0 0.0
    %1607 = vmatpush1.msra.mxu0 %v1591
    %1608 = vmatprep.subr.mxu0 0.0
    %1609 = vmatpush1.msra.mxu0 %v1592
    %1610 = vmatprep.subr.mxu0 0.0
    %1611 = vmatpush1.msra.mxu0 %v1593
    %1612 = vmatprep.subr.mxu0 0.0
    %1613 = vmatpush1.msra.mxu0 %v1594
    %1614 = vmatprep.subr.mxu0 0.0
    %1615 = vmatpush1.msra.mxu0 %v1595
    %1616 = vmatprep.subr.mxu0 0.0
    %1617 = vmatpush1.msra.mxu0 0.0
    %1618 = vmatprep.subr.mxu0 0.0
    %1619 = vmatpush1.msra.mxu0 0.0
    %1620 = vmatprep.subr.mxu0 0.0
    %1621 = vmatpush1.msra.mxu0 0.0
    %1622 = vmatprep.subr.mxu0 0.0
    %1623 = vmatpush1.msra.mxu0 0.0
    %1624 = vmatprep.subr.mxu0 0.0
    %1625 = vmatpush1.msra.mxu0 0.0
    %1626 = vmatprep.subr.mxu0 0.0
    %1627 = vmatpush1.msra.mxu0 0.0
    %1628 = vmatprep.subr.mxu0 0.0
    %1629 = vmatpush1.msra.mxu0 0.0
    %1630 = vmatprep.subr.mxu0 0.0
    %1631 = vmatpush1.msra.mxu0 0.0
    %1632 = vmatprep.subr.mxu0 0.0
    %1633 = vmatpush1.msra.mxu0 0.0
    %1634 = vmatprep.subr.mxu0 0.0
    %1635 = vmatpush1.msra.mxu0 0.0
    %1636 = vmatprep.subr.mxu0 0.0
    %1637 = vmatpush1.msra.mxu0 0.0
    %1638 = vmatprep.subr.mxu0 0.0
    %1639 = vmatpush1.msra.mxu0 0.0
    %1640 = vmatprep.subr.mxu0 0.0
    %1641 = vmatpush1.msra.mxu0 0.0
    %1642 = vmatprep.subr.mxu0 0.0
    %1643 = vmatpush1.msra.mxu0 0.0
    %1644 = vmatprep.subr.mxu0 0.0
    %1645 = vmatpush1.msra.mxu0 0.0
    %1646 = vmatprep.subr.mxu0 0.0
    %1647 = vmatpush1.msra.mxu0 0.0
    %1648 = vmatprep.subr.mxu0 0.0
    %1649 = vmatpush1.msra.mxu0 0.0
    %1650 = vmatprep.subr.mxu0 0.0
    %1651 = vmatpush1.msra.mxu0 0.0
    %1652 = vmatprep.subr.mxu0 0.0
    %1653 = vmatpush1.msra.mxu0 0.0
    %1654 = vmatprep.subr.mxu0 0.0
    %1655 = vmatpush1.msra.mxu0 0.0
    %1656 = vmatprep.subr.mxu0 0.0
    %1657 = vmatpush1.msra.mxu0 0.0
    %1658 = vmatprep.subr.mxu0 0.0
    %1659 = vmatpush1.msra.mxu0 0.0
    %1660 = vmatprep.subr.mxu0 0.0
    %1661 = vmatpush1.msra.mxu0 0.0
    %1662 = vmatprep.subr.mxu0 0.0
    %1663 = vmatpush1.msra.mxu0 0.0
    %1664 = vmatprep.subr.mxu0 0.0
    %1665 = vmatpush1.msra.mxu0 0.0
    %1666 = vmatprep.subr.mxu0 0.0
    %1667 = vmatpush1.msra.mxu0 0.0
    %1668 = vmatprep.mubr.f32.mxu0 0.0
    %1669 = vmatmul.mubr.f32.gmra.mrb[0].mxu0 %v70
    %v1670 = vpop.f32.mrb[0].mxu0
    %v1671 = vadd.f32 %v1602, %v1670
    %v1672 = vpop.f32.mrb[0].mxu0
    %1673 = vmatprep.mubr.f32.mxu0 0.0
    %1674 = vmatmul.mubr.f32.gmra.mrb[0].mxu0 %v73
    %v1675 = vpop.f32.mrb[0].mxu0
    %v1676 = vadd.f32 %v1602, %v1675
    %v1677 = vpop.f32.mrb[0].mxu0
    %1678 = vdwg.mxu0
    %v1680 = vsel %vm326, %v1491, 0
    %v1683 = vsel %vm326, %v1581, 0
    %1685 = vmatprep.subr.mxu0 0.0
    %1686 = vmatpush1.xpose.msra.mxu0 %v1683
    %1687 = vmatprep.subr.mxu0 0.0
    %1688 = vmatpush1.xpose.msra.mxu0 0.0
    %1689 = vmatprep.subr.mxu0 0.0
    %1690 = vmatpush1.xpose.msra.mxu0 0.0
    %1691 = vmatprep.subr.mxu0 0.0
    %1692 = vmatpush1.xpose.msra.mxu0 0.0
    %1693 = vmatprep.subr.mxu0 0.0
    %1694 = vmatpush1.xpose.msra.mxu0 0.0
    %1695 = vmatprep.subr.mxu0 0.0
    %1696 = vmatpush1.xpose.msra.mxu0 0.0
    %1697 = vmatprep.subr.mxu0 0.0
    %1698 = vmatpush1.xpose.msra.mxu0 0.0
    %1699 = vmatprep.subr.mxu0 0.0
    %1700 = vmatpush1.xpose.msra.mxu0 0.0
    %1701 = vmatprep.subr.mxu0 0.0
    %1702 = vmatpush1.xpose.msra.mxu0 0.0
    %1703 = vmatprep.subr.mxu0 0.0
    %1704 = vmatpush1.xpose.msra.mxu0 0.0
    %1705 = vmatprep.subr.mxu0 0.0
    %1706 = vmatpush1.xpose.msra.mxu0 0.0
    %1707 = vmatprep.subr.mxu0 0.0
    %1708 = vmatpush1.xpose.msra.mxu0 0.0
    %1709 = vmatprep.subr.mxu0 0.0
    %1710 = vmatpush1.xpose.msra.mxu0 0.0
    %1711 = vmatprep.subr.mxu0 0.0
    %1712 = vmatpush1.xpose.msra.mxu0 0.0
    %1713 = vmatprep.subr.mxu0 0.0
    %1714 = vmatpush1.xpose.msra.mxu0 0.0
    %1715 = vmatprep.subr.mxu0 0.0
    %1716 = vmatpush1.xpose.msra.mxu0 0.0
    %1717 = vmatprep.subr.mxu0 0.0
    %1718 = vmatpush1.xpose.msra.mxu0 0.0
    %1719 = vmatprep.subr.mxu0 0.0
    %1720 = vmatpush1.xpose.msra.mxu0 0.0
    %1721 = vmatprep.subr.mxu0 0.0
    %1722 = vmatpush1.xpose.msra.mxu0 0.0
    %1723 = vmatprep.subr.mxu0 0.0
    %1724 = vmatpush1.xpose.msra.mxu0 0.0
    %1725 = vmatprep.subr.mxu0 0.0
    %1726 = vmatpush1.xpose.msra.mxu0 0.0
    %1727 = vmatprep.subr.mxu0 0.0
    %1728 = vmatpush1.xpose.msra.mxu0 0.0
    %1729 = vmatprep.subr.mxu0 0.0
    %1730 = vmatpush1.xpose.msra.mxu0 0.0
    %1731 = vmatprep.subr.mxu0 0.0
    %1732 = vmatpush1.xpose.msra.mxu0 0.0
    %1733 = vmatprep.subr.mxu0 0.0
    %1734 = vmatpush1.xpose.msra.mxu0 0.0
    %1735 = vmatprep.subr.mxu0 0.0
    %1736 = vmatpush1.xpose.msra.mxu0 0.0
    %1737 = vmatprep.subr.mxu0 0.0
    %1738 = vmatpush1.xpose.msra.mxu0 0.0
    %1739 = vmatprep.subr.mxu0 0.0
    %1740 = vmatpush1.xpose.msra.mxu0 0.0
    %1741 = vmatprep.subr.mxu0 0.0
    %1742 = vmatpush1.xpose.msra.mxu0 0.0
    %1743 = vmatprep.subr.mxu0 0.0
    %1744 = vmatpush1.xpose.msra.mxu0 0.0
    %1745 = vmatprep.subr.mxu0 0.0
    %1746 = vmatpush1.xpose.msra.mxu0 0.0
    %1747 = vmatprep.subr.mxu0 0.0
    %1748 = vmatpush1.xpose.msra.mxu0 0.0
    %1749 = vmatprep.mubr.f32.mxu0 0.0
    %1750 = vmatmul.mubr.f32.gmra.mrb[0].mxu0 %v1680
    %v1751 = vpop.f32.mrb[0].mxu0
    %v1752 = vadd.f32 0.0, %v1751
    %v1753 = vpop.f32.mrb[0].mxu0
    %1754 = vdwg.mxu0
    %v1755 = vmul.f32 %v1752, 0.08006407
    %v1756 = vsel %vm404, %v1755, -inf
    %1757 = vmax.xlane.f32.xlu0 %v1756
    %v1758 = vpop.xlane.xlu0 %1757
    %v1759 = vsub.f32 %v1755, %v1758
    %v1760 = vmul.f32 %v1759, 1.442695
    %v1761 = vpow.pop %v1760
    %v1762 = vsel %vm404, %v1761, 0.0
    %1763 = vadd.xlane.f32.xlu0 %v1762
    %v1764 = vpop.xlane.xlu0 %1763
    %v1765 = vrcp.pop %v1764
    %v1766 = vmul.f32 %v1761, %v1765
    %v1768 = vsel %vm404, %v1766, 0
    %1770 = vmatprep.subr.mxu0 0.0
    %1771 = vmatpush1.msra.mxu0 %v1671
    %1772 = vmatprep.subr.mxu0 0.0
    %1773 = vmatpush1.msra.mxu0 0.0
    %1774 = vmatprep.subr.mxu0 0.0
    %1775 = vmatpush1.msra.mxu0 0.0
    %1776 = vmatprep.subr.mxu0 0.0
    %1777 = vmatpush1.msra.mxu0 0.0
    %1778 = vmatprep.subr.mxu0 0.0
    %1779 = vmatpush1.msra.mxu0 0.0
    %1780 = vmatprep.subr.mxu0 0.0
    %1781 = vmatpush1.msra.mxu0 0.0
    %1782 = vmatprep.subr.mxu0 0.0
    %1783 = vmatpush1.msra.mxu0 0.0
    %1784 = vmatprep.subr.mxu0 0.0
    %1785 = vmatpush1.msra.mxu0 0.0
    %1786 = vmatprep.subr.mxu0 0.0
    %1787 = vmatpush1.msra.mxu0 0.0
    %1788 = vmatprep.subr.mxu0 0.0
    %1789 = vmatpush1.msra.mxu0 0.0
    %1790 = vmatprep.subr.mxu0 0.0
    %1791 = vmatpush1.msra.mxu0 0.0
    %1792 = vmatprep.subr.mxu0 0.0
    %1793 = vmatpush1.msra.mxu0 0.0
    %1794 = vmatprep.subr.mxu0 0.0
    %1795 = vmatpush1.msra.mxu0 0.0
    %1796 = vmatprep.subr.mxu0 0.0
    %1797 = vmatpush1.msra.mxu0 0.0
    %1798 = vmatprep.subr.mxu0 0.0
    %1799 = vmatpush1.msra.mxu0 0.0
    %1800 = vmatprep.subr.mxu0 0.0
    %1801 = vmatpush1.msra.mxu0 0.0
    %1802 = vmatprep.subr.mxu0 0.0
    %1803 = vmatpush1.msra.mxu0 0.0
    %1804 = vmatprep.subr.mxu0 0.0
    %1805 = vmatpush1.msra.mxu0 0.0
    %1806 = vmatprep.subr.mxu0 0.0
    %1807 = vmatpush1.msra.mxu0 0.0
    %1808 = vmatprep.subr.mxu0 0.0
    %1809 = vmatpush1.msra.mxu0 0.0
    %1810 = vmatprep.subr.mxu0 0.0
    %1811 = vmatpush1.msra.mxu0 0.0
    %1812 = vmatprep.subr.mxu0 0.0
    %1813 = vmatpush1.msra.mxu0 0.0
    %1814 = vmatprep.subr.mxu0 0.0
    %1815 = vmatpush1.msra.mxu0 0.0
    %1816 = vmatprep.subr.mxu0 0.0
    %1817 = vmatpush1.msra.mxu0 0.0
    %1818 = vmatprep.subr.mxu0 0.0
    %1819 = vmatpush1.msra.mxu0 0.0
    %1820 = vmatprep.subr.mxu0 0.0
    %1821 = vmatpush1.msra.mxu0 0.0
    %1822 = vmatprep.subr.mxu0 0.0
    %1823 = vmatpush1.msra.mxu0 0.0
    %1824 = vmatprep.subr.mxu0 0.0
    %1825 = vmatpush1.msra.mxu0 0.0
    %1826 = vmatprep.subr.mxu0 0.0
    %1827 = vmatpush1.msra.mxu0 0.0
    %1828 = vmatprep.subr.mxu0 0.0
    %1829 = vmatpush1.msra.mxu0 0.0
    %1830 = vmatprep.subr.mxu0 0.0
    %1831 = vmatpush1.msra.mxu0 0.0
    %1832 = vmatprep.subr.mxu0 0.0
    %1833 = vmatpush1.msra.mxu0 0.0
    %1834 = vmatprep.mubr.f32.mxu0 0.0
    %1835 = vmatmul.mubr.f32.gmra.mrb[0].mxu0 %v1768
    %v1836 = vpop.f32.mrb[0].mxu0
    %v1837 = vadd.f32 0.0, %v1836
    %v1838 = vpop.f32.mrb[0].mxu0
    %1839 = vdwg.mxu0
    %v1841 = vsel %vm326, %v1496, 0
    %v1844 = vsel %vm326, %v1586, 0
    %1846 = vmatprep.subr.mxu0 0.0
    %1847 = vmatpush1.xpose.msra.mxu0 %v1844
    %1848 = vmatprep.subr.mxu0 0.0
    %1849 = vmatpush1.xpose.msra.mxu0 0.0
    %1850 = vmatprep.subr.mxu0 0.0
    %1851 = vmatpush1.xpose.msra.mxu0 0.0
    %1852 = vmatprep.subr.mxu0 0.0
    %1853 = vmatpush1.xpose.msra.mxu0 0.0
    %1854 = vmatprep.subr.mxu0 0.0
    %1855 = vmatpush1.xpose.msra.mxu0 0.0
    %1856 = vmatprep.subr.mxu0 0.0
    %1857 = vmatpush1.xpose.msra.mxu0 0.0
    %1858 = vmatprep.subr.mxu0 0.0
    %1859 = vmatpush1.xpose.msra.mxu0 0.0
    %1860 = vmatprep.subr.mxu0 0.0
    %1861 = vmatpush1.xpose.msra.mxu0 0.0
    %1862 = vmatprep.subr.mxu0 0.0
    %1863 = vmatpush1.xpose.msra.mxu0 0.0
    %1864 = vmatprep.subr.mxu0 0.0
    %1865 = vmatpush1.xpose.msra.mxu0 0.0
    %1866 = vmatprep.subr.mxu0 0.0
    %1867 = vmatpush1.xpose.msra.mxu0 0.0
    %1868 = vmatprep.subr.mxu0 0.0
    %1869 = vmatpush1.xpose.msra.mxu0 0.0
    %1870 = vmatprep.subr.mxu0 0.0
    %1871 = vmatpush1.xpose.msra.mxu0 0.0
    %1872 = vmatprep.subr.mxu0 0.0
    %1873 = vmatpush1.xpose.msra.mxu0 0.0
    %1874 = vmatprep.subr.mxu0 0.0
    %1875 = vmatpush1.xpose.msra.mxu0 0.0
    %1876 = vmatprep.subr.mxu0 0.0
    %1877 = vmatpush1.xpose.msra.mxu0 0.0
    %1878 = vmatprep.subr.mxu0 0.0
    %1879 = vmatpush1.xpose.msra.mxu0 0.0
    %1880 = vmatprep.subr.mxu0 0.0
    %1881 = vmatpush1.xpose.msra.mxu0 0.0
    %1882 = vmatprep.subr.mxu0 0.0
    %1883 = vmatpush1.xpose.msra.mxu0 0.0
    %1884 = vmatprep.subr.mxu0 0.0
    %1885 = vmatpush1.xpose.msra.mxu0 0.0
    %1886 = vmatprep.subr.mxu0 0.0
    %1887 = vmatpush1.xpose.msra.mxu0 0.0
    %1888 = vmatprep.subr.mxu0 0.0
    %1889 = vmatpush1.xpose.msra.mxu0 0.0
    %1890 = vmatprep.subr.mxu0 0.0
    %1891 = vmatpush1.xpose.msra.mxu0 0.0
    %1892 = vmatprep.subr.mxu0 0.0
    %1893 = vmatpush1.xpose.msra.mxu0 0.0
    %1894 = vmatprep.subr.mxu0 0.0
    %1895 = vmatpush1.xpose.msra.mxu0 0.0
    %1896 = vmatprep.subr.mxu0 0.0
    %1897 = vmatpush1.xpose.msra.mxu0 0.0
    %1898 = vmatprep.subr.mxu0 0.0
    %1899 = vmatpush1.xpose.msra.mxu0 0.0
    %1900 = vmatprep.subr.mxu0 0.0
    %1901 = vmatpush1.xpose.msra.mxu0 0.0
    %1902 = vmatprep.subr.mxu0 0.0
    %1903 = vmatpush1.xpose.msra.mxu0 0.0
    %1904 = vmatprep.subr.mxu0 0.0
    %1905 = vmatpush1.xpose.msra.mxu0 0.0
    %1906 = vmatprep.subr.mxu0 0.0
    %1907 = vmatpush1.xpose.msra.mxu0 0.0
    %1908 = vmatprep.subr.mxu0 0.0
    %1909 = vmatpush1.xpose.msra.mxu0 0.0
    %1910 = vmatprep.mubr.f32.mxu0 0.0
    %1911 = vmatmul.mubr.f32.gmra.mrb[0].mxu0 %v1841
    %v1912 = vpop.f32.mrb[0].mxu0
    %v1913 = vadd.f32 0.0, %v1912
    %v1914 = vpop.f32.mrb[0].mxu0
    %1915 = vdwg.mxu0
    %v1916 = vmul.f32 %v1913, 0.08006407
    %v1917 = vsel %vm404, %v1916, -inf
    %1918 = vmax.xlane.f32.xlu0 %v1917
    %v1919 = vpop.xlane.xlu0 %1918
    %v1920 = vsub.f32 %v1916, %v1919
    %v1921 = vmul.f32 %v1920, 1.442695
    %v1922 = vpow.pop %v1921
    %v1923 = vsel %vm404, %v1922, 0.0
    %1924 = vadd.xlane.f32.xlu0 %v1923
    %v1925 = vpop.xlane.xlu0 %1924
    %v1926 = vrcp.pop %v1925
    %v1927 = vmul.f32 %v1922, %v1926
    %v1929 = vsel %vm404, %v1927, 0
    %1931 = vmatprep.subr.mxu0 0.0
    %1932 = vmatpush1.msra.mxu0 %v1676
    %1933 = vmatprep.subr.mxu0 0.0
    %1934 = vmatpush1.msra.mxu0 0.0
    %1935 = vmatprep.subr.mxu0 0.0
    %1936 = vmatpush1.msra.mxu0 0.0
    %1937 = vmatprep.subr.mxu0 0.0
    %1938 = vmatpush1.msra.mxu0 0.0
    %1939 = vmatprep.subr.mxu0 0.0
    %1940 = vmatpush1.msra.mxu0 0.0
    %1941 = vmatprep.subr.mxu0 0.0
    %1942 = vmatpush1.msra.mxu0 0.0
    %1943 = vmatprep.subr.mxu0 0.0
    %1944 = vmatpush1.msra.mxu0 0.0
    %1945 = vmatprep.subr.mxu0 0.0
    %1946 = vmatpush1.msra.mxu0 0.0
    %1947 = vmatprep.subr.mxu0 0.0
    %1948 = vmatpush1.msra.mxu0 0.0
    %1949 = vmatprep.subr.mxu0 0.0
    %1950 = vmatpush1.msra.mxu0 0.0
    %1951 = vmatprep.subr.mxu0 0.0
    %1952 = vmatpush1.msra.mxu0 0.0
    %1953 = vmatprep.subr.mxu0 0.0
    %1954 = vmatpush1.msra.mxu0 0.0
    %1955 = vmatprep.subr.mxu0 0.0
    %1956 = vmatpush1.msra.mxu0 0.0
    %1957 = vmatprep.subr.mxu0 0.0
    %1958 = vmatpush1.msra.mxu0 0.0
    %1959 = vmatprep.subr.mxu0 0.0
    %1960 = vmatpush1.msra.mxu0 0.0
    %1961 = vmatprep.subr.mxu0 0.0
    %1962 = vmatpush1.msra.mxu0 0.0
    %1963 = vmatprep.subr.mxu0 0.0
    %1964 = vmatpush1.msra.mxu0 0.0
    %1965 = vmatprep.subr.mxu0 0.0
    %1966 = vmatpush1.msra.mxu0 0.0
    %1967 = vmatprep.subr.mxu0 0.0
    %1968 = vmatpush1.msra.mxu0 0.0
    %1969 = vmatprep.subr.mxu0 0.0
    %1970 = vmatpush1.msra.mxu0 0.0
    %1971 = vmatprep.subr.mxu0 0.0
    %1972 = vmatpush1.msra.mxu0 0.0
    %1973 = vmatprep.subr.mxu0 0.0
    %1974 = vmatpush1.msra.mxu0 0.0
    %1975 = vmatprep.subr.mxu0 0.0
    %1976 = vmatpush1.msra.mxu0 0.0
    %1977 = vmatprep.subr.mxu0 0.0
    %1978 = vmatpush1.msra.mxu0 0.0
    %1979 = vmatprep.subr.mxu0 0.0
    %1980 = vmatpush1.msra.mxu0 0.0
    %1981 = vmatprep.subr.mxu0 0.0
    %1982 = vmatpush1.msra.mxu0 0.0
    %1983 = vmatprep.subr.mxu0 0.0
    %1984 = vmatpush1.msra.mxu0 0.0
    %1985 = vmatprep.subr.mxu0 0.0
    %1986 = vmatpush1.msra.mxu0 0.0
    %1987 = vmatprep.subr.mxu0 0.0
    %1988 = vmatpush1.msra.mxu0 0.0
    %1989 = vmatprep.subr.mxu0 0.0
    %1990 = vmatpush1.msra.mxu0 0.0
    %1991 = vmatprep.subr.mxu0 0.0
    %1992 = vmatpush1.msra.mxu0 0.0
    %1993 = vmatprep.subr.mxu0 0.0
    %1994 = vmatpush1.msra.mxu0 0.0
    %1995 = vmatprep.mubr.f32.mxu0 0.0
    %1996 = vmatmul.mubr.f32.gmra.mrb[0].mxu0 %v1929
    %v1997 = vpop.f32.mrb[0].mxu0
    %v1998 = vadd.f32 0.0, %v1997
    %v1999 = vpop.f32.mrb[0].mxu0
    %2000 = vdwg.mxu0
    %s2001 = scalar_lea.vmem %s7, 32
    %v2002 = vld [vmem:[%s2001] sm:$0xff]
    %v2003 = vld [vmem:[%s2001 + $0x8] sm:$0xff]
    %v2005 = vsel %vm326, %v1837, 0
    %v2008 = vsel %vm326, %v1998, 0
    %2010 = vmatprep.subr.mxu0 0.0
    %2011 = vmatpush1.msra.mxu0 %v2002
    %2012 = vmatprep.subr.mxu0 0.0
    %2013 = vmatpush1.msra.mxu0 %v2003
    %2014 = vmatprep.subr.mxu0 0.0
    %2015 = vmatpush1.msra.mxu0 0.0
    %2016 = vmatprep.subr.mxu0 0.0
    %2017 = vmatpush1.msra.mxu0 0.0
    %2018 = vmatprep.subr.mxu0 0.0
    %2019 = vmatpush1.msra.mxu0 0.0
    %2020 = vmatprep.subr.mxu0 0.0
    %2021 = vmatpush1.msra.mxu0 0.0
    %2022 = vmatprep.subr.mxu0 0.0
    %2023 = vmatpush1.msra.mxu0 0.0
    %2024 = vmatprep.subr.mxu0 0.0
    %2025 = vmatpush1.msra.mxu0 0.0
    %2026 = vmatprep.subr.mxu0 0.0
    %2027 = vmatpush1.msra.mxu0 0.0
    %2028 = vmatprep.subr.mxu0 0.0
    %2029 = vmatpush1.msra.mxu0 0.0
    %2030 = vmatprep.subr.mxu0 0.0
    %2031 = vmatpush1.msra.mxu0 0.0
    %2032 = vmatprep.subr.mxu0 0.0
    %2033 = vmatpush1.msra.mxu0 0.0
    %2034 = vmatprep.subr.mxu0 0.0
    %2035 = vmatpush1.msra.mxu0 0.0
    %2036 = vmatprep.subr.mxu0 0.0
    %2037 = vmatpush1.msra.mxu0 0.0
    %2038 = vmatprep.subr.mxu0 0.0
    %2039 = vmatpush1.msra.mxu0 0.0
    %2040 = vmatprep.subr.mxu0 0.0
    %2041 = vmatpush1.msra.mxu0 0.0
    %2042 = vmatprep.subr.mxu0 0.0
    %2043 = vmatpush1.msra.mxu0 0.0
    %2044 = vmatprep.subr.mxu0 0.0
    %2045 = vmatpush1.msra.mxu0 0.0
    %2046 = vmatprep.subr.mxu0 0.0
    %2047 = vmatpush1.msra.mxu0 0.0
    %2048 = vmatprep.subr.mxu0 0.0
    %2049 = vmatpush1.msra.mxu0 0.0
    %2050 = vmatprep.subr.mxu0 0.0
    %2051 = vmatpush1.msra.mxu0 0.0
    %2052 = vmatprep.subr.mxu0 0.0
    %2053 = vmatpush1.msra.mxu0 0.0
    %2054 = vmatprep.subr.mxu0 0.0
    %2055 = vmatpush1.msra.mxu0 0.0
    %2056 = vmatprep.subr.mxu0 0.0
    %2057 = vmatpush1.msra.mxu0 0.0
    %2058 = vmatprep.subr.mxu0 0.0
    %2059 = vmatpush1.msra.mxu0 0.0
    %2060 = vmatprep.subr.mxu0 0.0
    %2061 = vmatpush1.msra.mxu0 0.0
    %2062 = vmatprep.subr.mxu0 0.0
    %2063 = vmatpush1.msra.mxu0 0.0
    %2064 = vmatprep.subr.mxu0 0.0
    %2065 = vmatpush1.msra.mxu0 0.0
    %2066 = vmatprep.subr.mxu0 0.0
    %2067 = vmatpush1.msra.mxu0 0.0
    %2068 = vmatprep.subr.mxu0 0.0
    %2069 = vmatpush1.msra.mxu0 0.0
    %2070 = vmatprep.subr.mxu0 0.0
    %2071 = vmatpush1.msra.mxu0 0.0
    %2072 = vmatprep.subr.mxu0 0.0
    %2073 = vmatpush1.msra.mxu0 0.0
    %2074 = vmatprep.mubr.f32.mxu0 0.0
    %2075 = vmatmul.mubr.f32.gmra.mrb[0].mxu0 %v2005
    %v2076 = vpop.f32.mrb[0].mxu0
    %v2077 = vadd.f32 0.0, %v2076
    %v2078 = vpop.f32.mrb[0].mxu0
    %2079 = vmatprep.mubr.f32.mxu0 0.0
    %2080 = vmatmul.mubr.f32.gmra.mrb[0].mxu0 %v2008
    %v2081 = vpop.f32.mrb[0].mxu0
    %v2082 = vadd.f32 0.0, %v2081
    %v2083 = vpop.f32.mrb[0].mxu0
    %2084 = vdwg.mxu0
    %v2085 = vadd.f32 %v1401, %v2077
    %v2086 = vadd.f32 %v1406, %v2082
    %v2087 = vld [vmem:[%s8] sm:$0x1]
    %v2089 = vlaneseq
    %v2090 = vshrl.u32 %v2089, 7
    %v2091 = vsub.s32 0, %v2090
    %v2092 = vrot.slane %v2087, %v2091
    %v2094 = vadd.f32 %v2085, %v2092
    %v2095 = vadd.f32 %v2086, %v2092
    %v2096 = vadd.f32 %v2094, %v53
    %v2097 = vadd.f32 %v2095, %v54
    %v2098 = vsel %vm68, %v2096, 0.0
    %2099 = vadd.xlane.f32.xlu0 %v2098
    %v2100 = vpop.xlane.xlu0 %2099
    %v2101 = vsel %vm68, %v2097, 0.0
    %2102 = vadd.xlane.f32.xlu0 %v2101
    %v2103 = vpop.xlane.xlu0 %2102
    %v2104 = vrcp.pop 48.0
    %v2105 = vmul.f32 %v2100, %v2104
    %v2106 = vmul.f32 %v2103, %v2104
    %v2107 = vsub.f32 %v2096, %v2105
    %v2108 = vsub.f32 %v2097, %v2106
    %v2109 = vmul.f32 %v2107, %v2107
    %v2110 = vmul.f32 %v2108, %v2108
    %v2111 = vsel %vm68, %v2109, 0.0
    %2112 = vadd.xlane.f32.xlu0 %v2111
    %v2113 = vpop.xlane.xlu0 %2112
    %v2114 = vsel %vm68, %v2110, 0.0
    %2115 = vadd.xlane.f32.xlu0 %v2114
    %v2116 = vpop.xlane.xlu0 %2115
    %v2117 = vmul.f32 %v2113, %v2104
    %v2118 = vmul.f32 %v2116, %v2104
    %v2119 = vadd.f32 %v2117, 1e-05
    %v2120 = vadd.f32 %v2118, 1e-05
    %v2121 = vrsqrt.pop %v2119
    %v2122 = vrsqrt.pop %v2120
    %v2123 = vmul.f32 %v2107, %v2121
    %v2124 = vmul.f32 %v2108, %v2122
    %v2125 = vld [vmem:[%s9] sm:$0x1]
    %v2127 = vlaneseq
    %v2128 = vshrl.u32 %v2127, 7
    %v2129 = vsub.s32 0, %v2128
    %v2130 = vrot.slane %v2125, %v2129
    %v2132 = vmul.f32 %v2123, %v2130
    %v2133 = vmul.f32 %v2124, %v2130
    %v2134 = vld [vmem:[%s10] sm:$0x1]
    %v2136 = vlaneseq
    %v2137 = vshrl.u32 %v2136, 7
    %v2138 = vsub.s32 0, %v2137
    %v2139 = vrot.slane %v2134, %v2138
    %v2141 = vadd.f32 %v2132, %v2139
    %v2142 = vadd.f32 %v2133, %v2139
    %v2143 = vld [vmem:[%s11] sm:$0xff]
    %v2144 = vld [vmem:[%s11 + $0x8] sm:$0xff]
    %v2145 = vld [vmem:[%s11 + $0x10] sm:$0xff]
    %v2146 = vld [vmem:[%s11 + $0x18] sm:$0xff]
    %v2147 = vld [vmem:[%s11 + $0x20] sm:$0xff]
    %v2148 = vld [vmem:[%s11 + $0x28] sm:$0xff]
    %v2149 = vld [vmem:[%s11 + $0x30] sm:$0xff]
    %v2150 = vld [vmem:[%s11 + $0x38] sm:$0xff]
    %v2151 = vld [vmem:[%s11 + $0x40] sm:$0xff]
    %v2152 = vld [vmem:[%s11 + $0x48] sm:$0xff]
    %v2153 = vld [vmem:[%s11 + $0x50] sm:$0xff]
    %v2154 = vld [vmem:[%s11 + $0x58] sm:$0xff]
    %v2155 = vld [vmem:[%s11 + $0x60] sm:$0xff]
    %v2156 = vld [vmem:[%s11 + $0x68] sm:$0xff]
    %v2157 = vld [vmem:[%s11 + $0x70] sm:$0xff]
    %v2158 = vld [vmem:[%s11 + $0x78] sm:$0xff]
    %v2159 = vld [vmem:[%s11 + $0x80] sm:$0xff]
    %v2160 = vld [vmem:[%s11 + $0x88] sm:$0xff]
    %v2161 = vld [vmem:[%s12] sm:$0x7]
    %v2163 = vlaneseq
    %v2164 = vshrl.u32 %v2163, 7
    %v2165 = vsub.s32 0, %v2164
    %v2166 = vrot.slane %v2161, %v2165
    %v2167 = vlaneseq
    %v2168 = vshrl.u32 %v2167, 7
    %v2169 = vsub.s32 1, %v2168
    %v2170 = vrot.slane %v2161, %v2169
    %v2171 = vlaneseq
    %v2172 = vshrl.u32 %v2171, 7
    %v2173 = vsub.s32 2, %v2172
    %v2174 = vrot.slane %v2161, %v2173
    %v2179 = vsel %vm68, %v2141, 0
    %v2182 = vsel %vm68, %v2142, 0
    %2184 = vmatprep.subr.mxu0 %v2144
    %2185 = vmatpush1.msra.mxu0 %v2143
    %2186 = vmatprep.subr.mxu0 %v2147
    %2187 = vmatpush1.msra.mxu0 %v2146
    %2188 = vmatprep.subr.mxu0 %v2150
    %2189 = vmatpush1.msra.mxu0 %v2149
    %2190 = vmatprep.subr.mxu0 %v2153
    %2191 = vmatpush1.msra.mxu0 %v2152
    %2192 = vmatprep.subr.mxu0 %v2156
    %2193 = vmatpush1.msra.mxu0 %v2155
    %2194 = vmatprep.subr.mxu0 %v2159
    %2195 = vmatpush1.msra.mxu0 %v2158
    %2196 = vmatprep.subr.mxu0 0.0
    %2197 = vmatpush1.msra.mxu0 0.0
    %2198 = vmatprep.subr.mxu0 0.0
    %2199 = vmatpush1.msra.mxu0 0.0
    %2200 = vmatprep.subr.mxu0 0.0
    %2201 = vmatpush1.msra.mxu0 0.0
    %2202 = vmatprep.subr.mxu0 0.0
    %2203 = vmatpush1.msra.mxu0 0.0
    %2204 = vmatprep.subr.mxu0 0.0
    %2205 = vmatpush1.msra.mxu0 0.0
    %2206 = vmatprep.subr.mxu0 0.0
    %2207 = vmatpush1.msra.mxu0 0.0
    %2208 = vmatprep.subr.mxu0 0.0
    %2209 = vmatpush1.msra.mxu0 0.0
    %2210 = vmatprep.subr.mxu0 0.0
    %2211 = vmatpush1.msra.mxu0 0.0
    %2212 = vmatprep.subr.mxu0 0.0
    %2213 = vmatpush1.msra.mxu0 0.0
    %2214 = vmatprep.subr.mxu0 0.0
    %2215 = vmatpush1.msra.mxu0 0.0
    %2216 = vmatprep.subr.mxu0 0.0
    %2217 = vmatpush1.msra.mxu0 0.0
    %2218 = vmatprep.subr.mxu0 0.0
    %2219 = vmatpush1.msra.mxu0 0.0
    %2220 = vmatprep.subr.mxu0 0.0
    %2221 = vmatpush1.msra.mxu0 0.0
    %2222 = vmatprep.subr.mxu0 0.0
    %2223 = vmatpush1.msra.mxu0 0.0
    %2224 = vmatprep.subr.mxu0 0.0
    %2225 = vmatpush1.msra.mxu0 0.0
    %2226 = vmatprep.subr.mxu0 0.0
    %2227 = vmatpush1.msra.mxu0 0.0
    %2228 = vmatprep.subr.mxu0 0.0
    %2229 = vmatpush1.msra.mxu0 0.0
    %2230 = vmatprep.subr.mxu0 0.0
    %2231 = vmatpush1.msra.mxu0 0.0
    %2232 = vmatprep.subr.mxu0 0.0
    %2233 = vmatpush1.msra.mxu0 0.0
    %2234 = vmatprep.subr.mxu0 0.0
    %2235 = vmatpush1.msra.mxu0 0.0
    %2236 = vmatprep.subr.mxu0 0.0
    %2237 = vmatpush1.msra.mxu0 0.0
    %2238 = vmatprep.subr.mxu0 0.0
    %2239 = vmatpush1.msra.mxu0 0.0
    %2240 = vmatprep.subr.mxu0 0.0
    %2241 = vmatpush1.msra.mxu0 0.0
    %2242 = vmatprep.subr.mxu0 0.0
    %2243 = vmatpush1.msra.mxu0 0.0
    %2244 = vmatprep.subr.mxu0 0.0
    %2245 = vmatpush1.msra.mxu0 0.0
    %2246 = vmatprep.subr.mxu0 0.0
    %2247 = vmatpush1.msra.mxu0 0.0
    %2248 = vmatprep.mubr.f32.mxu0 0.0
    %2249 = vmatmul.mubr.f32.gmra.mrb[0].mxu0 %v2179
    %v2250 = vpop.f32.mrb[0].mxu0
    %v2251 = vadd.f32 %v2166, %v2250
    %v2252 = vpop.f32.mrb[0].mxu0
    %v2253 = vadd.f32 %v2170, %v2252
    %2254 = vmatprep.mubr.f32.mxu0 0.0
    %2255 = vmatmul.mubr.f32.gmra.mrb[0].mxu0 %v2182
    %v2256 = vpop.f32.mrb[0].mxu0
    %v2257 = vadd.f32 %v2166, %v2256
    %v2258 = vpop.f32.mrb[0].mxu0
    %v2259 = vadd.f32 %v2170, %v2258
    %2260 = vdwg.mxu0
    %2261 = vmatprep.subr.mxu0 0.0
    %2262 = vmatpush1.msra.mxu0 %v2145
    %2263 = vmatprep.subr.mxu0 0.0
    %2264 = vmatpush1.msra.mxu0 %v2148
    %2265 = vmatprep.subr.mxu0 0.0
    %2266 = vmatpush1.msra.mxu0 %v2151
    %2267 = vmatprep.subr.mxu0 0.0
    %2268 = vmatpush1.msra.mxu0 %v2154
    %2269 = vmatprep.subr.mxu0 0.0
    %2270 = vmatpush1.msra.mxu0 %v2157
    %2271 = vmatprep.subr.mxu0 0.0
    %2272 = vmatpush1.msra.mxu0 %v2160
    %2273 = vmatprep.subr.mxu0 0.0
    %2274 = vmatpush1.msra.mxu0 0.0
    %2275 = vmatprep.subr.mxu0 0.0
    %2276 = vmatpush1.msra.mxu0 0.0
    %2277 = vmatprep.subr.mxu0 0.0
    %2278 = vmatpush1.msra.mxu0 0.0
    %2279 = vmatprep.subr.mxu0 0.0
    %2280 = vmatpush1.msra.mxu0 0.0
    %2281 = vmatprep.subr.mxu0 0.0
    %2282 = vmatpush1.msra.mxu0 0.0
    %2283 = vmatprep.subr.mxu0 0.0
    %2284 = vmatpush1.msra.mxu0 0.0
    %2285 = vmatprep.subr.mxu0 0.0
    %2286 = vmatpush1.msra.mxu0 0.0
    %2287 = vmatprep.subr.mxu0 0.0
    %2288 = vmatpush1.msra.mxu0 0.0
    %2289 = vmatprep.subr.mxu0 0.0
    %2290 = vmatpush1.msra.mxu0 0.0
    %2291 = vmatprep.subr.mxu0 0.0
    %2292 = vmatpush1.msra.mxu0 0.0
    %2293 = vmatprep.subr.mxu0 0.0
    %2294 = vmatpush1.msra.mxu0 0.0
    %2295 = vmatprep.subr.mxu0 0.0
    %2296 = vmatpush1.msra.mxu0 0.0
    %2297 = vmatprep.subr.mxu0 0.0
    %2298 = vmatpush1.msra.mxu0 0.0
    %2299 = vmatprep.subr.mxu0 0.0
    %2300 = vmatpush1.msra.mxu0 0.0
    %2301 = vmatprep.subr.mxu0 0.0
    %2302 = vmatpush1.msra.mxu0 0.0
    %2303 = vmatprep.subr.mxu0 0.0
    %2304 = vmatpush1.msra.mxu0 0.0
    %2305 = vmatprep.subr.mxu0 0.0
    %2306 = vmatpush1.msra.mxu0 0.0
    %2307 = vmatprep.subr.mxu0 0.0
    %2308 = vmatpush1.msra.mxu0 0.0
    %2309 = vmatprep.subr.mxu0 0.0
    %2310 = vmatpush1.msra.mxu0 0.0
    %2311 = vmatprep.subr.mxu0 0.0
    %2312 = vmatpush1.msra.mxu0 0.0
    %2313 = vmatprep.subr.mxu0 0.0
    %2314 = vmatpush1.msra.mxu0 0.0
    %2315 = vmatprep.subr.mxu0 0.0
    %2316 = vmatpush1.msra.mxu0 0.0
    %2317 = vmatprep.subr.mxu0 0.0
    %2318 = vmatpush1.msra.mxu0 0.0
    %2319 = vmatprep.subr.mxu0 0.0
    %2320 = vmatpush1.msra.mxu0 0.0
    %2321 = vmatprep.subr.mxu0 0.0
    %2322 = vmatpush1.msra.mxu0 0.0
    %2323 = vmatprep.subr.mxu0 0.0
    %2324 = vmatpush1.msra.mxu0 0.0
    %2325 = vmatprep.mubr.f32.mxu0 0.0
    %2326 = vmatmul.mubr.f32.gmra.mrb[0].mxu0 %v2179
    %v2327 = vpop.f32.mrb[0].mxu0
    %v2328 = vadd.f32 %v2174, %v2327
    %v2329 = vpop.f32.mrb[0].mxu0
    %2330 = vmatprep.mubr.f32.mxu0 0.0
    %2331 = vmatmul.mubr.f32.gmra.mrb[0].mxu0 %v2182
    %v2332 = vpop.f32.mrb[0].mxu0
    %v2333 = vadd.f32 %v2174, %v2332
    %v2334 = vpop.f32.mrb[0].mxu0
    %2335 = vdwg.mxu0
    %v2336 = vmul.f32 %v2251, 0.5
    %v2337 = vmul.f32 %v2253, 0.5
    %v2338 = vmul.f32 %v2328, 0.5
    %v2339 = vmul.f32 %v2257, 0.5
    %v2340 = vmul.f32 %v2259, 0.5
    %v2341 = vmul.f32 %v2333, 0.5
    %v2342 = vmul.f32 %v2251, 0.70710677
    %v2343 = vmul.f32 %v2253, 0.70710677
    %v2344 = vmul.f32 %v2328, 0.70710677
    %v2345 = vmul.f32 %v2257, 0.70710677
    %v2346 = vmul.f32 %v2259, 0.70710677
    %v2347 = vmul.f32 %v2333, 0.70710677
    %v2348 = verf.f32.pop %v2342
    %v2349 = verf.f32.pop %v2343
    %v2350 = verf.f32.pop %v2344
    %v2351 = verf.f32.pop %v2345
    %v2352 = verf.f32.pop %v2346
    %v2353 = verf.f32.pop %v2347
    %v2354 = vadd.f32 %v2348, 1.0
    %v2355 = vadd.f32 %v2349, 1.0
    %v2356 = vadd.f32 %v2350, 1.0
    %v2357 = vadd.f32 %v2351, 1.0
    %v2358 = vadd.f32 %v2352, 1.0
    %v2359 = vadd.f32 %v2353, 1.0
    %v2360 = vmul.f32 %v2336, %v2354
    %v2361 = vmul.f32 %v2337, %v2355
    %v2362 = vmul.f32 %v2338, %v2356
    %v2363 = vmul.f32 %v2339, %v2357
    %v2364 = vmul.f32 %v2340, %v2358
    %v2365 = vmul.f32 %v2341, %v2359
    %v2366 = vld [vmem:[%s13] sm:$0xff]
    %v2367 = vld [vmem:[%s13 + $0x8] sm:$0xff]
    %v2368 = vld [vmem:[%s13 + $0x10] sm:$0xff]
    %v2369 = vld [vmem:[%s13 + $0x18] sm:$0xff]
    %v2370 = vld [vmem:[%s13 + $0x20] sm:$0xff]
    %v2371 = vld [vmem:[%s13 + $0x28] sm:$0xff]
    %v2372 = vld [vmem:[%s13 + $0x30] sm:$0xff]
    %v2373 = vld [vmem:[%s13 + $0x38] sm:$0xff]
    %v2374 = vld [vmem:[%s13 + $0x40] sm:$0xff]
    %v2375 = vld [vmem:[%s13 + $0x48] sm:$0xff]
    %v2376 = vld [vmem:[%s13 + $0x50] sm:$0xff]
    %v2377 = vld [vmem:[%s13 + $0x58] sm:$0xff]
    %v2378 = vld [vmem:[%s13 + $0x60] sm:$0xff]
    %v2379 = vld [vmem:[%s13 + $0x68] sm:$0xff]
    %v2380 = vld [vmem:[%s13 + $0x70] sm:$0xff]
    %v2381 = vld [vmem:[%s13 + $0x78] sm:$0xff]
    %v2382 = vld [vmem:[%s13 + $0x80] sm:$0xff]
    %v2383 = vld [vmem:[%s13 + $0x88] sm:$0xff]
    %v2384 = vld [vmem:[%s13 + $0x90] sm:$0xff]
    %v2385 = vld [vmem:[%s13 + $0x98] sm:$0xff]
    %v2386 = vld [vmem:[%s13 + $0xa0] sm:$0xff]
    %v2387 = vld [vmem:[%s13 + $0xa8] sm:$0xff]
    %v2388 = vld [vmem:[%s13 + $0xb0] sm:$0xff]
    %v2389 = vld [vmem:[%s13 + $0xb8] sm:$0xff]
    %v2390 = vld [vmem:[%s13 + $0xc0] sm:$0xff]
    %v2391 = vld [vmem:[%s13 + $0xc8] sm:$0xff]
    %v2392 = vld [vmem:[%s13 + $0xd0] sm:$0xff]
    %v2393 = vld [vmem:[%s13 + $0xd8] sm:$0xff]
    %v2394 = vld [vmem:[%s13 + $0xe0] sm:$0xff]
    %v2395 = vld [vmem:[%s13 + $0xe8] sm:$0xff]
    %v2396 = vld [vmem:[%s13 + $0xf0] sm:$0xff]
    %v2397 = vld [vmem:[%s13 + $0xf8] sm:$0xff]
    %v2398 = vld [vmem:[%s13 + $0x100] sm:$0xff]
    %v2399 = vld [vmem:[%s13 + $0x108] sm:$0xff]
    %v2400 = vld [vmem:[%s13 + $0x110] sm:$0xff]
    %v2401 = vld [vmem:[%s13 + $0x118] sm:$0xff]
    %v2402 = vld [vmem:[%s13 + $0x120] sm:$0xff]
    %v2403 = vld [vmem:[%s13 + $0x128] sm:$0xff]
    %v2404 = vld [vmem:[%s13 + $0x130] sm:$0xff]
    %v2405 = vld [vmem:[%s13 + $0x138] sm:$0xff]
    %v2406 = vld [vmem:[%s13 + $0x140] sm:$0xff]
    %v2407 = vld [vmem:[%s13 + $0x148] sm:$0xff]
    %v2408 = vld [vmem:[%s13 + $0x150] sm:$0xff]
    %v2409 = vld [vmem:[%s13 + $0x158] sm:$0xff]
    %v2410 = vld [vmem:[%s13 + $0x160] sm:$0xff]
    %v2411 = vld [vmem:[%s13 + $0x168] sm:$0xff]
    %v2412 = vld [vmem:[%s13 + $0x170] sm:$0xff]
    %v2413 = vld [vmem:[%s13 + $0x178] sm:$0xff]
    %v2414 = vld [vmem:[%s14] sm:$0x1]
    %v2416 = vlaneseq
    %v2417 = vshrl.u32 %v2416, 7
    %v2418 = vsub.s32 0, %v2417
    %v2419 = vrot.slane %v2414, %v2418
    %2421 = vmatprep.subr.mxu0 0.0
    %2422 = vmatpush1.msra.mxu0 %v2366
    %2423 = vmatprep.subr.mxu0 0.0
    %2424 = vmatpush1.msra.mxu0 %v2367
    %2425 = vmatprep.subr.mxu0 0.0
    %2426 = vmatpush1.msra.mxu0 %v2368
    %2427 = vmatprep.subr.mxu0 0.0
    %2428 = vmatpush1.msra.mxu0 %v2369
    %2429 = vmatprep.subr.mxu0 0.0
    %2430 = vmatpush1.msra.mxu0 %v2370
    %2431 = vmatprep.subr.mxu0 0.0
    %2432 = vmatpush1.msra.mxu0 %v2371
    %2433 = vmatprep.subr.mxu0 0.0
    %2434 = vmatpush1.msra.mxu0 %v2372
    %2435 = vmatprep.subr.mxu0 0.0
    %2436 = vmatpush1.msra.mxu0 %v2373
    %2437 = vmatprep.subr.mxu0 0.0
    %2438 = vmatpush1.msra.mxu0 %v2374
    %2439 = vmatprep.subr.mxu0 0.0
    %2440 = vmatpush1.msra.mxu0 %v2375
    %2441 = vmatprep.subr.mxu0 0.0
    %2442 = vmatpush1.msra.mxu0 %v2376
    %2443 = vmatprep.subr.mxu0 0.0
    %2444 = vmatpush1.msra.mxu0 %v2377
    %2445 = vmatprep.subr.mxu0 0.0
    %2446 = vmatpush1.msra.mxu0 %v2378
    %2447 = vmatprep.subr.mxu0 0.0
    %2448 = vmatpush1.msra.mxu0 %v2379
    %2449 = vmatprep.subr.mxu0 0.0
    %2450 = vmatpush1.msra.mxu0 %v2380
    %2451 = vmatprep.subr.mxu0 0.0
    %2452 = vmatpush1.msra.mxu0 %v2381
    %2453 = vmatprep.subr.mxu0 0.0
    %2454 = vmatpush1.msra.mxu0 %v2382
    %2455 = vmatprep.subr.mxu0 0.0
    %2456 = vmatpush1.msra.mxu0 %v2383
    %2457 = vmatprep.subr.mxu0 0.0
    %2458 = vmatpush1.msra.mxu0 %v2384
    %2459 = vmatprep.subr.mxu0 0.0
    %2460 = vmatpush1.msra.mxu0 %v2385
    %2461 = vmatprep.subr.mxu0 0.0
    %2462 = vmatpush1.msra.mxu0 %v2386
    %2463 = vmatprep.subr.mxu0 0.0
    %2464 = vmatpush1.msra.mxu0 %v2387
    %2465 = vmatprep.subr.mxu0 0.0
    %2466 = vmatpush1.msra.mxu0 %v2388
    %2467 = vmatprep.subr.mxu0 0.0
    %2468 = vmatpush1.msra.mxu0 %v2389
    %2469 = vmatprep.subr.mxu0 0.0
    %2470 = vmatpush1.msra.mxu0 %v2390
    %2471 = vmatprep.subr.mxu0 0.0
    %2472 = vmatpush1.msra.mxu0 %v2391
    %2473 = vmatprep.subr.mxu0 0.0
    %2474 = vmatpush1.msra.mxu0 %v2392
    %2475 = vmatprep.subr.mxu0 0.0
    %2476 = vmatpush1.msra.mxu0 %v2393
    %2477 = vmatprep.subr.mxu0 0.0
    %2478 = vmatpush1.msra.mxu0 %v2394
    %2479 = vmatprep.subr.mxu0 0.0
    %2480 = vmatpush1.msra.mxu0 %v2395
    %2481 = vmatprep.subr.mxu0 0.0
    %2482 = vmatpush1.msra.mxu0 %v2396
    %2483 = vmatprep.subr.mxu0 0.0
    %2484 = vmatpush1.msra.mxu0 %v2397
    %2485 = vmatprep.mubr.f32.mxu0 %v2361
    %2486 = vmatmul.mubr.f32.gmra.mrb[0].mxu0 %v2360
    %v2487 = vpop.f32.mrb[0].mxu0
    %v2488 = vadd.f32 %v2419, %v2487
    %v2489 = vpop.f32.mrb[0].mxu0
    %2490 = vmatprep.mubr.f32.mxu0 %v2364
    %2491 = vmatmul.mubr.f32.gmra.mrb[0].mxu0 %v2363
    %v2492 = vpop.f32.mrb[0].mxu0
    %v2493 = vadd.f32 %v2419, %v2492
    %v2494 = vpop.f32.mrb[0].mxu0
    %2495 = vdwg.mxu0
    %2496 = vmatprep.subr.mxu0 0.0
    %2497 = vmatpush1.msra.mxu0 %v2398
    %2498 = vmatprep.subr.mxu0 0.0
    %2499 = vmatpush1.msra.mxu0 %v2399
    %2500 = vmatprep.subr.mxu0 0.0
    %2501 = vmatpush1.msra.mxu0 %v2400
    %2502 = vmatprep.subr.mxu0 0.0
    %2503 = vmatpush1.msra.mxu0 %v2401
    %2504 = vmatprep.subr.mxu0 0.0
    %2505 = vmatpush1.msra.mxu0 %v2402
    %2506 = vmatprep.subr.mxu0 0.0
    %2507 = vmatpush1.msra.mxu0 %v2403
    %2508 = vmatprep.subr.mxu0 0.0
    %2509 = vmatpush1.msra.mxu0 %v2404
    %2510 = vmatprep.subr.mxu0 0.0
    %2511 = vmatpush1.msra.mxu0 %v2405
    %2512 = vmatprep.subr.mxu0 0.0
    %2513 = vmatpush1.msra.mxu0 %v2406
    %2514 = vmatprep.subr.mxu0 0.0
    %2515 = vmatpush1.msra.mxu0 %v2407
    %2516 = vmatprep.subr.mxu0 0.0
    %2517 = vmatpush1.msra.mxu0 %v2408
    %2518 = vmatprep.subr.mxu0 0.0
    %2519 = vmatpush1.msra.mxu0 %v2409
    %2520 = vmatprep.subr.mxu0 0.0
    %2521 = vmatpush1.msra.mxu0 %v2410
    %2522 = vmatprep.subr.mxu0 0.0
    %2523 = vmatpush1.msra.mxu0 %v2411
    %2524 = vmatprep.subr.mxu0 0.0
    %2525 = vmatpush1.msra.mxu0 %v2412
    %2526 = vmatprep.subr.mxu0 0.0
    %2527 = vmatpush1.msra.mxu0 %v2413
    %2528 = vmatprep.subr.mxu0 0.0
    %2529 = vmatpush1.msra.mxu0 0.0
    %2530 = vmatprep.subr.mxu0 0.0
    %2531 = vmatpush1.msra.mxu0 0.0
    %2532 = vmatprep.subr.mxu0 0.0
    %2533 = vmatpush1.msra.mxu0 0.0
    %2534 = vmatprep.subr.mxu0 0.0
    %2535 = vmatpush1.msra.mxu0 0.0
    %2536 = vmatprep.subr.mxu0 0.0
    %2537 = vmatpush1.msra.mxu0 0.0
    %2538 = vmatprep.subr.mxu0 0.0
    %2539 = vmatpush1.msra.mxu0 0.0
    %2540 = vmatprep.subr.mxu0 0.0
    %2541 = vmatpush1.msra.mxu0 0.0
    %2542 = vmatprep.subr.mxu0 0.0
    %2543 = vmatpush1.msra.mxu0 0.0
    %2544 = vmatprep.subr.mxu0 0.0
    %2545 = vmatpush1.msra.mxu0 0.0
    %2546 = vmatprep.subr.mxu0 0.0
    %2547 = vmatpush1.msra.mxu0 0.0
    %2548 = vmatprep.subr.mxu0 0.0
    %2549 = vmatpush1.msra.mxu0 0.0
    %2550 = vmatprep.subr.mxu0 0.0
    %2551 = vmatpush1.msra.mxu0 0.0
    %2552 = vmatprep.subr.mxu0 0.0
    %2553 = vmatpush1.msra.mxu0 0.0
    %2554 = vmatprep.subr.mxu0 0.0
    %2555 = vmatpush1.msra.mxu0 0.0
    %2556 = vmatprep.subr.mxu0 0.0
    %2557 = vmatpush1.msra.mxu0 0.0
    %2558 = vmatprep.subr.mxu0 0.0
    %2559 = vmatpush1.msra.mxu0 0.0
    %2560 = vmatprep.mubr.f32.mxu0 0.0
    %2561 = vmatmul.mubr.f32.gmra.mrb[0].mxu0 %v2362
    %v2562 = vpop.f32.mrb[0].mxu0
    %v2563 = vadd.f32 %v2488, %v2562
    %v2564 = vpop.f32.mrb[0].mxu0
    %2565 = vmatprep.mubr.f32.mxu0 0.0
    %2566 = vmatmul.mubr.f32.gmra.mrb[0].mxu0 %v2365
    %v2567 = vpop.f32.mrb[0].mxu0
    %v2568 = vadd.f32 %v2493, %v2567
    %v2569 = vpop.f32.mrb[0].mxu0
    %2570 = vdwg.mxu0
    %2571 = vst [vmem:[%s15] sm:$0xff] %v2563
    %2572 = vst [vmem:[%s15 + $0x8] sm:$0xff] %v2568
    %2573 = vst.msk [vmem:[#allocation2] sm:$0xff] %vm404, %v415
    %2574 = vst.msk [vmem:[#allocation2 + $0x8] sm:$0xff] %vm404, %v1009
    %2575 = vst.msk [vmem:[#allocation2 + $0x10] sm:$0xff] %vm404, %v1766
    %2576 = vst.msk [vmem:[#allocation2 + $0x18] sm:$0xff] %vm404, %v576
    %2577 = vst.msk [vmem:[#allocation2 + $0x20] sm:$0xff] %vm404, %v1170
    %2578 = vst.msk [vmem:[#allocation2 + $0x28] sm:$0xff] %vm404, %v1927
    // Predicated region
    $region62: #{apply.1} parent=1 // pred_check
      _
    $region63: #{apply.1} parent=1 // pred_check_branch
      %2580 = sbr.rel (0) target = $region65
    $region64: #{apply.1} parent=1 // pred_region
      _
    $region65: #{apply.1} parent=1 // pred_fallthru
      _
    // Predicated region
    $region66: #{apply.1} parent=1 // pred_check
      _
    $region67: #{apply.1} parent=1 // pred_check_branch
      %2582 = sbr.rel (0) target = $region69
    $region68: #{apply.1} parent=1 // pred_region
      %s2584 = ssub.s32 768, 768
      %2585 = vsyncadd [#allocation3], %s2584
      %s2586 = sshll.u32 [#allocation2], 4
      %s2587 = int_to_ptr.vmem [resolvable:$true] %s2586
      %2592 = dma.vmem_to_hbm [thread:$0]  %s2587, 768, %s16, [#allocation3], 128, 128, 8
    $region69: #{apply.1} parent=1 // pred_fallthru
      _
    // Predicated region
    $region70: #{apply.1} parent=1 // pred_check
      _
    $region71: #{apply.1} parent=1 // pred_check_branch
      %2594 = sbr.rel (0) target = $region73
    $region72: #{apply.1} parent=1 // pred_region
      _
    $region73: #{apply.1} parent=1 // pred_fallthru
      _
    // Predicated region
    $region74: #{apply.1} parent=1 // pred_check
      _
    $region75: #{apply.1} parent=1 // pred_check_branch
      %2596 = sbr.rel (0) target = $region77
    $region76: #{apply.1} parent=1 // pred_region
      %2597 = dma.done [#allocation3], 768
    $region77: #{apply.1} parent=1 // pred_fallthru
      _
    %2598 = vsyncpa [#allocation3], 1

</llo_original>
